<compile_context>
chip_gen: v7x
topology: tpu7x:2x2x1
jax: 0.10.0
libtpu: 0.0.40
codegen_flags: <defaults>
</compile_context>

<pallas_src>
import functools

import jax
import jax.numpy as jnp
from jax.experimental import pallas as pl
from jax.experimental.pallas import tpu as pltpu


def _round_up(x, m):
    return (x + m - 1) // m * m


def _num_tensorcores():
    """TensorCores per chip (v7x: 2, v5e/v6e: 1).  Conservative fallback: 1.

    # TODO(synk): replace the attribute probe with the official field once
    #             pltpu.TpuInfo exposes a stable core-count name.
    """
    try:
        info = pltpu.get_tpu_info()
        for attr in ("num_cores", "core_count", "num_tensorcores",
                     "tensorcore_count"):
            v = getattr(info, attr, None)
            if isinstance(v, int) and v > 0:
                return v
    except Exception:
        pass
    return 1


def _vmem_limit_bytes():
    """~75% of physical VMEM, leaving headroom for double-buffered input
    copies and compiler-internal scratch (v5e/v6e ~96 MiB, v7x ~48 MiB)."""
    try:
        cap = int(pltpu.get_tpu_info().vmem_capacity_bytes)
    except Exception:
        cap = 64 * 1024 * 1024          # conservative if the query is unavailable
    return (cap * 3) // 4


# ----------------------------------------------------------------------------
# Kernel
# ----------------------------------------------------------------------------
def gru_fc_kernel(x_ref,                            # (Tc*Bt, D)  this chunk, time-major
                  w_ih0_ref, b_ih0_ref,             # (D, 3Hg), (1, 3Hg)
                  w_hh_ref, b_hh0_ref, b_hh1_ref,   # (Hg, 6Hg)=[w_hh0|w_hh1], (1, 3Hg) x2
                  w_ih1_ref, b_ih1_ref,             # (Hg, 3Hg), (1, 3Hg)
                  fc_w_ref, fc_b_ref,               # (Hg, Cp), (1, Cp)
                  out_ref,                          # (Bt, Cp)
                  gi0_ref,                          # scratch (Tc*Bt, 3Hg)
                  h_ref,                            # scratch (2*Bt, Hg): [0:Bt]=h0, [Bt:]=h1
                  *, seq_len, chunk_steps, batch_tile, hidden_pad, mask_tail):
    T, Tc, Bt, Hg = seq_len, chunk_steps, batch_tile, hidden_pad
    ti = pl.program_id(1)

    # ---- Start of this batch tile's sequence: reset the carried hidden state.
    @pl.when(ti == 0)
    def _():
        h_ref[...] = jnp.zeros_like(h_ref)

    # ---- Phase 1 (non-recurrent): layer-0 input projection for the whole chunk.
    gi0_ref[...] = (
        jnp.dot(x_ref[...], w_ih0_ref[...], preferred_element_type=jnp.float32)
        + b_ih0_ref[...])

    # ---- Hoist bias broadcasts out of the time loop (JAX does not CSE them).
    b_hh0 = jnp.broadcast_to(b_hh0_ref[...], (Bt, 3 * Hg))
    b_hh1 = jnp.broadcast_to(b_hh1_ref[...], (Bt, 3 * Hg))
    b_ih1 = jnp.broadcast_to(b_ih1_ref[...], (Bt, 3 * Hg))

    def sigmoid(v):
        # tanh runs on the EUP (its own VLIW slot) instead of a VALU divide.
        return 0.5 * (jnp.tanh(0.5 * v) + 1.0)

    def gru_gates(gi, gh, h_prev):
        # PyTorch GRU cell (gates r, z, n), lane-aligned at stride Hg.
        r = sigmoid(gi[:, 0:Hg] + gh[:, 0:Hg])
        z = sigmoid(gi[:, Hg:2 * Hg] + gh[:, Hg:2 * Hg])
        n = jnp.tanh(gi[:, 2 * Hg:3 * Hg] + r * gh[:, 2 * Hg:3 * Hg])
        return (1.0 - z) * n + z * h_prev

    t_base = ti * Tc

    def step(t, carry):
        h0, h1 = carry
        # Fused carry matmul: both layers' recurrent projections (which only
        # depend on the previous step) in a single MXU launch.
        h_cat = jnp.concatenate([h0, h1], axis=0)                     # (2Bt, Hg)
        gh_all = jnp.dot(h_cat, w_hh_ref[...],
                         preferred_element_type=jnp.float32)          # (2Bt, 6Hg)
        gh0 = gh_all[0:Bt, 0:3 * Hg] + b_hh0
        gh1 = gh_all[Bt:2 * Bt, 3 * Hg:6 * Hg] + b_hh1

        row = pl.multiple_of(t * Bt, Bt)                # sublane-aligned slice
        gi0_t = gi0_ref[pl.ds(row, Bt), :]              # precomputed input gates
        h0n = gru_gates(gi0_t, gh0, h0)
        gi1 = (jnp.dot(h0n, w_ih1_ref[...], preferred_element_type=jnp.float32)
               + b_ih1)
        h1n = gru_gates(gi1, gh1, h1)

        if mask_tail:
            # Last chunk may run past T; do not advance state on padded steps.
            valid = (t_base + t) < T
            h0n = jnp.where(valid, h0n, h0)
            h1n = jnp.where(valid, h1n, h1)
        return (h0n, h1n)

    h0, h1 = h_ref[0:Bt, :], h_ref[Bt:2 * Bt, :]
    h0, h1 = jax.lax.fori_loop(0, Tc, step, (h0, h1),
                               unroll=(True if Tc <= 8 else 2))
    h_ref[0:Bt, :] = h0
    h_ref[Bt:2 * Bt, :] = h1

    # ---- Final Linear on the last timestep's layer-1 hidden state.
    @pl.when(ti == pl.num_programs(1) - 1)
    def _():
        out_ref[...] = (jnp.dot(h1, fc_w_ref[...],
                                preferred_element_type=jnp.float32)
                        + fc_b_ref[...])


# ----------------------------------------------------------------------------
# One-time parameter preprocessing (hoisted out of the forward pass)
# ----------------------------------------------------------------------------
def prepare_params(params, *, hidden_size):
    """torch layout (3H, in_dim) -> transposed, gate-blocked at lane-aligned
    stride Hg = round_up(H, 128); the two layers' recurrent weights are
    concatenated column-wise for the fused per-step carry matmul."""
    (w_ih0, w_hh0, b_ih0, b_hh0,
     w_ih1, w_hh1, b_ih1, b_hh1,
     fc_w, fc_b) = params
    f32 = jnp.float32
    H = hidden_size
    Hg = _round_up(H, 128)
    C = fc_w.shape[0]
    Cp = _round_up(C, 128)
    D = w_ih0.shape[1]

    def pad_w(w, in_pad):
        w_t = jnp.asarray(w, f32).T                      # (in_dim, 3H)
        in_dim = w_t.shape[0]
        out = jnp.zeros((in_pad, 3 * Hg), f32)
        for g in range(3):
            out = out.at[:in_dim, g * Hg:g * Hg + H].set(w_t[:, g * H:(g + 1) * H])
        return out

    def pad_b(b):
        b = jnp.asarray(b, f32)
        out = jnp.zeros((1, 3 * Hg), f32)
        for g in range(3):
            out = out.at[0, g * Hg:g * Hg + H].set(b[g * H:(g + 1) * H])
        return out

    w_ih0_p = pad_w(w_ih0, D)
    w_ih1_p = pad_w(w_ih1, Hg)
    # Fused recurrent weights: columns [0:3Hg] = layer 0, [3Hg:6Hg] = layer 1.
    w_hh_cat = jnp.concatenate([pad_w(w_hh0, Hg), pad_w(w_hh1, Hg)], axis=1)
    b_ih0_p, b_hh0_p, b_ih1_p, b_hh1_p = map(pad_b, (b_ih0, b_hh0, b_ih1, b_hh1))
    fc_w_p = jnp.zeros((Hg, Cp), f32).at[:H, :C].set(jnp.asarray(fc_w, f32).T)
    fc_b_p = jnp.zeros((1, Cp), f32).at[0, :C].set(jnp.asarray(fc_b, f32))
    return (w_ih0_p, b_ih0_p, w_hh_cat, b_hh0_p, b_hh1_p,
            w_ih1_p, b_ih1_p, fc_w_p, fc_b_p)


# ----------------------------------------------------------------------------
# Forward
# ----------------------------------------------------------------------------
def gru_model_forward(x, prepared, *, hidden_size, num_classes,
                      time_chunk=128, batch_tiles=None):
    """Pallas equivalent of GRUModel.forward(x); x: (batch, seq, input_size)."""
    (w_ih0_p, b_ih0_p, w_hh_cat, b_hh0_p, b_hh1_p,
     w_ih1_p, b_ih1_p, fc_w_p, fc_b_p) = prepared

    B, T, D = x.shape
    H = hidden_size
    Hg = _round_up(H, 128)
    C = num_classes
    Cp = _round_up(C, 128)

    # --- Batch tiling: >=8 f32 sublanes per tile; one tile per TensorCore.
    Bp = _round_up(max(B, 8), 8)
    if batch_tiles is None:
        batch_tiles = _num_tensorcores()
    n_bt = max(1, min(batch_tiles, Bp // 8))
    Bt = _round_up((Bp + n_bt - 1) // n_bt, 8)
    Bp = n_bt * Bt

    # --- Time chunking: bounds VMEM independently of T, enables DMA overlap.
    Tc = min(max(2, time_chunk), _round_up(T, 2))
    Tc = _round_up(Tc, 2)                       # even so unroll=2 divides it
    n_tc = (T + Tc - 1) // Tc
    T_pad = n_tc * Tc

    # --- x -> time-major, batch/time padded, batch-tile-major flat rows:
    #     row(bi, t, b) = ((bi*T_pad + t) * Bt + b), so each grid step's
    #     (Tc*Bt, D) block is contiguous.
    x_tm = jnp.transpose(x.astype(jnp.float32), (1, 0, 2))            # (T, B, D)
    x_tm = jnp.pad(x_tm, ((0, T_pad - T), (0, Bp - B), (0, 0)))       # (T_pad, Bp, D)
    x_flat = (x_tm.reshape(T_pad, n_bt, Bt, D)
                  .transpose(1, 0, 2, 3)
                  .reshape(n_bt * T_pad * Bt, D))

    kernel = functools.partial(
        gru_fc_kernel, seq_len=T, chunk_steps=Tc, batch_tile=Bt,
        hidden_pad=Hg, mask_tail=(T % Tc != 0))

    resident = pl.BlockSpec(memory_space=pltpu.MemorySpace.VMEM)   # whole array in VMEM
    x_spec = pl.BlockSpec((Tc * Bt, D), lambda bi, ti: (bi * n_tc + ti, 0))

    out = pl.pallas_call(
        kernel,
        out_shape=jax.ShapeDtypeStruct((Bp, Cp), jnp.float32),
        grid_spec=pltpu.PrefetchScalarGridSpec(
            num_scalar_prefetch=0,
            grid=(n_bt, n_tc),
            in_specs=[x_spec] + [resident] * 9,
            out_specs=pl.BlockSpec((Bt, Cp), lambda bi, ti: (bi, 0)),
            scratch_shapes=[pltpu.VMEM((Tc * Bt, 3 * Hg), jnp.float32),  # gi0 chunk
                            pltpu.VMEM((2 * Bt, Hg), jnp.float32)]),     # carried h0/h1
        compiler_params=pltpu.CompilerParams(
            dimension_semantics=("parallel", "arbitrary"),
            vmem_limit_bytes=_vmem_limit_bytes()),
    )(x_flat,
      w_ih0_p, b_ih0_p,
      w_hh_cat, b_hh0_p, b_hh1_p,
      w_ih1_p, b_ih1_p,
      fc_w_p, fc_b_p)
    return out[:B, :C]


# ----------------------------------------------------------------------------
# Pure-JAX reference (torch.nn.GRU num_layers=2 batch_first + Linear semantics)
# ----------------------------------------------------------------------------
def reference_forward(x, params, *, hidden_size):
    (w_ih0, w_hh0, b_ih0, b_hh0,
     w_ih1, w_hh1, b_ih1, b_hh1,
     fc_w, fc_b) = params
    B, T, D = x.shape
    H = hidden_size

    def cell(x_t, h, w_ih, w_hh, b_ih, b_hh):
        gi = x_t @ w_ih.T + b_ih
        gh = h @ w_hh.T + b_hh
        i_r, i_z, i_n = jnp.split(gi, 3, axis=-1)
        h_r, h_z, h_n = jnp.split(gh, 3, axis=-1)
        r = jax.nn.sigmoid(i_r + h_r)
        z = jax.nn.sigmoid(i_z + h_z)
        n = jnp.tanh(i_n + r * h_n)
        return (1.0 - z) * n + z * h

    def step(carry, x_t):
        h0, h1 = carry
        h0 = cell(x_t, h0, w_ih0, w_hh0, b_ih0, b_hh0)
        h1 = cell(h0, h1, w_ih1, w_hh1, b_ih1, b_hh1)
        return (h0, h1), None

    init = (jnp.zeros((B, H), jnp.float32), jnp.zeros((B, H), jnp.float32))
    (h0, h1), _ = jax.lax.scan(step, init, jnp.transpose(x, (1, 0, 2)))
    return h1 @ fc_w.T + fc_b


def init_params(key, *, input_size, hidden_size, num_classes):
    """uniform(-1/sqrt(H), 1/sqrt(H)) init (same scheme as nn.GRU / nn.Linear)."""
    H = hidden_size
    k = 1.0 / jnp.sqrt(jnp.float32(H))
    keys = jax.random.split(key, 10)
    u = lambda kk, shape: jax.random.uniform(kk, shape, jnp.float32, -k, k)
    w_ih0 = u(keys[0], (3 * H, input_size))
    w_hh0 = u(keys[1], (3 * H, H))
    b_ih0 = u(keys[2], (3 * H,))
    b_hh0 = u(keys[3], (3 * H,))
    w_ih1 = u(keys[4], (3 * H, H))
    w_hh1 = u(keys[5], (3 * H, H))
    b_ih1 = u(keys[6], (3 * H,))
    b_hh1 = u(keys[7], (3 * H,))
    fc_w = u(keys[8], (num_classes, H))
    fc_b = u(keys[9], (num_classes,))
    return (w_ih0, w_hh0, b_ih0, b_hh0,
            w_ih1, w_hh1, b_ih1, b_hh1,
            fc_w, fc_b)


if __name__ == "__main__":
    # SensorDataset emits 6 features per window (mean+std of x,y,z) -> input_size=6.
    batch, seq_len = 2, 8
    input_size, hidden_size, num_classes = 6, 32, 5   # small shapes for the demo

    key = jax.random.PRNGKey(0)
    kx, kp = jax.random.split(key)
    x = jax.random.normal(kx, (batch, seq_len, input_size), jnp.float32)
    params = init_params(kp, input_size=input_size,
                         hidden_size=hidden_size, num_classes=num_classes)

    prepared = prepare_params(params, hidden_size=hidden_size)   # one-time prep
    out = gru_model_forward(x, prepared, hidden_size=hidden_size,
                            num_classes=num_classes)
    out = jax.block_until_ready(out)

    ref = reference_forward(x, params, hidden_size=hidden_size)
    assert out.shape == (batch, num_classes)
    assert jnp.allclose(out, ref, atol=1e-4, rtol=1e-4), (out, ref)

    print("KERNEL_OK")
</pallas_src>

<mosaic_0001>
module attributes {stable_mosaic.version = 11 : i64} {
  func.func @gru_fc_kernel(%arg0: i32, %arg1: i32, %arg2: memref<64x6xf32, #tpu.memory_space<vmem>>, %arg3: memref<6x384xf32, #tpu.memory_space<vmem>>, %arg4: memref<1x384xf32, #tpu.memory_space<vmem>>, %arg5: memref<128x768xf32, #tpu.memory_space<vmem>>, %arg6: memref<1x384xf32, #tpu.memory_space<vmem>>, %arg7: memref<1x384xf32, #tpu.memory_space<vmem>>, %arg8: memref<128x384xf32, #tpu.memory_space<vmem>>, %arg9: memref<1x384xf32, #tpu.memory_space<vmem>>, %arg10: memref<128x128xf32, #tpu.memory_space<vmem>>, %arg11: memref<1x128xf32, #tpu.memory_space<vmem>>, %arg12: memref<8x128xf32, #tpu.memory_space<vmem>>, %arg13: memref<64x384xf32, #tpu.memory_space<vmem>>, %arg14: memref<16x128xf32, #tpu.memory_space<vmem>>) attributes {dimension_semantics = [#tpu.dimension_semantics<parallel>, #tpu.dimension_semantics<arbitrary>], iteration_bounds = array<i64: 1, 1>, scalar_prefetch = 0 : i64, scratch_operands = 2 : i64, tpu.core_type = #tpu.core_type<tc>, window_params = [{transform_indices = @transform_0, window_bounds = array<i64: 64, 6>}, {pipeline_mode = #tpu.pipeline_mode<synchronous>, transform_indices = @transform_1, window_bounds = array<i64: 6, 384>}, {pipeline_mode = #tpu.pipeline_mode<synchronous>, transform_indices = @transform_2, window_bounds = array<i64: 1, 384>}, {pipeline_mode = #tpu.pipeline_mode<synchronous>, transform_indices = @transform_3, window_bounds = array<i64: 128, 768>}, {pipeline_mode = #tpu.pipeline_mode<synchronous>, transform_indices = @transform_4, window_bounds = array<i64: 1, 384>}, {pipeline_mode = #tpu.pipeline_mode<synchronous>, transform_indices = @transform_5, window_bounds = array<i64: 1, 384>}, {pipeline_mode = #tpu.pipeline_mode<synchronous>, transform_indices = @transform_6, window_bounds = array<i64: 128, 384>}, {pipeline_mode = #tpu.pipeline_mode<synchronous>, transform_indices = @transform_7, window_bounds = array<i64: 1, 384>}, {pipeline_mode = #tpu.pipeline_mode<synchronous>, transform_indices = @transform_8, window_bounds = array<i64: 128, 128>}, {pipeline_mode = #tpu.pipeline_mode<synchronous>, transform_indices = @transform_9, window_bounds = array<i64: 1, 128>}, {transform_indices = @transform_10, window_bounds = array<i64: 8, 128>}]} {
    %c0_i32 = arith.constant 0 : i32
    %0 = arith.cmpi eq, %arg1, %c0_i32 : i32
    %1 = arith.extui %0 : i1 to i32
    %c0_i32_0 = arith.constant 0 : i32
    %2 = arith.cmpi ne, %1, %c0_i32_0 : i32
    scf.if %2 {
      %cst_200 = arith.constant 0.000000e+00 : f32
      %618 = vector.broadcast %cst_200 : f32 to vector<16x128xf32>
      %c0_201 = arith.constant 0 : index
      %c0_202 = arith.constant 0 : index
      %619 = vector.load %arg14[%c0_201, %c0_202] : memref<16x128xf32, #tpu.memory_space<vmem>>, vector<16x128xf32>
      tpu.vector_store %arg14[%c0_201, %c0_202], %618 {strides = array<i32>} : memref<16x128xf32, #tpu.memory_space<vmem>>, vector<16x128xf32>,
    } else {
    }
    %c0 = arith.constant 0 : index
    %c0_1 = arith.constant 0 : index
    %3 = vector.load %arg2[%c0, %c0_1] : memref<64x6xf32, #tpu.memory_space<vmem>>, vector<64x6xf32>
    %c0_2 = arith.constant 0 : index
    %c0_3 = arith.constant 0 : index
    %4 = vector.load %arg3[%c0_2, %c0_3] : memref<6x384xf32, #tpu.memory_space<vmem>>, vector<6x384xf32>
    %cst = arith.constant dense<0.000000e+00> : vector<64x384xf32>
    %5 = tpu.matmul %3, %4, %cst {dimension_numbers = #tpu.dot_dimension_numbers<[1], [0], [0], [1], [0, 0, 1, 1], [], []>} : vector<64x6xf32>, vector<6x384xf32>, vector<64x384xf32> -> vector<64x384xf32>
    %c0_4 = arith.constant 0 : index
    %c0_5 = arith.constant 0 : index
    %6 = vector.load %arg4[%c0_4, %c0_5] : memref<1x384xf32, #tpu.memory_space<vmem>>, vector<1x384xf32>
    %7 = vector.broadcast %6 : vector<1x384xf32> to vector<64x384xf32>
    %8 = arith.addf %5, %7 : vector<64x384xf32>
    %c0_6 = arith.constant 0 : index
    %c0_7 = arith.constant 0 : index
    %9 = vector.load %arg13[%c0_6, %c0_7] : memref<64x384xf32, #tpu.memory_space<vmem>>, vector<64x384xf32>
    tpu.vector_store %arg13[%c0_6, %c0_7], %8 {strides = array<i32>} : memref<64x384xf32, #tpu.memory_space<vmem>>, vector<64x384xf32>,
    %c0_8 = arith.constant 0 : index
    %c0_9 = arith.constant 0 : index
    %10 = vector.load %arg6[%c0_8, %c0_9] : memref<1x384xf32, #tpu.memory_space<vmem>>, vector<1x384xf32>
    %11 = vector.shape_cast %10 : vector<1x384xf32> to vector<1x384xf32>
    %12 = vector.broadcast %11 : vector<1x384xf32> to vector<8x384xf32>
    %c0_10 = arith.constant 0 : index
    %c0_11 = arith.constant 0 : index
    %13 = vector.load %arg7[%c0_10, %c0_11] : memref<1x384xf32, #tpu.memory_space<vmem>>, vector<1x384xf32>
    %14 = vector.shape_cast %13 : vector<1x384xf32> to vector<1x384xf32>
    %15 = vector.broadcast %14 : vector<1x384xf32> to vector<8x384xf32>
    %c0_12 = arith.constant 0 : index
    %c0_13 = arith.constant 0 : index
    %16 = vector.load %arg9[%c0_12, %c0_13] : memref<1x384xf32, #tpu.memory_space<vmem>>, vector<1x384xf32>
    %17 = vector.shape_cast %16 : vector<1x384xf32> to vector<1x384xf32>
    %18 = vector.broadcast %17 : vector<1x384xf32> to vector<8x384xf32>
    %c0_14 = arith.constant 0 : index
    %c0_15 = arith.constant 0 : index
    %19 = vector.load %arg14[%c0_14, %c0_15] : memref<16x128xf32, #tpu.memory_space<vmem>>, vector<8x128xf32>
    %c8 = arith.constant 8 : index
    %c0_16 = arith.constant 0 : index
    %20 = vector.load %arg14[%c8, %c0_16] : memref<16x128xf32, #tpu.memory_space<vmem>>, vector<8x128xf32>
    %c0_i32_17 = arith.constant 0 : i32
    %21 = tpu.concatenate %19, %20 in 0 : vector<8x128xf32>, vector<8x128xf32> -> vector<16x128xf32>
    %c0_18 = arith.constant 0 : index
    %c0_19 = arith.constant 0 : index
    %22 = vector.load %arg5[%c0_18, %c0_19] : memref<128x768xf32, #tpu.memory_space<vmem>>, vector<128x768xf32>
    %cst_20 = arith.constant dense<0.000000e+00> : vector<16x768xf32>
    %23 = tpu.matmul %21, %22, %cst_20 {dimension_numbers = #tpu.dot_dimension_numbers<[1], [0], [0], [1], [0, 0, 1, 1], [], []>} : vector<16x128xf32>, vector<128x768xf32>, vector<16x768xf32> -> vector<16x768xf32>
    %24 = vector.extract_strided_slice %23 {offsets = [0, 0], sizes = [8, 384], strides = [1, 1]} : vector<16x768xf32> to vector<8x384xf32>
    %25 = arith.addf %24, %12 : vector<8x384xf32>
    %26 = vector.extract_strided_slice %23 {offsets = [8, 384], sizes = [8, 384], strides = [1, 1]} : vector<16x768xf32> to vector<8x384xf32>
    %27 = arith.addf %26, %15 : vector<8x384xf32>
    %c8_i32 = arith.constant 8 : i32
    %28 = arith.muli %c0_i32_17, %c8_i32 : i32
    %29 = tpu.assume_multiple %28, 8 : i32
    %30 = arith.index_cast %29 : i32 to index
    %c0_21 = arith.constant 0 : index
    %31 = vector.load %arg13[%30, %c0_21] : memref<64x384xf32, #tpu.memory_space<vmem>>, vector<8x384xf32>
    %32 = vector.extract_strided_slice %31 {offsets = [0, 0], sizes = [8, 128], strides = [1, 1]} : vector<8x384xf32> to vector<8x128xf32>
    %33 = vector.extract_strided_slice %25 {offsets = [0, 0], sizes = [8, 128], strides = [1, 1]} : vector<8x384xf32> to vector<8x128xf32>
    %34 = arith.addf %32, %33 : vector<8x128xf32>
    %cst_22 = arith.constant 5.000000e-01 : f32
    %35 = vector.broadcast %cst_22 : f32 to vector<8x128xf32>
    %36 = arith.mulf %35, %34 : vector<8x128xf32>
    %37 = math.tanh %36 : vector<8x128xf32>
    %cst_23 = arith.constant 1.000000e+00 : f32
    %38 = vector.broadcast %cst_23 : f32 to vector<8x128xf32>
    %39 = arith.addf %37, %38 : vector<8x128xf32>
    %cst_24 = arith.constant 5.000000e-01 : f32
    %40 = vector.broadcast %cst_24 : f32 to vector<8x128xf32>
    %41 = arith.mulf %40, %39 : vector<8x128xf32>
    %42 = vector.extract_strided_slice %31 {offsets = [0, 128], sizes = [8, 128], strides = [1, 1]} : vector<8x384xf32> to vector<8x128xf32>
    %43 = vector.extract_strided_slice %25 {offsets = [0, 128], sizes = [8, 128], strides = [1, 1]} : vector<8x384xf32> to vector<8x128xf32>
    %44 = arith.addf %42, %43 : vector<8x128xf32>
    %cst_25 = arith.constant 5.000000e-01 : f32
    %45 = vector.broadcast %cst_25 : f32 to vector<8x128xf32>
    %46 = arith.mulf %45, %44 : vector<8x128xf32>
    %47 = math.tanh %46 : vector<8x128xf32>
    %cst_26 = arith.constant 1.000000e+00 : f32
    %48 = vector.broadcast %cst_26 : f32 to vector<8x128xf32>
    %49 = arith.addf %47, %48 : vector<8x128xf32>
    %cst_27 = arith.constant 5.000000e-01 : f32
    %50 = vector.broadcast %cst_27 : f32 to vector<8x128xf32>
    %51 = arith.mulf %50, %49 : vector<8x128xf32>
    %52 = vector.extract_strided_slice %31 {offsets = [0, 256], sizes = [8, 128], strides = [1, 1]} : vector<8x384xf32> to vector<8x128xf32>
    %53 = vector.extract_strided_slice %25 {offsets = [0, 256], sizes = [8, 128], strides = [1, 1]} : vector<8x384xf32> to vector<8x128xf32>
    %54 = arith.mulf %41, %53 : vector<8x128xf32>
    %55 = arith.addf %52, %54 : vector<8x128xf32>
    %56 = math.tanh %55 : vector<8x128xf32>
    %cst_28 = arith.constant 1.000000e+00 : f32
    %57 = vector.broadcast %cst_28 : f32 to vector<8x128xf32>
    %58 = arith.subf %57, %51 : vector<8x128xf32>
    %59 = arith.mulf %58, %56 : vector<8x128xf32>
    %60 = arith.mulf %51, %19 : vector<8x128xf32>
    %61 = arith.addf %59, %60 : vector<8x128xf32>
    %c0_29 = arith.constant 0 : index
    %c0_30 = arith.constant 0 : index
    %62 = vector.load %arg8[%c0_29, %c0_30] : memref<128x384xf32, #tpu.memory_space<vmem>>, vector<128x384xf32>
    %cst_31 = arith.constant dense<0.000000e+00> : vector<8x384xf32>
    %63 = tpu.matmul %61, %62, %cst_31 {dimension_numbers = #tpu.dot_dimension_numbers<[1], [0], [0], [1], [0, 0, 1, 1], [], []>} : vector<8x128xf32>, vector<128x384xf32>, vector<8x384xf32> -> vector<8x384xf32>
    %64 = arith.addf %63, %18 : vector<8x384xf32>
    %65 = vector.extract_strided_slice %64 {offsets = [0, 0], sizes = [8, 128], strides = [1, 1]} : vector<8x384xf32> to vector<8x128xf32>
    %66 = vector.extract_strided_slice %27 {offsets = [0, 0], sizes = [8, 128], strides = [1, 1]} : vector<8x384xf32> to vector<8x128xf32>
    %67 = arith.addf %65, %66 : vector<8x128xf32>
    %cst_32 = arith.constant 5.000000e-01 : f32
    %68 = vector.broadcast %cst_32 : f32 to vector<8x128xf32>
    %69 = arith.mulf %68, %67 : vector<8x128xf32>
    %70 = math.tanh %69 : vector<8x128xf32>
    %cst_33 = arith.constant 1.000000e+00 : f32
    %71 = vector.broadcast %cst_33 : f32 to vector<8x128xf32>
    %72 = arith.addf %70, %71 : vector<8x128xf32>
    %cst_34 = arith.constant 5.000000e-01 : f32
    %73 = vector.broadcast %cst_34 : f32 to vector<8x128xf32>
    %74 = arith.mulf %73, %72 : vector<8x128xf32>
    %75 = vector.extract_strided_slice %64 {offsets = [0, 128], sizes = [8, 128], strides = [1, 1]} : vector<8x384xf32> to vector<8x128xf32>
    %76 = vector.extract_strided_slice %27 {offsets = [0, 128], sizes = [8, 128], strides = [1, 1]} : vector<8x384xf32> to vector<8x128xf32>
    %77 = arith.addf %75, %76 : vector<8x128xf32>
    %cst_35 = arith.constant 5.000000e-01 : f32
    %78 = vector.broadcast %cst_35 : f32 to vector<8x128xf32>
    %79 = arith.mulf %78, %77 : vector<8x128xf32>
    %80 = math.tanh %79 : vector<8x128xf32>
    %cst_36 = arith.constant 1.000000e+00 : f32
    %81 = vector.broadcast %cst_36 : f32 to vector<8x128xf32>
    %82 = arith.addf %80, %81 : vector<8x128xf32>
    %cst_37 = arith.constant 5.000000e-01 : f32
    %83 = vector.broadcast %cst_37 : f32 to vector<8x128xf32>
    %84 = arith.mulf %83, %82 : vector<8x128xf32>
    %85 = vector.extract_strided_slice %64 {offsets = [0, 256], sizes = [8, 128], strides = [1, 1]} : vector<8x384xf32> to vector<8x128xf32>
    %86 = vector.extract_strided_slice %27 {offsets = [0, 256], sizes = [8, 128], strides = [1, 1]} : vector<8x384xf32> to vector<8x128xf32>
    %87 = arith.mulf %74, %86 : vector<8x128xf32>
    %88 = arith.addf %85, %87 : vector<8x128xf32>
    %89 = math.tanh %88 : vector<8x128xf32>
    %cst_38 = arith.constant 1.000000e+00 : f32
    %90 = vector.broadcast %cst_38 : f32 to vector<8x128xf32>
    %91 = arith.subf %90, %84 : vector<8x128xf32>
    %92 = arith.mulf %91, %89 : vector<8x128xf32>
    %93 = arith.mulf %84, %20 : vector<8x128xf32>
    %94 = arith.addf %92, %93 : vector<8x128xf32>
    %c1_i32 = arith.constant 1 : i32
    %95 = tpu.concatenate %61, %94 in 0 : vector<8x128xf32>, vector<8x128xf32> -> vector<16x128xf32>
    %c0_39 = arith.constant 0 : index
    %c0_40 = arith.constant 0 : index
    %96 = vector.load %arg5[%c0_39, %c0_40] : memref<128x768xf32, #tpu.memory_space<vmem>>, vector<128x768xf32>
    %cst_41 = arith.constant dense<0.000000e+00> : vector<16x768xf32>
    %97 = tpu.matmul %95, %96, %cst_41 {dimension_numbers = #tpu.dot_dimension_numbers<[1], [0], [0], [1], [0, 0, 1, 1], [], []>} : vector<16x128xf32>, vector<128x768xf32>, vector<16x768xf32> -> vector<16x768xf32>
    %98 = vector.extract_strided_slice %97 {offsets = [0, 0], sizes = [8, 384], strides = [1, 1]} : vector<16x768xf32> to vector<8x384xf32>
    %99 = arith.addf %98, %12 : vector<8x384xf32>
    %100 = vector.extract_strided_slice %97 {offsets = [8, 384], sizes = [8, 384], strides = [1, 1]} : vector<16x768xf32> to vector<8x384xf32>
    %101 = arith.addf %100, %15 : vector<8x384xf32>
    %c8_i32_42 = arith.constant 8 : i32
    %102 = arith.muli %c1_i32, %c8_i32_42 : i32
    %103 = tpu.assume_multiple %102, 8 : i32
    %104 = arith.index_cast %103 : i32 to index
    %c0_43 = arith.constant 0 : index
    %105 = vector.load %arg13[%104, %c0_43] : memref<64x384xf32, #tpu.memory_space<vmem>>, vector<8x384xf32>
    %106 = vector.extract_strided_slice %105 {offsets = [0, 0], sizes = [8, 128], strides = [1, 1]} : vector<8x384xf32> to vector<8x128xf32>
    %107 = vector.extract_strided_slice %99 {offsets = [0, 0], sizes = [8, 128], strides = [1, 1]} : vector<8x384xf32> to vector<8x128xf32>
    %108 = arith.addf %106, %107 : vector<8x128xf32>
    %cst_44 = arith.constant 5.000000e-01 : f32
    %109 = vector.broadcast %cst_44 : f32 to vector<8x128xf32>
    %110 = arith.mulf %109, %108 : vector<8x128xf32>
    %111 = math.tanh %110 : vector<8x128xf32>
    %cst_45 = arith.constant 1.000000e+00 : f32
    %112 = vector.broadcast %cst_45 : f32 to vector<8x128xf32>
    %113 = arith.addf %111, %112 : vector<8x128xf32>
    %cst_46 = arith.constant 5.000000e-01 : f32
    %114 = vector.broadcast %cst_46 : f32 to vector<8x128xf32>
    %115 = arith.mulf %114, %113 : vector<8x128xf32>
    %116 = vector.extract_strided_slice %105 {offsets = [0, 128], sizes = [8, 128], strides = [1, 1]} : vector<8x384xf32> to vector<8x128xf32>
    %117 = vector.extract_strided_slice %99 {offsets = [0, 128], sizes = [8, 128], strides = [1, 1]} : vector<8x384xf32> to vector<8x128xf32>
    %118 = arith.addf %116, %117 : vector<8x128xf32>
    %cst_47 = arith.constant 5.000000e-01 : f32
    %119 = vector.broadcast %cst_47 : f32 to vector<8x128xf32>
    %120 = arith.mulf %119, %118 : vector<8x128xf32>
    %121 = math.tanh %120 : vector<8x128xf32>
    %cst_48 = arith.constant 1.000000e+00 : f32
    %122 = vector.broadcast %cst_48 : f32 to vector<8x128xf32>
    %123 = arith.addf %121, %122 : vector<8x128xf32>
    %cst_49 = arith.constant 5.000000e-01 : f32
    %124 = vector.broadcast %cst_49 : f32 to vector<8x128xf32>
    %125 = arith.mulf %124, %123 : vector<8x128xf32>
    %126 = vector.extract_strided_slice %105 {offsets = [0, 256], sizes = [8, 128], strides = [1, 1]} : vector<8x384xf32> to vector<8x128xf32>
    %127 = vector.extract_strided_slice %99 {offsets = [0, 256], sizes = [8, 128], strides = [1, 1]} : vector<8x384xf32> to vector<8x128xf32>
    %128 = arith.mulf %115, %127 : vector<8x128xf32>
    %129 = arith.addf %126, %128 : vector<8x128xf32>
    %130 = math.tanh %129 : vector<8x128xf32>
    %cst_50 = arith.constant 1.000000e+00 : f32
    %131 = vector.broadcast %cst_50 : f32 to vector<8x128xf32>
    %132 = arith.subf %131, %125 : vector<8x128xf32>
    %133 = arith.mulf %132, %130 : vector<8x128xf32>
    %134 = arith.mulf %125, %61 : vector<8x128xf32>
    %135 = arith.addf %133, %134 : vector<8x128xf32>
    %c0_51 = arith.constant 0 : index
    %c0_52 = arith.constant 0 : index
    %136 = vector.load %arg8[%c0_51, %c0_52] : memref<128x384xf32, #tpu.memory_space<vmem>>, vector<128x384xf32>
    %cst_53 = arith.constant dense<0.000000e+00> : vector<8x384xf32>
    %137 = tpu.matmul %135, %136, %cst_53 {dimension_numbers = #tpu.dot_dimension_numbers<[1], [0], [0], [1], [0, 0, 1, 1], [], []>} : vector<8x128xf32>, vector<128x384xf32>, vector<8x384xf32> -> vector<8x384xf32>
    %138 = arith.addf %137, %18 : vector<8x384xf32>
    %139 = vector.extract_strided_slice %138 {offsets = [0, 0], sizes = [8, 128], strides = [1, 1]} : vector<8x384xf32> to vector<8x128xf32>
    %140 = vector.extract_strided_slice %101 {offsets = [0, 0], sizes = [8, 128], strides = [1, 1]} : vector<8x384xf32> to vector<8x128xf32>
    %141 = arith.addf %139, %140 : vector<8x128xf32>
    %cst_54 = arith.constant 5.000000e-01 : f32
    %142 = vector.broadcast %cst_54 : f32 to vector<8x128xf32>
    %143 = arith.mulf %142, %141 : vector<8x128xf32>
    %144 = math.tanh %143 : vector<8x128xf32>
    %cst_55 = arith.constant 1.000000e+00 : f32
    %145 = vector.broadcast %cst_55 : f32 to vector<8x128xf32>
    %146 = arith.addf %144, %145 : vector<8x128xf32>
    %cst_56 = arith.constant 5.000000e-01 : f32
    %147 = vector.broadcast %cst_56 : f32 to vector<8x128xf32>
    %148 = arith.mulf %147, %146 : vector<8x128xf32>
    %149 = vector.extract_strided_slice %138 {offsets = [0, 128], sizes = [8, 128], strides = [1, 1]} : vector<8x384xf32> to vector<8x128xf32>
    %150 = vector.extract_strided_slice %101 {offsets = [0, 128], sizes = [8, 128], strides = [1, 1]} : vector<8x384xf32> to vector<8x128xf32>
    %151 = arith.addf %149, %150 : vector<8x128xf32>
    %cst_57 = arith.constant 5.000000e-01 : f32
    %152 = vector.broadcast %cst_57 : f32 to vector<8x128xf32>
    %153 = arith.mulf %152, %151 : vector<8x128xf32>
    %154 = math.tanh %153 : vector<8x128xf32>
    %cst_58 = arith.constant 1.000000e+00 : f32
    %155 = vector.broadcast %cst_58 : f32 to vector<8x128xf32>
    %156 = arith.addf %154, %155 : vector<8x128xf32>
    %cst_59 = arith.constant 5.000000e-01 : f32
    %157 = vector.broadcast %cst_59 : f32 to vector<8x128xf32>
    %158 = arith.mulf %157, %156 : vector<8x128xf32>
    %159 = vector.extract_strided_slice %138 {offsets = [0, 256], sizes = [8, 128], strides = [1, 1]} : vector<8x384xf32> to vector<8x128xf32>
    %160 = vector.extract_strided_slice %101 {offsets = [0, 256], sizes = [8, 128], strides = [1, 1]} : vector<8x384xf32> to vector<8x128xf32>
    %161 = arith.mulf %148, %160 : vector<8x128xf32>
    %162 = arith.addf %159, %161 : vector<8x128xf32>
    %163 = math.tanh %162 : vector<8x128xf32>
    %cst_60 = arith.constant 1.000000e+00 : f32
    %164 = vector.broadcast %cst_60 : f32 to vector<8x128xf32>
    %165 = arith.subf %164, %158 : vector<8x128xf32>
    %166 = arith.mulf %165, %163 : vector<8x128xf32>
    %167 = arith.mulf %158, %94 : vector<8x128xf32>
    %168 = arith.addf %166, %167 : vector<8x128xf32>
    %c2_i32 = arith.constant 2 : i32
    %169 = tpu.concatenate %135, %168 in 0 : vector<8x128xf32>, vector<8x128xf32> -> vector<16x128xf32>
    %c0_61 = arith.constant 0 : index
    %c0_62 = arith.constant 0 : index
    %170 = vector.load %arg5[%c0_61, %c0_62] : memref<128x768xf32, #tpu.memory_space<vmem>>, vector<128x768xf32>
    %cst_63 = arith.constant dense<0.000000e+00> : vector<16x768xf32>
    %171 = tpu.matmul %169, %170, %cst_63 {dimension_numbers = #tpu.dot_dimension_numbers<[1], [0], [0], [1], [0, 0, 1, 1], [], []>} : vector<16x128xf32>, vector<128x768xf32>, vector<16x768xf32> -> vector<16x768xf32>
    %172 = vector.extract_strided_slice %171 {offsets = [0, 0], sizes = [8, 384], strides = [1, 1]} : vector<16x768xf32> to vector<8x384xf32>
    %173 = arith.addf %172, %12 : vector<8x384xf32>
    %174 = vector.extract_strided_slice %171 {offsets = [8, 384], sizes = [8, 384], strides = [1, 1]} : vector<16x768xf32> to vector<8x384xf32>
    %175 = arith.addf %174, %15 : vector<8x384xf32>
    %c8_i32_64 = arith.constant 8 : i32
    %176 = arith.muli %c2_i32, %c8_i32_64 : i32
    %177 = tpu.assume_multiple %176, 8 : i32
    %178 = arith.index_cast %177 : i32 to index
    %c0_65 = arith.constant 0 : index
    %179 = vector.load %arg13[%178, %c0_65] : memref<64x384xf32, #tpu.memory_space<vmem>>, vector<8x384xf32>
    %180 = vector.extract_strided_slice %179 {offsets = [0, 0], sizes = [8, 128], strides = [1, 1]} : vector<8x384xf32> to vector<8x128xf32>
    %181 = vector.extract_strided_slice %173 {offsets = [0, 0], sizes = [8, 128], strides = [1, 1]} : vector<8x384xf32> to vector<8x128xf32>
    %182 = arith.addf %180, %181 : vector<8x128xf32>
    %cst_66 = arith.constant 5.000000e-01 : f32
    %183 = vector.broadcast %cst_66 : f32 to vector<8x128xf32>
    %184 = arith.mulf %183, %182 : vector<8x128xf32>
    %185 = math.tanh %184 : vector<8x128xf32>
    %cst_67 = arith.constant 1.000000e+00 : f32
    %186 = vector.broadcast %cst_67 : f32 to vector<8x128xf32>
    %187 = arith.addf %185, %186 : vector<8x128xf32>
    %cst_68 = arith.constant 5.000000e-01 : f32
    %188 = vector.broadcast %cst_68 : f32 to vector<8x128xf32>
    %189 = arith.mulf %188, %187 : vector<8x128xf32>
    %190 = vector.extract_strided_slice %179 {offsets = [0, 128], sizes = [8, 128], strides = [1, 1]} : vector<8x384xf32> to vector<8x128xf32>
    %191 = vector.extract_strided_slice %173 {offsets = [0, 128], sizes = [8, 128], strides = [1, 1]} : vector<8x384xf32> to vector<8x128xf32>
    %192 = arith.addf %190, %191 : vector<8x128xf32>
    %cst_69 = arith.constant 5.000000e-01 : f32
    %193 = vector.broadcast %cst_69 : f32 to vector<8x128xf32>
    %194 = arith.mulf %193, %192 : vector<8x128xf32>
    %195 = math.tanh %194 : vector<8x128xf32>
    %cst_70 = arith.constant 1.000000e+00 : f32
    %196 = vector.broadcast %cst_70 : f32 to vector<8x128xf32>
    %197 = arith.addf %195, %196 : vector<8x128xf32>
    %cst_71 = arith.constant 5.000000e-01 : f32
    %198 = vector.broadcast %cst_71 : f32 to vector<8x128xf32>
    %199 = arith.mulf %198, %197 : vector<8x128xf32>
    %200 = vector.extract_strided_slice %179 {offsets = [0, 256], sizes = [8, 128], strides = [1, 1]} : vector<8x384xf32> to vector<8x128xf32>
    %201 = vector.extract_strided_slice %173 {offsets = [0, 256], sizes = [8, 128], strides = [1, 1]} : vector<8x384xf32> to vector<8x128xf32>
    %202 = arith.mulf %189, %201 : vector<8x128xf32>
    %203 = arith.addf %200, %202 : vector<8x128xf32>
    %204 = math.tanh %203 : vector<8x128xf32>
    %cst_72 = arith.constant 1.000000e+00 : f32
    %205 = vector.broadcast %cst_72 : f32 to vector<8x128xf32>
    %206 = arith.subf %205, %199 : vector<8x128xf32>
    %207 = arith.mulf %206, %204 : vector<8x128xf32>
    %208 = arith.mulf %199, %135 : vector<8x128xf32>
    %209 = arith.addf %207, %208 : vector<8x128xf32>
    %c0_73 = arith.constant 0 : index
    %c0_74 = arith.constant 0 : index
    %210 = vector.load %arg8[%c0_73, %c0_74] : memref<128x384xf32, #tpu.memory_space<vmem>>, vector<128x384xf32>
    %cst_75 = arith.constant dense<0.000000e+00> : vector<8x384xf32>
    %211 = tpu.matmul %209, %210, %cst_75 {dimension_numbers = #tpu.dot_dimension_numbers<[1], [0], [0], [1], [0, 0, 1, 1], [], []>} : vector<8x128xf32>, vector<128x384xf32>, vector<8x384xf32> -> vector<8x384xf32>
    %212 = arith.addf %211, %18 : vector<8x384xf32>
    %213 = vector.extract_strided_slice %212 {offsets = [0, 0], sizes = [8, 128], strides = [1, 1]} : vector<8x384xf32> to vector<8x128xf32>
    %214 = vector.extract_strided_slice %175 {offsets = [0, 0], sizes = [8, 128], strides = [1, 1]} : vector<8x384xf32> to vector<8x128xf32>
    %215 = arith.addf %213, %214 : vector<8x128xf32>
    %cst_76 = arith.constant 5.000000e-01 : f32
    %216 = vector.broadcast %cst_76 : f32 to vector<8x128xf32>
    %217 = arith.mulf %216, %215 : vector<8x128xf32>
    %218 = math.tanh %217 : vector<8x128xf32>
    %cst_77 = arith.constant 1.000000e+00 : f32
    %219 = vector.broadcast %cst_77 : f32 to vector<8x128xf32>
    %220 = arith.addf %218, %219 : vector<8x128xf32>
    %cst_78 = arith.constant 5.000000e-01 : f32
    %221 = vector.broadcast %cst_78 : f32 to vector<8x128xf32>
    %222 = arith.mulf %221, %220 : vector<8x128xf32>
    %223 = vector.extract_strided_slice %212 {offsets = [0, 128], sizes = [8, 128], strides = [1, 1]} : vector<8x384xf32> to vector<8x128xf32>
    %224 = vector.extract_strided_slice %175 {offsets = [0, 128], sizes = [8, 128], strides = [1, 1]} : vector<8x384xf32> to vector<8x128xf32>
    %225 = arith.addf %223, %224 : vector<8x128xf32>
    %cst_79 = arith.constant 5.000000e-01 : f32
    %226 = vector.broadcast %cst_79 : f32 to vector<8x128xf32>
    %227 = arith.mulf %226, %225 : vector<8x128xf32>
    %228 = math.tanh %227 : vector<8x128xf32>
    %cst_80 = arith.constant 1.000000e+00 : f32
    %229 = vector.broadcast %cst_80 : f32 to vector<8x128xf32>
    %230 = arith.addf %228, %229 : vector<8x128xf32>
    %cst_81 = arith.constant 5.000000e-01 : f32
    %231 = vector.broadcast %cst_81 : f32 to vector<8x128xf32>
    %232 = arith.mulf %231, %230 : vector<8x128xf32>
    %233 = vector.extract_strided_slice %212 {offsets = [0, 256], sizes = [8, 128], strides = [1, 1]} : vector<8x384xf32> to vector<8x128xf32>
    %234 = vector.extract_strided_slice %175 {offsets = [0, 256], sizes = [8, 128], strides = [1, 1]} : vector<8x384xf32> to vector<8x128xf32>
    %235 = arith.mulf %222, %234 : vector<8x128xf32>
    %236 = arith.addf %233, %235 : vector<8x128xf32>
    %237 = math.tanh %236 : vector<8x128xf32>
    %cst_82 = arith.constant 1.000000e+00 : f32
    %238 = vector.broadcast %cst_82 : f32 to vector<8x128xf32>
    %239 = arith.subf %238, %232 : vector<8x128xf32>
    %240 = arith.mulf %239, %237 : vector<8x128xf32>
    %241 = arith.mulf %232, %168 : vector<8x128xf32>
    %242 = arith.addf %240, %241 : vector<8x128xf32>
    %c3_i32 = arith.constant 3 : i32
    %243 = tpu.concatenate %209, %242 in 0 : vector<8x128xf32>, vector<8x128xf32> -> vector<16x128xf32>
    %c0_83 = arith.constant 0 : index
    %c0_84 = arith.constant 0 : index
    %244 = vector.load %arg5[%c0_83, %c0_84] : memref<128x768xf32, #tpu.memory_space<vmem>>, vector<128x768xf32>
    %cst_85 = arith.constant dense<0.000000e+00> : vector<16x768xf32>
    %245 = tpu.matmul %243, %244, %cst_85 {dimension_numbers = #tpu.dot_dimension_numbers<[1], [0], [0], [1], [0, 0, 1, 1], [], []>} : vector<16x128xf32>, vector<128x768xf32>, vector<16x768xf32> -> vector<16x768xf32>
    %246 = vector.extract_strided_slice %245 {offsets = [0, 0], sizes = [8, 384], strides = [1, 1]} : vector<16x768xf32> to vector<8x384xf32>
    %247 = arith.addf %246, %12 : vector<8x384xf32>
    %248 = vector.extract_strided_slice %245 {offsets = [8, 384], sizes = [8, 384], strides = [1, 1]} : vector<16x768xf32> to vector<8x384xf32>
    %249 = arith.addf %248, %15 : vector<8x384xf32>
    %c8_i32_86 = arith.constant 8 : i32
    %250 = arith.muli %c3_i32, %c8_i32_86 : i32
    %251 = tpu.assume_multiple %250, 8 : i32
    %252 = arith.index_cast %251 : i32 to index
    %c0_87 = arith.constant 0 : index
    %253 = vector.load %arg13[%252, %c0_87] : memref<64x384xf32, #tpu.memory_space<vmem>>, vector<8x384xf32>
    %254 = vector.extract_strided_slice %253 {offsets = [0, 0], sizes = [8, 128], strides = [1, 1]} : vector<8x384xf32> to vector<8x128xf32>
    %255 = vector.extract_strided_slice %247 {offsets = [0, 0], sizes = [8, 128], strides = [1, 1]} : vector<8x384xf32> to vector<8x128xf32>
    %256 = arith.addf %254, %255 : vector<8x128xf32>
    %cst_88 = arith.constant 5.000000e-01 : f32
    %257 = vector.broadcast %cst_88 : f32 to vector<8x128xf32>
    %258 = arith.mulf %257, %256 : vector<8x128xf32>
    %259 = math.tanh %258 : vector<8x128xf32>
    %cst_89 = arith.constant 1.000000e+00 : f32
    %260 = vector.broadcast %cst_89 : f32 to vector<8x128xf32>
    %261 = arith.addf %259, %260 : vector<8x128xf32>
    %cst_90 = arith.constant 5.000000e-01 : f32
    %262 = vector.broadcast %cst_90 : f32 to vector<8x128xf32>
    %263 = arith.mulf %262, %261 : vector<8x128xf32>
    %264 = vector.extract_strided_slice %253 {offsets = [0, 128], sizes = [8, 128], strides = [1, 1]} : vector<8x384xf32> to vector<8x128xf32>
    %265 = vector.extract_strided_slice %247 {offsets = [0, 128], sizes = [8, 128], strides = [1, 1]} : vector<8x384xf32> to vector<8x128xf32>
    %266 = arith.addf %264, %265 : vector<8x128xf32>
    %cst_91 = arith.constant 5.000000e-01 : f32
    %267 = vector.broadcast %cst_91 : f32 to vector<8x128xf32>
    %268 = arith.mulf %267, %266 : vector<8x128xf32>
    %269 = math.tanh %268 : vector<8x128xf32>
    %cst_92 = arith.constant 1.000000e+00 : f32
    %270 = vector.broadcast %cst_92 : f32 to vector<8x128xf32>
    %271 = arith.addf %269, %270 : vector<8x128xf32>
    %cst_93 = arith.constant 5.000000e-01 : f32
    %272 = vector.broadcast %cst_93 : f32 to vector<8x128xf32>
    %273 = arith.mulf %272, %271 : vector<8x128xf32>
    %274 = vector.extract_strided_slice %253 {offsets = [0, 256], sizes = [8, 128], strides = [1, 1]} : vector<8x384xf32> to vector<8x128xf32>
    %275 = vector.extract_strided_slice %247 {offsets = [0, 256], sizes = [8, 128], strides = [1, 1]} : vector<8x384xf32> to vector<8x128xf32>
    %276 = arith.mulf %263, %275 : vector<8x128xf32>
    %277 = arith.addf %274, %276 : vector<8x128xf32>
    %278 = math.tanh %277 : vector<8x128xf32>
    %cst_94 = arith.constant 1.000000e+00 : f32
    %279 = vector.broadcast %cst_94 : f32 to vector<8x128xf32>
    %280 = arith.subf %279, %273 : vector<8x128xf32>
    %281 = arith.mulf %280, %278 : vector<8x128xf32>
    %282 = arith.mulf %273, %209 : vector<8x128xf32>
    %283 = arith.addf %281, %282 : vector<8x128xf32>
    %c0_95 = arith.constant 0 : index
    %c0_96 = arith.constant 0 : index
    %284 = vector.load %arg8[%c0_95, %c0_96] : memref<128x384xf32, #tpu.memory_space<vmem>>, vector<128x384xf32>
    %cst_97 = arith.constant dense<0.000000e+00> : vector<8x384xf32>
    %285 = tpu.matmul %283, %284, %cst_97 {dimension_numbers = #tpu.dot_dimension_numbers<[1], [0], [0], [1], [0, 0, 1, 1], [], []>} : vector<8x128xf32>, vector<128x384xf32>, vector<8x384xf32> -> vector<8x384xf32>
    %286 = arith.addf %285, %18 : vector<8x384xf32>
    %287 = vector.extract_strided_slice %286 {offsets = [0, 0], sizes = [8, 128], strides = [1, 1]} : vector<8x384xf32> to vector<8x128xf32>
    %288 = vector.extract_strided_slice %249 {offsets = [0, 0], sizes = [8, 128], strides = [1, 1]} : vector<8x384xf32> to vector<8x128xf32>
    %289 = arith.addf %287, %288 : vector<8x128xf32>
    %cst_98 = arith.constant 5.000000e-01 : f32
    %290 = vector.broadcast %cst_98 : f32 to vector<8x128xf32>
    %291 = arith.mulf %290, %289 : vector<8x128xf32>
    %292 = math.tanh %291 : vector<8x128xf32>
    %cst_99 = arith.constant 1.000000e+00 : f32
    %293 = vector.broadcast %cst_99 : f32 to vector<8x128xf32>
    %294 = arith.addf %292, %293 : vector<8x128xf32>
    %cst_100 = arith.constant 5.000000e-01 : f32
    %295 = vector.broadcast %cst_100 : f32 to vector<8x128xf32>
    %296 = arith.mulf %295, %294 : vector<8x128xf32>
    %297 = vector.extract_strided_slice %286 {offsets = [0, 128], sizes = [8, 128], strides = [1, 1]} : vector<8x384xf32> to vector<8x128xf32>
    %298 = vector.extract_strided_slice %249 {offsets = [0, 128], sizes = [8, 128], strides = [1, 1]} : vector<8x384xf32> to vector<8x128xf32>
    %299 = arith.addf %297, %298 : vector<8x128xf32>
    %cst_101 = arith.constant 5.000000e-01 : f32
    %300 = vector.broadcast %cst_101 : f32 to vector<8x128xf32>
    %301 = arith.mulf %300, %299 : vector<8x128xf32>
    %302 = math.tanh %301 : vector<8x128xf32>
    %cst_102 = arith.constant 1.000000e+00 : f32
    %303 = vector.broadcast %cst_102 : f32 to vector<8x128xf32>
    %304 = arith.addf %302, %303 : vector<8x128xf32>
    %cst_103 = arith.constant 5.000000e-01 : f32
    %305 = vector.broadcast %cst_103 : f32 to vector<8x128xf32>
    %306 = arith.mulf %305, %304 : vector<8x128xf32>
    %307 = vector.extract_strided_slice %286 {offsets = [0, 256], sizes = [8, 128], strides = [1, 1]} : vector<8x384xf32> to vector<8x128xf32>
    %308 = vector.extract_strided_slice %249 {offsets = [0, 256], sizes = [8, 128], strides = [1, 1]} : vector<8x384xf32> to vector<8x128xf32>
    %309 = arith.mulf %296, %308 : vector<8x128xf32>
    %310 = arith.addf %307, %309 : vector<8x128xf32>
    %311 = math.tanh %310 : vector<8x128xf32>
    %cst_104 = arith.constant 1.000000e+00 : f32
    %312 = vector.broadcast %cst_104 : f32 to vector<8x128xf32>
    %313 = arith.subf %312, %306 : vector<8x128xf32>
    %314 = arith.mulf %313, %311 : vector<8x128xf32>
    %315 = arith.mulf %306, %242 : vector<8x128xf32>
    %316 = arith.addf %314, %315 : vector<8x128xf32>
    %c4_i32 = arith.constant 4 : i32
    %317 = tpu.concatenate %283, %316 in 0 : vector<8x128xf32>, vector<8x128xf32> -> vector<16x128xf32>
    %c0_105 = arith.constant 0 : index
    %c0_106 = arith.constant 0 : index
    %318 = vector.load %arg5[%c0_105, %c0_106] : memref<128x768xf32, #tpu.memory_space<vmem>>, vector<128x768xf32>
    %cst_107 = arith.constant dense<0.000000e+00> : vector<16x768xf32>
    %319 = tpu.matmul %317, %318, %cst_107 {dimension_numbers = #tpu.dot_dimension_numbers<[1], [0], [0], [1], [0, 0, 1, 1], [], []>} : vector<16x128xf32>, vector<128x768xf32>, vector<16x768xf32> -> vector<16x768xf32>
    %320 = vector.extract_strided_slice %319 {offsets = [0, 0], sizes = [8, 384], strides = [1, 1]} : vector<16x768xf32> to vector<8x384xf32>
    %321 = arith.addf %320, %12 : vector<8x384xf32>
    %322 = vector.extract_strided_slice %319 {offsets = [8, 384], sizes = [8, 384], strides = [1, 1]} : vector<16x768xf32> to vector<8x384xf32>
    %323 = arith.addf %322, %15 : vector<8x384xf32>
    %c8_i32_108 = arith.constant 8 : i32
    %324 = arith.muli %c4_i32, %c8_i32_108 : i32
    %325 = tpu.assume_multiple %324, 8 : i32
    %326 = arith.index_cast %325 : i32 to index
    %c0_109 = arith.constant 0 : index
    %327 = vector.load %arg13[%326, %c0_109] : memref<64x384xf32, #tpu.memory_space<vmem>>, vector<8x384xf32>
    %328 = vector.extract_strided_slice %327 {offsets = [0, 0], sizes = [8, 128], strides = [1, 1]} : vector<8x384xf32> to vector<8x128xf32>
    %329 = vector.extract_strided_slice %321 {offsets = [0, 0], sizes = [8, 128], strides = [1, 1]} : vector<8x384xf32> to vector<8x128xf32>
    %330 = arith.addf %328, %329 : vector<8x128xf32>
    %cst_110 = arith.constant 5.000000e-01 : f32
    %331 = vector.broadcast %cst_110 : f32 to vector<8x128xf32>
    %332 = arith.mulf %331, %330 : vector<8x128xf32>
    %333 = math.tanh %332 : vector<8x128xf32>
    %cst_111 = arith.constant 1.000000e+00 : f32
    %334 = vector.broadcast %cst_111 : f32 to vector<8x128xf32>
    %335 = arith.addf %333, %334 : vector<8x128xf32>
    %cst_112 = arith.constant 5.000000e-01 : f32
    %336 = vector.broadcast %cst_112 : f32 to vector<8x128xf32>
    %337 = arith.mulf %336, %335 : vector<8x128xf32>
    %338 = vector.extract_strided_slice %327 {offsets = [0, 128], sizes = [8, 128], strides = [1, 1]} : vector<8x384xf32> to vector<8x128xf32>
    %339 = vector.extract_strided_slice %321 {offsets = [0, 128], sizes = [8, 128], strides = [1, 1]} : vector<8x384xf32> to vector<8x128xf32>
    %340 = arith.addf %338, %339 : vector<8x128xf32>
    %cst_113 = arith.constant 5.000000e-01 : f32
    %341 = vector.broadcast %cst_113 : f32 to vector<8x128xf32>
    %342 = arith.mulf %341, %340 : vector<8x128xf32>
    %343 = math.tanh %342 : vector<8x128xf32>
    %cst_114 = arith.constant 1.000000e+00 : f32
    %344 = vector.broadcast %cst_114 : f32 to vector<8x128xf32>
    %345 = arith.addf %343, %344 : vector<8x128xf32>
    %cst_115 = arith.constant 5.000000e-01 : f32
    %346 = vector.broadcast %cst_115 : f32 to vector<8x128xf32>
    %347 = arith.mulf %346, %345 : vector<8x128xf32>
    %348 = vector.extract_strided_slice %327 {offsets = [0, 256], sizes = [8, 128], strides = [1, 1]} : vector<8x384xf32> to vector<8x128xf32>
    %349 = vector.extract_strided_slice %321 {offsets = [0, 256], sizes = [8, 128], strides = [1, 1]} : vector<8x384xf32> to vector<8x128xf32>
    %350 = arith.mulf %337, %349 : vector<8x128xf32>
    %351 = arith.addf %348, %350 : vector<8x128xf32>
    %352 = math.tanh %351 : vector<8x128xf32>
    %cst_116 = arith.constant 1.000000e+00 : f32
    %353 = vector.broadcast %cst_116 : f32 to vector<8x128xf32>
    %354 = arith.subf %353, %347 : vector<8x128xf32>
    %355 = arith.mulf %354, %352 : vector<8x128xf32>
    %356 = arith.mulf %347, %283 : vector<8x128xf32>
    %357 = arith.addf %355, %356 : vector<8x128xf32>
    %c0_117 = arith.constant 0 : index
    %c0_118 = arith.constant 0 : index
    %358 = vector.load %arg8[%c0_117, %c0_118] : memref<128x384xf32, #tpu.memory_space<vmem>>, vector<128x384xf32>
    %cst_119 = arith.constant dense<0.000000e+00> : vector<8x384xf32>
    %359 = tpu.matmul %357, %358, %cst_119 {dimension_numbers = #tpu.dot_dimension_numbers<[1], [0], [0], [1], [0, 0, 1, 1], [], []>} : vector<8x128xf32>, vector<128x384xf32>, vector<8x384xf32> -> vector<8x384xf32>
    %360 = arith.addf %359, %18 : vector<8x384xf32>
    %361 = vector.extract_strided_slice %360 {offsets = [0, 0], sizes = [8, 128], strides = [1, 1]} : vector<8x384xf32> to vector<8x128xf32>
    %362 = vector.extract_strided_slice %323 {offsets = [0, 0], sizes = [8, 128], strides = [1, 1]} : vector<8x384xf32> to vector<8x128xf32>
    %363 = arith.addf %361, %362 : vector<8x128xf32>
    %cst_120 = arith.constant 5.000000e-01 : f32
    %364 = vector.broadcast %cst_120 : f32 to vector<8x128xf32>
    %365 = arith.mulf %364, %363 : vector<8x128xf32>
    %366 = math.tanh %365 : vector<8x128xf32>
    %cst_121 = arith.constant 1.000000e+00 : f32
    %367 = vector.broadcast %cst_121 : f32 to vector<8x128xf32>
    %368 = arith.addf %366, %367 : vector<8x128xf32>
    %cst_122 = arith.constant 5.000000e-01 : f32
    %369 = vector.broadcast %cst_122 : f32 to vector<8x128xf32>
    %370 = arith.mulf %369, %368 : vector<8x128xf32>
    %371 = vector.extract_strided_slice %360 {offsets = [0, 128], sizes = [8, 128], strides = [1, 1]} : vector<8x384xf32> to vector<8x128xf32>
    %372 = vector.extract_strided_slice %323 {offsets = [0, 128], sizes = [8, 128], strides = [1, 1]} : vector<8x384xf32> to vector<8x128xf32>
    %373 = arith.addf %371, %372 : vector<8x128xf32>
    %cst_123 = arith.constant 5.000000e-01 : f32
    %374 = vector.broadcast %cst_123 : f32 to vector<8x128xf32>
    %375 = arith.mulf %374, %373 : vector<8x128xf32>
    %376 = math.tanh %375 : vector<8x128xf32>
    %cst_124 = arith.constant 1.000000e+00 : f32
    %377 = vector.broadcast %cst_124 : f32 to vector<8x128xf32>
    %378 = arith.addf %376, %377 : vector<8x128xf32>
    %cst_125 = arith.constant 5.000000e-01 : f32
    %379 = vector.broadcast %cst_125 : f32 to vector<8x128xf32>
    %380 = arith.mulf %379, %378 : vector<8x128xf32>
    %381 = vector.extract_strided_slice %360 {offsets = [0, 256], sizes = [8, 128], strides = [1, 1]} : vector<8x384xf32> to vector<8x128xf32>
    %382 = vector.extract_strided_slice %323 {offsets = [0, 256], sizes = [8, 128], strides = [1, 1]} : vector<8x384xf32> to vector<8x128xf32>
    %383 = arith.mulf %370, %382 : vector<8x128xf32>
    %384 = arith.addf %381, %383 : vector<8x128xf32>
    %385 = math.tanh %384 : vector<8x128xf32>
    %cst_126 = arith.constant 1.000000e+00 : f32
    %386 = vector.broadcast %cst_126 : f32 to vector<8x128xf32>
    %387 = arith.subf %386, %380 : vector<8x128xf32>
    %388 = arith.mulf %387, %385 : vector<8x128xf32>
    %389 = arith.mulf %380, %316 : vector<8x128xf32>
    %390 = arith.addf %388, %389 : vector<8x128xf32>
    %c5_i32 = arith.constant 5 : i32
    %391 = tpu.concatenate %357, %390 in 0 : vector<8x128xf32>, vector<8x128xf32> -> vector<16x128xf32>
    %c0_127 = arith.constant 0 : index
    %c0_128 = arith.constant 0 : index
    %392 = vector.load %arg5[%c0_127, %c0_128] : memref<128x768xf32, #tpu.memory_space<vmem>>, vector<128x768xf32>
    %cst_129 = arith.constant dense<0.000000e+00> : vector<16x768xf32>
    %393 = tpu.matmul %391, %392, %cst_129 {dimension_numbers = #tpu.dot_dimension_numbers<[1], [0], [0], [1], [0, 0, 1, 1], [], []>} : vector<16x128xf32>, vector<128x768xf32>, vector<16x768xf32> -> vector<16x768xf32>
    %394 = vector.extract_strided_slice %393 {offsets = [0, 0], sizes = [8, 384], strides = [1, 1]} : vector<16x768xf32> to vector<8x384xf32>
    %395 = arith.addf %394, %12 : vector<8x384xf32>
    %396 = vector.extract_strided_slice %393 {offsets = [8, 384], sizes = [8, 384], strides = [1, 1]} : vector<16x768xf32> to vector<8x384xf32>
    %397 = arith.addf %396, %15 : vector<8x384xf32>
    %c8_i32_130 = arith.constant 8 : i32
    %398 = arith.muli %c5_i32, %c8_i32_130 : i32
    %399 = tpu.assume_multiple %398, 8 : i32
    %400 = arith.index_cast %399 : i32 to index
    %c0_131 = arith.constant 0 : index
    %401 = vector.load %arg13[%400, %c0_131] : memref<64x384xf32, #tpu.memory_space<vmem>>, vector<8x384xf32>
    %402 = vector.extract_strided_slice %401 {offsets = [0, 0], sizes = [8, 128], strides = [1, 1]} : vector<8x384xf32> to vector<8x128xf32>
    %403 = vector.extract_strided_slice %395 {offsets = [0, 0], sizes = [8, 128], strides = [1, 1]} : vector<8x384xf32> to vector<8x128xf32>
    %404 = arith.addf %402, %403 : vector<8x128xf32>
    %cst_132 = arith.constant 5.000000e-01 : f32
    %405 = vector.broadcast %cst_132 : f32 to vector<8x128xf32>
    %406 = arith.mulf %405, %404 : vector<8x128xf32>
    %407 = math.tanh %406 : vector<8x128xf32>
    %cst_133 = arith.constant 1.000000e+00 : f32
    %408 = vector.broadcast %cst_133 : f32 to vector<8x128xf32>
    %409 = arith.addf %407, %408 : vector<8x128xf32>
    %cst_134 = arith.constant 5.000000e-01 : f32
    %410 = vector.broadcast %cst_134 : f32 to vector<8x128xf32>
    %411 = arith.mulf %410, %409 : vector<8x128xf32>
    %412 = vector.extract_strided_slice %401 {offsets = [0, 128], sizes = [8, 128], strides = [1, 1]} : vector<8x384xf32> to vector<8x128xf32>
    %413 = vector.extract_strided_slice %395 {offsets = [0, 128], sizes = [8, 128], strides = [1, 1]} : vector<8x384xf32> to vector<8x128xf32>
    %414 = arith.addf %412, %413 : vector<8x128xf32>
    %cst_135 = arith.constant 5.000000e-01 : f32
    %415 = vector.broadcast %cst_135 : f32 to vector<8x128xf32>
    %416 = arith.mulf %415, %414 : vector<8x128xf32>
    %417 = math.tanh %416 : vector<8x128xf32>
    %cst_136 = arith.constant 1.000000e+00 : f32
    %418 = vector.broadcast %cst_136 : f32 to vector<8x128xf32>
    %419 = arith.addf %417, %418 : vector<8x128xf32>
    %cst_137 = arith.constant 5.000000e-01 : f32
    %420 = vector.broadcast %cst_137 : f32 to vector<8x128xf32>
    %421 = arith.mulf %420, %419 : vector<8x128xf32>
    %422 = vector.extract_strided_slice %401 {offsets = [0, 256], sizes = [8, 128], strides = [1, 1]} : vector<8x384xf32> to vector<8x128xf32>
    %423 = vector.extract_strided_slice %395 {offsets = [0, 256], sizes = [8, 128], strides = [1, 1]} : vector<8x384xf32> to vector<8x128xf32>
    %424 = arith.mulf %411, %423 : vector<8x128xf32>
    %425 = arith.addf %422, %424 : vector<8x128xf32>
    %426 = math.tanh %425 : vector<8x128xf32>
    %cst_138 = arith.constant 1.000000e+00 : f32
    %427 = vector.broadcast %cst_138 : f32 to vector<8x128xf32>
    %428 = arith.subf %427, %421 : vector<8x128xf32>
    %429 = arith.mulf %428, %426 : vector<8x128xf32>
    %430 = arith.mulf %421, %357 : vector<8x128xf32>
    %431 = arith.addf %429, %430 : vector<8x128xf32>
    %c0_139 = arith.constant 0 : index
    %c0_140 = arith.constant 0 : index
    %432 = vector.load %arg8[%c0_139, %c0_140] : memref<128x384xf32, #tpu.memory_space<vmem>>, vector<128x384xf32>
    %cst_141 = arith.constant dense<0.000000e+00> : vector<8x384xf32>
    %433 = tpu.matmul %431, %432, %cst_141 {dimension_numbers = #tpu.dot_dimension_numbers<[1], [0], [0], [1], [0, 0, 1, 1], [], []>} : vector<8x128xf32>, vector<128x384xf32>, vector<8x384xf32> -> vector<8x384xf32>
    %434 = arith.addf %433, %18 : vector<8x384xf32>
    %435 = vector.extract_strided_slice %434 {offsets = [0, 0], sizes = [8, 128], strides = [1, 1]} : vector<8x384xf32> to vector<8x128xf32>
    %436 = vector.extract_strided_slice %397 {offsets = [0, 0], sizes = [8, 128], strides = [1, 1]} : vector<8x384xf32> to vector<8x128xf32>
    %437 = arith.addf %435, %436 : vector<8x128xf32>
    %cst_142 = arith.constant 5.000000e-01 : f32
    %438 = vector.broadcast %cst_142 : f32 to vector<8x128xf32>
    %439 = arith.mulf %438, %437 : vector<8x128xf32>
    %440 = math.tanh %439 : vector<8x128xf32>
    %cst_143 = arith.constant 1.000000e+00 : f32
    %441 = vector.broadcast %cst_143 : f32 to vector<8x128xf32>
    %442 = arith.addf %440, %441 : vector<8x128xf32>
    %cst_144 = arith.constant 5.000000e-01 : f32
    %443 = vector.broadcast %cst_144 : f32 to vector<8x128xf32>
    %444 = arith.mulf %443, %442 : vector<8x128xf32>
    %445 = vector.extract_strided_slice %434 {offsets = [0, 128], sizes = [8, 128], strides = [1, 1]} : vector<8x384xf32> to vector<8x128xf32>
    %446 = vector.extract_strided_slice %397 {offsets = [0, 128], sizes = [8, 128], strides = [1, 1]} : vector<8x384xf32> to vector<8x128xf32>
    %447 = arith.addf %445, %446 : vector<8x128xf32>
    %cst_145 = arith.constant 5.000000e-01 : f32
    %448 = vector.broadcast %cst_145 : f32 to vector<8x128xf32>
    %449 = arith.mulf %448, %447 : vector<8x128xf32>
    %450 = math.tanh %449 : vector<8x128xf32>
    %cst_146 = arith.constant 1.000000e+00 : f32
    %451 = vector.broadcast %cst_146 : f32 to vector<8x128xf32>
    %452 = arith.addf %450, %451 : vector<8x128xf32>
    %cst_147 = arith.constant 5.000000e-01 : f32
    %453 = vector.broadcast %cst_147 : f32 to vector<8x128xf32>
    %454 = arith.mulf %453, %452 : vector<8x128xf32>
    %455 = vector.extract_strided_slice %434 {offsets = [0, 256], sizes = [8, 128], strides = [1, 1]} : vector<8x384xf32> to vector<8x128xf32>
    %456 = vector.extract_strided_slice %397 {offsets = [0, 256], sizes = [8, 128], strides = [1, 1]} : vector<8x384xf32> to vector<8x128xf32>
    %457 = arith.mulf %444, %456 : vector<8x128xf32>
    %458 = arith.addf %455, %457 : vector<8x128xf32>
    %459 = math.tanh %458 : vector<8x128xf32>
    %cst_148 = arith.constant 1.000000e+00 : f32
    %460 = vector.broadcast %cst_148 : f32 to vector<8x128xf32>
    %461 = arith.subf %460, %454 : vector<8x128xf32>
    %462 = arith.mulf %461, %459 : vector<8x128xf32>
    %463 = arith.mulf %454, %390 : vector<8x128xf32>
    %464 = arith.addf %462, %463 : vector<8x128xf32>
    %c6_i32 = arith.constant 6 : i32
    %465 = tpu.concatenate %431, %464 in 0 : vector<8x128xf32>, vector<8x128xf32> -> vector<16x128xf32>
    %c0_149 = arith.constant 0 : index
    %c0_150 = arith.constant 0 : index
    %466 = vector.load %arg5[%c0_149, %c0_150] : memref<128x768xf32, #tpu.memory_space<vmem>>, vector<128x768xf32>
    %cst_151 = arith.constant dense<0.000000e+00> : vector<16x768xf32>
    %467 = tpu.matmul %465, %466, %cst_151 {dimension_numbers = #tpu.dot_dimension_numbers<[1], [0], [0], [1], [0, 0, 1, 1], [], []>} : vector<16x128xf32>, vector<128x768xf32>, vector<16x768xf32> -> vector<16x768xf32>
    %468 = vector.extract_strided_slice %467 {offsets = [0, 0], sizes = [8, 384], strides = [1, 1]} : vector<16x768xf32> to vector<8x384xf32>
    %469 = arith.addf %468, %12 : vector<8x384xf32>
    %470 = vector.extract_strided_slice %467 {offsets = [8, 384], sizes = [8, 384], strides = [1, 1]} : vector<16x768xf32> to vector<8x384xf32>
    %471 = arith.addf %470, %15 : vector<8x384xf32>
    %c8_i32_152 = arith.constant 8 : i32
    %472 = arith.muli %c6_i32, %c8_i32_152 : i32
    %473 = tpu.assume_multiple %472, 8 : i32
    %474 = arith.index_cast %473 : i32 to index
    %c0_153 = arith.constant 0 : index
    %475 = vector.load %arg13[%474, %c0_153] : memref<64x384xf32, #tpu.memory_space<vmem>>, vector<8x384xf32>
    %476 = vector.extract_strided_slice %475 {offsets = [0, 0], sizes = [8, 128], strides = [1, 1]} : vector<8x384xf32> to vector<8x128xf32>
    %477 = vector.extract_strided_slice %469 {offsets = [0, 0], sizes = [8, 128], strides = [1, 1]} : vector<8x384xf32> to vector<8x128xf32>
    %478 = arith.addf %476, %477 : vector<8x128xf32>
    %cst_154 = arith.constant 5.000000e-01 : f32
    %479 = vector.broadcast %cst_154 : f32 to vector<8x128xf32>
    %480 = arith.mulf %479, %478 : vector<8x128xf32>
    %481 = math.tanh %480 : vector<8x128xf32>
    %cst_155 = arith.constant 1.000000e+00 : f32
    %482 = vector.broadcast %cst_155 : f32 to vector<8x128xf32>
    %483 = arith.addf %481, %482 : vector<8x128xf32>
    %cst_156 = arith.constant 5.000000e-01 : f32
    %484 = vector.broadcast %cst_156 : f32 to vector<8x128xf32>
    %485 = arith.mulf %484, %483 : vector<8x128xf32>
    %486 = vector.extract_strided_slice %475 {offsets = [0, 128], sizes = [8, 128], strides = [1, 1]} : vector<8x384xf32> to vector<8x128xf32>
    %487 = vector.extract_strided_slice %469 {offsets = [0, 128], sizes = [8, 128], strides = [1, 1]} : vector<8x384xf32> to vector<8x128xf32>
    %488 = arith.addf %486, %487 : vector<8x128xf32>
    %cst_157 = arith.constant 5.000000e-01 : f32
    %489 = vector.broadcast %cst_157 : f32 to vector<8x128xf32>
    %490 = arith.mulf %489, %488 : vector<8x128xf32>
    %491 = math.tanh %490 : vector<8x128xf32>
    %cst_158 = arith.constant 1.000000e+00 : f32
    %492 = vector.broadcast %cst_158 : f32 to vector<8x128xf32>
    %493 = arith.addf %491, %492 : vector<8x128xf32>
    %cst_159 = arith.constant 5.000000e-01 : f32
    %494 = vector.broadcast %cst_159 : f32 to vector<8x128xf32>
    %495 = arith.mulf %494, %493 : vector<8x128xf32>
    %496 = vector.extract_strided_slice %475 {offsets = [0, 256], sizes = [8, 128], strides = [1, 1]} : vector<8x384xf32> to vector<8x128xf32>
    %497 = vector.extract_strided_slice %469 {offsets = [0, 256], sizes = [8, 128], strides = [1, 1]} : vector<8x384xf32> to vector<8x128xf32>
    %498 = arith.mulf %485, %497 : vector<8x128xf32>
    %499 = arith.addf %496, %498 : vector<8x128xf32>
    %500 = math.tanh %499 : vector<8x128xf32>
    %cst_160 = arith.constant 1.000000e+00 : f32
    %501 = vector.broadcast %cst_160 : f32 to vector<8x128xf32>
    %502 = arith.subf %501, %495 : vector<8x128xf32>
    %503 = arith.mulf %502, %500 : vector<8x128xf32>
    %504 = arith.mulf %495, %431 : vector<8x128xf32>
    %505 = arith.addf %503, %504 : vector<8x128xf32>
    %c0_161 = arith.constant 0 : index
    %c0_162 = arith.constant 0 : index
    %506 = vector.load %arg8[%c0_161, %c0_162] : memref<128x384xf32, #tpu.memory_space<vmem>>, vector<128x384xf32>
    %cst_163 = arith.constant dense<0.000000e+00> : vector<8x384xf32>
    %507 = tpu.matmul %505, %506, %cst_163 {dimension_numbers = #tpu.dot_dimension_numbers<[1], [0], [0], [1], [0, 0, 1, 1], [], []>} : vector<8x128xf32>, vector<128x384xf32>, vector<8x384xf32> -> vector<8x384xf32>
    %508 = arith.addf %507, %18 : vector<8x384xf32>
    %509 = vector.extract_strided_slice %508 {offsets = [0, 0], sizes = [8, 128], strides = [1, 1]} : vector<8x384xf32> to vector<8x128xf32>
    %510 = vector.extract_strided_slice %471 {offsets = [0, 0], sizes = [8, 128], strides = [1, 1]} : vector<8x384xf32> to vector<8x128xf32>
    %511 = arith.addf %509, %510 : vector<8x128xf32>
    %cst_164 = arith.constant 5.000000e-01 : f32
    %512 = vector.broadcast %cst_164 : f32 to vector<8x128xf32>
    %513 = arith.mulf %512, %511 : vector<8x128xf32>
    %514 = math.tanh %513 : vector<8x128xf32>
    %cst_165 = arith.constant 1.000000e+00 : f32
    %515 = vector.broadcast %cst_165 : f32 to vector<8x128xf32>
    %516 = arith.addf %514, %515 : vector<8x128xf32>
    %cst_166 = arith.constant 5.000000e-01 : f32
    %517 = vector.broadcast %cst_166 : f32 to vector<8x128xf32>
    %518 = arith.mulf %517, %516 : vector<8x128xf32>
    %519 = vector.extract_strided_slice %508 {offsets = [0, 128], sizes = [8, 128], strides = [1, 1]} : vector<8x384xf32> to vector<8x128xf32>
    %520 = vector.extract_strided_slice %471 {offsets = [0, 128], sizes = [8, 128], strides = [1, 1]} : vector<8x384xf32> to vector<8x128xf32>
    %521 = arith.addf %519, %520 : vector<8x128xf32>
    %cst_167 = arith.constant 5.000000e-01 : f32
    %522 = vector.broadcast %cst_167 : f32 to vector<8x128xf32>
    %523 = arith.mulf %522, %521 : vector<8x128xf32>
    %524 = math.tanh %523 : vector<8x128xf32>
    %cst_168 = arith.constant 1.000000e+00 : f32
    %525 = vector.broadcast %cst_168 : f32 to vector<8x128xf32>
    %526 = arith.addf %524, %525 : vector<8x128xf32>
    %cst_169 = arith.constant 5.000000e-01 : f32
    %527 = vector.broadcast %cst_169 : f32 to vector<8x128xf32>
    %528 = arith.mulf %527, %526 : vector<8x128xf32>
    %529 = vector.extract_strided_slice %508 {offsets = [0, 256], sizes = [8, 128], strides = [1, 1]} : vector<8x384xf32> to vector<8x128xf32>
    %530 = vector.extract_strided_slice %471 {offsets = [0, 256], sizes = [8, 128], strides = [1, 1]} : vector<8x384xf32> to vector<8x128xf32>
    %531 = arith.mulf %518, %530 : vector<8x128xf32>
    %532 = arith.addf %529, %531 : vector<8x128xf32>
    %533 = math.tanh %532 : vector<8x128xf32>
    %cst_170 = arith.constant 1.000000e+00 : f32
    %534 = vector.broadcast %cst_170 : f32 to vector<8x128xf32>
    %535 = arith.subf %534, %528 : vector<8x128xf32>
    %536 = arith.mulf %535, %533 : vector<8x128xf32>
    %537 = arith.mulf %528, %464 : vector<8x128xf32>
    %538 = arith.addf %536, %537 : vector<8x128xf32>
    %c7_i32 = arith.constant 7 : i32
    %539 = tpu.concatenate %505, %538 in 0 : vector<8x128xf32>, vector<8x128xf32> -> vector<16x128xf32>
    %c0_171 = arith.constant 0 : index
    %c0_172 = arith.constant 0 : index
    %540 = vector.load %arg5[%c0_171, %c0_172] : memref<128x768xf32, #tpu.memory_space<vmem>>, vector<128x768xf32>
    %cst_173 = arith.constant dense<0.000000e+00> : vector<16x768xf32>
    %541 = tpu.matmul %539, %540, %cst_173 {dimension_numbers = #tpu.dot_dimension_numbers<[1], [0], [0], [1], [0, 0, 1, 1], [], []>} : vector<16x128xf32>, vector<128x768xf32>, vector<16x768xf32> -> vector<16x768xf32>
    %542 = vector.extract_strided_slice %541 {offsets = [0, 0], sizes = [8, 384], strides = [1, 1]} : vector<16x768xf32> to vector<8x384xf32>
    %543 = arith.addf %542, %12 : vector<8x384xf32>
    %544 = vector.extract_strided_slice %541 {offsets = [8, 384], sizes = [8, 384], strides = [1, 1]} : vector<16x768xf32> to vector<8x384xf32>
    %545 = arith.addf %544, %15 : vector<8x384xf32>
    %c8_i32_174 = arith.constant 8 : i32
    %546 = arith.muli %c7_i32, %c8_i32_174 : i32
    %547 = tpu.assume_multiple %546, 8 : i32
    %548 = arith.index_cast %547 : i32 to index
    %c0_175 = arith.constant 0 : index
    %549 = vector.load %arg13[%548, %c0_175] : memref<64x384xf32, #tpu.memory_space<vmem>>, vector<8x384xf32>
    %550 = vector.extract_strided_slice %549 {offsets = [0, 0], sizes = [8, 128], strides = [1, 1]} : vector<8x384xf32> to vector<8x128xf32>
    %551 = vector.extract_strided_slice %543 {offsets = [0, 0], sizes = [8, 128], strides = [1, 1]} : vector<8x384xf32> to vector<8x128xf32>
    %552 = arith.addf %550, %551 : vector<8x128xf32>
    %cst_176 = arith.constant 5.000000e-01 : f32
    %553 = vector.broadcast %cst_176 : f32 to vector<8x128xf32>
    %554 = arith.mulf %553, %552 : vector<8x128xf32>
    %555 = math.tanh %554 : vector<8x128xf32>
    %cst_177 = arith.constant 1.000000e+00 : f32
    %556 = vector.broadcast %cst_177 : f32 to vector<8x128xf32>
    %557 = arith.addf %555, %556 : vector<8x128xf32>
    %cst_178 = arith.constant 5.000000e-01 : f32
    %558 = vector.broadcast %cst_178 : f32 to vector<8x128xf32>
    %559 = arith.mulf %558, %557 : vector<8x128xf32>
    %560 = vector.extract_strided_slice %549 {offsets = [0, 128], sizes = [8, 128], strides = [1, 1]} : vector<8x384xf32> to vector<8x128xf32>
    %561 = vector.extract_strided_slice %543 {offsets = [0, 128], sizes = [8, 128], strides = [1, 1]} : vector<8x384xf32> to vector<8x128xf32>
    %562 = arith.addf %560, %561 : vector<8x128xf32>
    %cst_179 = arith.constant 5.000000e-01 : f32
    %563 = vector.broadcast %cst_179 : f32 to vector<8x128xf32>
    %564 = arith.mulf %563, %562 : vector<8x128xf32>
    %565 = math.tanh %564 : vector<8x128xf32>
    %cst_180 = arith.constant 1.000000e+00 : f32
    %566 = vector.broadcast %cst_180 : f32 to vector<8x128xf32>
    %567 = arith.addf %565, %566 : vector<8x128xf32>
    %cst_181 = arith.constant 5.000000e-01 : f32
    %568 = vector.broadcast %cst_181 : f32 to vector<8x128xf32>
    %569 = arith.mulf %568, %567 : vector<8x128xf32>
    %570 = vector.extract_strided_slice %549 {offsets = [0, 256], sizes = [8, 128], strides = [1, 1]} : vector<8x384xf32> to vector<8x128xf32>
    %571 = vector.extract_strided_slice %543 {offsets = [0, 256], sizes = [8, 128], strides = [1, 1]} : vector<8x384xf32> to vector<8x128xf32>
    %572 = arith.mulf %559, %571 : vector<8x128xf32>
    %573 = arith.addf %570, %572 : vector<8x128xf32>
    %574 = math.tanh %573 : vector<8x128xf32>
    %cst_182 = arith.constant 1.000000e+00 : f32
    %575 = vector.broadcast %cst_182 : f32 to vector<8x128xf32>
    %576 = arith.subf %575, %569 : vector<8x128xf32>
    %577 = arith.mulf %576, %574 : vector<8x128xf32>
    %578 = arith.mulf %569, %505 : vector<8x128xf32>
    %579 = arith.addf %577, %578 : vector<8x128xf32>
    %c0_183 = arith.constant 0 : index
    %c0_184 = arith.constant 0 : index
    %580 = vector.load %arg8[%c0_183, %c0_184] : memref<128x384xf32, #tpu.memory_space<vmem>>, vector<128x384xf32>
    %cst_185 = arith.constant dense<0.000000e+00> : vector<8x384xf32>
    %581 = tpu.matmul %579, %580, %cst_185 {dimension_numbers = #tpu.dot_dimension_numbers<[1], [0], [0], [1], [0, 0, 1, 1], [], []>} : vector<8x128xf32>, vector<128x384xf32>, vector<8x384xf32> -> vector<8x384xf32>
    %582 = arith.addf %581, %18 : vector<8x384xf32>
    %583 = vector.extract_strided_slice %582 {offsets = [0, 0], sizes = [8, 128], strides = [1, 1]} : vector<8x384xf32> to vector<8x128xf32>
    %584 = vector.extract_strided_slice %545 {offsets = [0, 0], sizes = [8, 128], strides = [1, 1]} : vector<8x384xf32> to vector<8x128xf32>
    %585 = arith.addf %583, %584 : vector<8x128xf32>
    %cst_186 = arith.constant 5.000000e-01 : f32
    %586 = vector.broadcast %cst_186 : f32 to vector<8x128xf32>
    %587 = arith.mulf %586, %585 : vector<8x128xf32>
    %588 = math.tanh %587 : vector<8x128xf32>
    %cst_187 = arith.constant 1.000000e+00 : f32
    %589 = vector.broadcast %cst_187 : f32 to vector<8x128xf32>
    %590 = arith.addf %588, %589 : vector<8x128xf32>
    %cst_188 = arith.constant 5.000000e-01 : f32
    %591 = vector.broadcast %cst_188 : f32 to vector<8x128xf32>
    %592 = arith.mulf %591, %590 : vector<8x128xf32>
    %593 = vector.extract_strided_slice %582 {offsets = [0, 128], sizes = [8, 128], strides = [1, 1]} : vector<8x384xf32> to vector<8x128xf32>
    %594 = vector.extract_strided_slice %545 {offsets = [0, 128], sizes = [8, 128], strides = [1, 1]} : vector<8x384xf32> to vector<8x128xf32>
    %595 = arith.addf %593, %594 : vector<8x128xf32>
    %cst_189 = arith.constant 5.000000e-01 : f32
    %596 = vector.broadcast %cst_189 : f32 to vector<8x128xf32>
    %597 = arith.mulf %596, %595 : vector<8x128xf32>
    %598 = math.tanh %597 : vector<8x128xf32>
    %cst_190 = arith.constant 1.000000e+00 : f32
    %599 = vector.broadcast %cst_190 : f32 to vector<8x128xf32>
    %600 = arith.addf %598, %599 : vector<8x128xf32>
    %cst_191 = arith.constant 5.000000e-01 : f32
    %601 = vector.broadcast %cst_191 : f32 to vector<8x128xf32>
    %602 = arith.mulf %601, %600 : vector<8x128xf32>
    %603 = vector.extract_strided_slice %582 {offsets = [0, 256], sizes = [8, 128], strides = [1, 1]} : vector<8x384xf32> to vector<8x128xf32>
    %604 = vector.extract_strided_slice %545 {offsets = [0, 256], sizes = [8, 128], strides = [1, 1]} : vector<8x384xf32> to vector<8x128xf32>
    %605 = arith.mulf %592, %604 : vector<8x128xf32>
    %606 = arith.addf %603, %605 : vector<8x128xf32>
    %607 = math.tanh %606 : vector<8x128xf32>
    %cst_192 = arith.constant 1.000000e+00 : f32
    %608 = vector.broadcast %cst_192 : f32 to vector<8x128xf32>
    %609 = arith.subf %608, %602 : vector<8x128xf32>
    %610 = arith.mulf %609, %607 : vector<8x128xf32>
    %611 = arith.mulf %602, %538 : vector<8x128xf32>
    %612 = arith.addf %610, %611 : vector<8x128xf32>
    %c8_i32_193 = arith.constant 8 : i32
    %c0_194 = arith.constant 0 : index
    %c0_195 = arith.constant 0 : index
    %613 = vector.load %arg14[%c0_194, %c0_195] : memref<16x128xf32, #tpu.memory_space<vmem>>, vector<8x128xf32>
    tpu.vector_store %arg14[%c0_194, %c0_195], %579 {strides = array<i32>} : memref<16x128xf32, #tpu.memory_space<vmem>>, vector<8x128xf32>,
    %c8_196 = arith.constant 8 : index
    %c0_197 = arith.constant 0 : index
    %614 = vector.load %arg14[%c8_196, %c0_197] : memref<16x128xf32, #tpu.memory_space<vmem>>, vector<8x128xf32>
    tpu.vector_store %arg14[%c8_196, %c0_197], %612 {strides = array<i32>} : memref<16x128xf32, #tpu.memory_space<vmem>>, vector<8x128xf32>,
    %c0_i32_198 = arith.constant 0 : i32
    %615 = arith.cmpi eq, %arg1, %c0_i32_198 : i32
    %616 = arith.extui %615 : i1 to i32
    %c0_i32_199 = arith.constant 0 : i32
    %617 = arith.cmpi ne, %616, %c0_i32_199 : i32
    scf.if %617 {
      %c0_200 = arith.constant 0 : index
      %c0_201 = arith.constant 0 : index
      %618 = vector.load %arg10[%c0_200, %c0_201] : memref<128x128xf32, #tpu.memory_space<vmem>>, vector<128x128xf32>
      %cst_202 = arith.constant dense<0.000000e+00> : vector<8x128xf32>
      %619 = tpu.matmul %612, %618, %cst_202 {dimension_numbers = #tpu.dot_dimension_numbers<[1], [0], [0], [1], [0, 0, 1, 1], [], []>} : vector<8x128xf32>, vector<128x128xf32>, vector<8x128xf32> -> vector<8x128xf32>
      %c0_203 = arith.constant 0 : index
      %c0_204 = arith.constant 0 : index
      %620 = vector.load %arg11[%c0_203, %c0_204] : memref<1x128xf32, #tpu.memory_space<vmem>>, vector<1x128xf32>
      %621 = vector.broadcast %620 : vector<1x128xf32> to vector<8x128xf32>
      %622 = arith.addf %619, %621 : vector<8x128xf32>
      %c0_205 = arith.constant 0 : index
      %c0_206 = arith.constant 0 : index
      %623 = vector.load %arg12[%c0_205, %c0_206] : memref<8x128xf32, #tpu.memory_space<vmem>>, vector<8x128xf32>
      tpu.vector_store %arg12[%c0_205, %c0_206], %622 {strides = array<i32>} : memref<8x128xf32, #tpu.memory_space<vmem>>, vector<8x128xf32>,
    } else {
    }
    return
  }
  func.func @transform_0(%arg0: i32, %arg1: i32) -> (i32, i32) {
    %c1_i32 = arith.constant 1 : i32
    %0 = arith.muli %arg0, %c1_i32 : i32
    %1 = arith.addi %0, %arg1 : i32
    %c0_i32 = arith.constant 0 : i32
    %c0_i32_0 = arith.constant 0 : i32
    return %1, %c0_i32 : i32, i32
  }
  func.func @transform_1(%arg0: i32, %arg1: i32) -> (i32, i32) {
    %c0_i32 = arith.constant 0 : i32
    %c0_i32_0 = arith.constant 0 : i32
    %c0_i32_1 = arith.constant 0 : i32
    return %c0_i32, %c0_i32_0 : i32, i32
  }
  func.func @transform_2(%arg0: i32, %arg1: i32) -> (i32, i32) {
    %c0_i32 = arith.constant 0 : i32
    %c0_i32_0 = arith.constant 0 : i32
    %c0_i32_1 = arith.constant 0 : i32
    return %c0_i32, %c0_i32_0 : i32, i32
  }
  func.func @transform_3(%arg0: i32, %arg1: i32) -> (i32, i32) {
    %c0_i32 = arith.constant 0 : i32
    %c0_i32_0 = arith.constant 0 : i32
    %c0_i32_1 = arith.constant 0 : i32
    return %c0_i32, %c0_i32_0 : i32, i32
  }
  func.func @transform_4(%arg0: i32, %arg1: i32) -> (i32, i32) {
    %c0_i32 = arith.constant 0 : i32
    %c0_i32_0 = arith.constant 0 : i32
    %c0_i32_1 = arith.constant 0 : i32
    return %c0_i32, %c0_i32_0 : i32, i32
  }
  func.func @transform_5(%arg0: i32, %arg1: i32) -> (i32, i32) {
    %c0_i32 = arith.constant 0 : i32
    %c0_i32_0 = arith.constant 0 : i32
    %c0_i32_1 = arith.constant 0 : i32
    return %c0_i32, %c0_i32_0 : i32, i32
  }
  func.func @transform_6(%arg0: i32, %arg1: i32) -> (i32, i32) {
    %c0_i32 = arith.constant 0 : i32
    %c0_i32_0 = arith.constant 0 : i32
    %c0_i32_1 = arith.constant 0 : i32
    return %c0_i32, %c0_i32_0 : i32, i32
  }
  func.func @transform_7(%arg0: i32, %arg1: i32) -> (i32, i32) {
    %c0_i32 = arith.constant 0 : i32
    %c0_i32_0 = arith.constant 0 : i32
    %c0_i32_1 = arith.constant 0 : i32
    return %c0_i32, %c0_i32_0 : i32, i32
  }
  func.func @transform_8(%arg0: i32, %arg1: i32) -> (i32, i32) {
    %c0_i32 = arith.constant 0 : i32
    %c0_i32_0 = arith.constant 0 : i32
    %c0_i32_1 = arith.constant 0 : i32
    return %c0_i32, %c0_i32_0 : i32, i32
  }
  func.func @transform_9(%arg0: i32, %arg1: i32) -> (i32, i32) {
    %c0_i32 = arith.constant 0 : i32
    %c0_i32_0 = arith.constant 0 : i32
    %c0_i32_1 = arith.constant 0 : i32
    return %c0_i32, %c0_i32_0 : i32, i32
  }
  func.func @transform_10(%arg0: i32, %arg1: i32) -> (i32, i32) {
    %c0_i32 = arith.constant 0 : i32
    %c0_i32_0 = arith.constant 0 : i32
    return %arg0, %c0_i32 : i32, i32
  }
}

</mosaic_0001>

<llo_original>
// kernel: tpu_custom_call.1
$region0: #{tpu_custom_call.1}
  #allocation0 [shape = 'u32[]', space=smem, size = 0x4, offset = 0x4, fixed_abs, tag = 'smem constant byte address 0x4 - core index']
  #allocation1 [shape = 'u32[144,128]{1,0:T(1,128)}', space=vmem, size = 0x12000, scoped, tag = 'internal scratch']
  #allocation2 [shape = 'f32[64,384]{1,0:T(8,128)}', space=vmem, size = 0x18000, scoped, tag = 'scratch operand']
  #allocation3 [shape = 'f32[16,128]{1,0:T(8,128)}', space=vmem, size = 0x2000, scoped, tag = 'scratch operand']
  %s0 = inlined_call_operand.vmem [shape: f32[64,6], index: 0, kind: input, shape index: {}]
  %s1 = inlined_call_operand.vmem [shape: f32[6,384], index: 1, kind: input, shape index: {}]
  %s2 = inlined_call_operand.vmem [shape: f32[1,384], index: 2, kind: input, shape index: {}]
  %s3 = inlined_call_operand.hbm [shape: f32[128,768], index: 3, kind: input, shape index: {}]
  %s4 = inlined_call_operand.vmem [shape: f32[1,384], index: 4, kind: input, shape index: {}]
  %s5 = inlined_call_operand.vmem [shape: f32[1,384], index: 5, kind: input, shape index: {}]
  %s6 = inlined_call_operand.hbm [shape: f32[128,384], index: 6, kind: input, shape index: {}]
  %s7 = inlined_call_operand.vmem [shape: f32[1,384], index: 7, kind: input, shape index: {}]
  %s8 = inlined_call_operand.hbm [shape: f32[128,128], index: 8, kind: input, shape index: {}]
  %s9 = inlined_call_operand.vmem [shape: f32[1,128], index: 9, kind: input, shape index: {}]
  %s10 = inlined_call_operand.hbm [shape: f32[8,128], index: 10, kind: output, shape index: {}]
  %s11 = sld [smem:[#allocation0]]
  $region70: #{tpu_custom_call.1} parent=0
    _
  %s13 = ssub.s32 1, %s11
  %s14 = scalar_select 0, %s13, %s11
  $region1: #{tpu_custom_call.1} parent=0
    #allocation4 [shape = 'u8[393216]{0}', space=vmem, size = 0x60000, scoped, tag = 'input window, operand 3, single buffered']
    #allocation5 [shape = 's32[1]{0}', space=sflag, size = 0x4, scoped, tag = 'scoped memory for tpu_custom_call.1']
    #allocation6 [shape = 's32[1]{0}', space=sflag, size = 0x4, scoped, tag = 'scoped memory for tpu_custom_call.1']
    #allocation7 [shape = 'u8[196608]{0}', space=vmem, size = 0x30000, scoped, tag = 'input window, operand 6, single buffered']
    #allocation8 [shape = 's32[1]{0}', space=sflag, size = 0x4, scoped, tag = 'scoped memory for tpu_custom_call.1']
    #allocation9 [shape = 'u8[65536]{0}', space=vmem, size = 0x10000, scoped, tag = 'input window, operand 8, single buffered']
    #allocation10 [shape = 'u8[4096]{0}', space=vmem, size = 0x1000, scoped, tag = 'output window, operand 0, single buffered']
    %15 = vsyncpa [#allocation5], 0
    %16 = vsyncpa [#allocation8], 0
    %17 = vsyncpa [#allocation6], 0
    // Predicated region
    $region2: #{tpu_custom_call.1} parent=1 // pred_check
      _
    $region3: #{tpu_custom_call.1} parent=1 // pred_check_branch
      %19 = sbr.rel (0) target = $region5
    $region4: #{tpu_custom_call.1} parent=1 // pred_region
      %s20 = sadd.s32 0, 0
      %s21 = smul.u32 8, %s20
      %p22 = scmp.lt.s32.totalorder %s21, 7
      %s23 = scalar_select %p22, %s21, 7
      %s24 = smul.addr %s23, 8
      %s25 = scalar_lea.vmem %s0, %s24
      %s26 = sadd.s32 0, 0
      %s27 = smul.u32 8, %s26
    $region5: #{tpu_custom_call.1} parent=1 // pred_fallthru
      _
    // Predicated region
    $region6: #{tpu_custom_call.1} parent=1 // pred_check
      _
    $region7: #{tpu_custom_call.1} parent=1 // pred_check_branch
      %29 = sbr.rel (0) target = $region9
    $region8: #{tpu_custom_call.1} parent=1 // pred_region
      _
    $region9: #{tpu_custom_call.1} parent=1 // pred_fallthru
      _
    // Predicated region
    $region10: #{tpu_custom_call.1} parent=1 // pred_check
      _
    $region11: #{tpu_custom_call.1} parent=1 // pred_check_branch
      %31 = sbr.rel (0) target = $region13
    $region12: #{tpu_custom_call.1} parent=1 // pred_region
      _
    $region13: #{tpu_custom_call.1} parent=1 // pred_fallthru
      _
    // Predicated region
    $region14: #{tpu_custom_call.1} parent=1 // pred_check
      _
    $region15: #{tpu_custom_call.1} parent=1 // pred_check_branch
      %33 = sbr.rel (0) target = $region17
    $region16: #{tpu_custom_call.1} parent=1 // pred_region
      %s35 = ssub.s32 12288, 12288
      %36 = vsyncadd [#allocation5], %s35
      %s37 = sshll.u32 [#allocation4], 4
      %s38 = int_to_ptr.vmem [resolvable:$true] %s37
      %43 = dma.hbm_to_vmem [thread:$0]  %s3, 12288, %s38, [#allocation5], 768, 768, 48
    $region17: #{tpu_custom_call.1} parent=1 // pred_fallthru
      _
    // Predicated region
    $region18: #{tpu_custom_call.1} parent=1 // pred_check
      _
    $region19: #{tpu_custom_call.1} parent=1 // pred_check_branch
      %45 = sbr.rel (0) target = $region21
    $region20: #{tpu_custom_call.1} parent=1 // pred_region
      _
    $region21: #{tpu_custom_call.1} parent=1 // pred_fallthru
      _
    // Predicated region
    $region22: #{tpu_custom_call.1} parent=1 // pred_check
      _
    $region23: #{tpu_custom_call.1} parent=1 // pred_check_branch
      %47 = sbr.rel (0) target = $region25
    $region24: #{tpu_custom_call.1} parent=1 // pred_region
      _
    $region25: #{tpu_custom_call.1} parent=1 // pred_fallthru
      _
    // Predicated region
    $region26: #{tpu_custom_call.1} parent=1 // pred_check
      _
    $region27: #{tpu_custom_call.1} parent=1 // pred_check_branch
      %49 = sbr.rel (0) target = $region29
    $region28: #{tpu_custom_call.1} parent=1 // pred_region
      %s51 = ssub.s32 6144, 6144
      %52 = vsyncadd [#allocation8], %s51
      %s53 = sshll.u32 [#allocation7], 4
      %s54 = int_to_ptr.vmem [resolvable:$true] %s53
      %59 = dma.hbm_to_vmem [thread:$0]  %s6, 6144, %s54, [#allocation8], 384, 384, 24
    $region29: #{tpu_custom_call.1} parent=1 // pred_fallthru
      _
    // Predicated region
    $region30: #{tpu_custom_call.1} parent=1 // pred_check
      _
    $region31: #{tpu_custom_call.1} parent=1 // pred_check_branch
      %61 = sbr.rel (0) target = $region33
    $region32: #{tpu_custom_call.1} parent=1 // pred_region
      _
    $region33: #{tpu_custom_call.1} parent=1 // pred_fallthru
      _
    // Predicated region
    $region34: #{tpu_custom_call.1} parent=1 // pred_check
      _
    $region35: #{tpu_custom_call.1} parent=1 // pred_check_branch
      %63 = sbr.rel (0) target = $region37
    $region36: #{tpu_custom_call.1} parent=1 // pred_region
      %s65 = ssub.s32 2048, 2048
      %66 = vsyncadd [#allocation8], %s65
      %s67 = sshll.u32 [#allocation9], 4
      %s68 = int_to_ptr.vmem [resolvable:$true] %s67
      %73 = dma.hbm_to_vmem [thread:$0]  %s8, 2048, %s68, [#allocation8], 128, 128, 8
    $region37: #{tpu_custom_call.1} parent=1 // pred_fallthru
      _
    // Predicated region
    $region38: #{tpu_custom_call.1} parent=1 // pred_check
      _
    $region39: #{tpu_custom_call.1} parent=1 // pred_check_branch
      %75 = sbr.rel (0) target = $region41
    $region40: #{tpu_custom_call.1} parent=1 // pred_region
      _
    $region41: #{tpu_custom_call.1} parent=1 // pred_fallthru
      _
    // Predicated region
    $region42: #{tpu_custom_call.1} parent=1 // pred_check
      _
    $region43: #{tpu_custom_call.1} parent=1 // pred_check_branch
      %77 = sbr.rel (0) target = $region45
    $region44: #{tpu_custom_call.1} parent=1 // pred_region
      %78 = dma.done [#allocation5], 12288
    $region45: #{tpu_custom_call.1} parent=1 // pred_fallthru
      _
    // Predicated region
    $region46: #{tpu_custom_call.1} parent=1 // pred_check
      _
    $region47: #{tpu_custom_call.1} parent=1 // pred_check_branch
      %80 = sbr.rel (0) target = $region49
    $region48: #{tpu_custom_call.1} parent=1 // pred_region
      %81 = dma.done [#allocation8], 6144
    $region49: #{tpu_custom_call.1} parent=1 // pred_fallthru
      _
    // Predicated region
    $region50: #{tpu_custom_call.1} parent=1 // pred_check
      _
    $region51: #{tpu_custom_call.1} parent=1 // pred_check_branch
      %83 = sbr.rel (0) target = $region53
    $region52: #{tpu_custom_call.1} parent=1 // pred_region
      %84 = dma.done [#allocation8], 2048
    $region53: #{tpu_custom_call.1} parent=1 // pred_fallthru
      _
    %s85 = sadd.s32 0, 0
    %s86 = smul.u32 8, %s85
    %p87 = scmp.lt.s32.totalorder %s86, 7
    %s88 = scalar_select %p87, %s86, 7
    %s89 = smul.addr %s88, 8
    %s90 = scalar_lea.vmem %s0, %s89
    %s91 = sadd.s32 0, 0
    %s92 = smul.u32 8, %s91
    %p93 = scmp.lt.s32.totalorder %s92, 7
    %s94 = scalar_select %p93, %s92, 7
    %s95 = smul.addr %s94, 8
    %s96 = scalar_lea.vmem %s0, %s95
    %s97 = sadd.s32 0, 0
    %s98 = smul.u32 8, %s97
    %p99 = scmp.eq.s32.totalorder 0, 0
    // Predicated region
    $region54: #{tpu_custom_call.1} parent=1 // pred_check
      %p100 = pneg %p99
    $region55: #{tpu_custom_call.1} parent=1 // pred_check_branch
      %102 = sbr.rel (%p100) target = $region57
    $region56: #{tpu_custom_call.1} parent=1 // pred_region
      %103 = vst [vmem:[#allocation3] sm:$0xff] 0.0
      %104 = vst [vmem:[#allocation3 + $0x8] sm:$0xff] 0.0
    $region57: #{tpu_custom_call.1} parent=1 // pred_fallthru
      _
    %v105 = vld [vmem:[%s96] sm:$0xff]
    %v106 = vld [vmem:[%s96 + $0x8] sm:$0xff]
    %v107 = vld [vmem:[%s96 + $0x10] sm:$0xff]
    %v108 = vld [vmem:[%s96 + $0x18] sm:$0xff]
    %v109 = vld [vmem:[%s96 + $0x20] sm:$0xff]
    %v110 = vld [vmem:[%s96 + $0x28] sm:$0xff]
    %v111 = vld [vmem:[%s96 + $0x30] sm:$0xff]
    %v112 = vld [vmem:[%s96 + $0x38] sm:$0xff]
    %v113 = vld [vmem:[%s1] sm:$0x3f]
    %v114 = vld [vmem:[%s1 + $0x8] sm:$0x3f]
    %v115 = vld [vmem:[%s1 + $0x10] sm:$0x3f]
    %v116 = vld [vmem:[%s2] sm:$0x7]
    %v118 = vlaneseq
    %v119 = vshrl.u32 %v118, 7
    %v120 = vsub.s32 0, %v119
    %v121 = vrot.slane %v116, %v120
    %v122 = vlaneseq
    %v123 = vshrl.u32 %v122, 7
    %v124 = vsub.s32 1, %v123
    %v125 = vrot.slane %v116, %v124
    %v126 = vlaneseq
    %v127 = vshrl.u32 %v126, 7
    %v128 = vsub.s32 2, %v127
    %v129 = vrot.slane %v116, %v128
    %vm133 = vcmask 48128
    %v135 = vsel %vm133, %v105, 0
    %v138 = vsel %vm133, %v106, 0
    %v141 = vsel %vm133, %v107, 0
    %v144 = vsel %vm133, %v108, 0
    %v147 = vsel %vm133, %v109, 0
    %v150 = vsel %vm133, %v110, 0
    %v153 = vsel %vm133, %v111, 0
    %v156 = vsel %vm133, %v112, 0
    %vm158 = vcmask 1045504
    %v160 = vsel %vm158, %v113, 0
    %v163 = vsel %vm158, %v114, 0
    %v166 = vsel %vm158, %v115, 0
    %168 = vmatprep.subr.mxu0 %v163
    %169 = vmatpush1.msra.mxu0 %v160
    %170 = vmatprep.subr.mxu0 0.0
    %171 = vmatpush1.msra.mxu0 0.0
    %172 = vmatprep.subr.mxu0 0.0
    %173 = vmatpush1.msra.mxu0 0.0
    %174 = vmatprep.subr.mxu0 0.0
    %175 = vmatpush1.msra.mxu0 0.0
    %176 = vmatprep.subr.mxu0 0.0
    %177 = vmatpush1.msra.mxu0 0.0
    %178 = vmatprep.subr.mxu0 0.0
    %179 = vmatpush1.msra.mxu0 0.0
    %180 = vmatprep.subr.mxu0 0.0
    %181 = vmatpush1.msra.mxu0 0.0
    %182 = vmatprep.subr.mxu0 0.0
    %183 = vmatpush1.msra.mxu0 0.0
    %184 = vmatprep.subr.mxu0 0.0
    %185 = vmatpush1.msra.mxu0 0.0
    %186 = vmatprep.subr.mxu0 0.0
    %187 = vmatpush1.msra.mxu0 0.0
    %188 = vmatprep.subr.mxu0 0.0
    %189 = vmatpush1.msra.mxu0 0.0
    %190 = vmatprep.subr.mxu0 0.0
    %191 = vmatpush1.msra.mxu0 0.0
    %192 = vmatprep.subr.mxu0 0.0
    %193 = vmatpush1.msra.mxu0 0.0
    %194 = vmatprep.subr.mxu0 0.0
    %195 = vmatpush1.msra.mxu0 0.0
    %196 = vmatprep.subr.mxu0 0.0
    %197 = vmatpush1.msra.mxu0 0.0
    %198 = vmatprep.subr.mxu0 0.0
    %199 = vmatpush1.msra.mxu0 0.0
    %200 = vmatprep.subr.mxu0 0.0
    %201 = vmatpush1.msra.mxu0 0.0
    %202 = vmatprep.subr.mxu0 0.0
    %203 = vmatpush1.msra.mxu0 0.0
    %204 = vmatprep.subr.mxu0 0.0
    %205 = vmatpush1.msra.mxu0 0.0
    %206 = vmatprep.subr.mxu0 0.0
    %207 = vmatpush1.msra.mxu0 0.0
    %208 = vmatprep.subr.mxu0 0.0
    %209 = vmatpush1.msra.mxu0 0.0
    %210 = vmatprep.subr.mxu0 0.0
    %211 = vmatpush1.msra.mxu0 0.0
    %212 = vmatprep.subr.mxu0 0.0
    %213 = vmatpush1.msra.mxu0 0.0
    %214 = vmatprep.subr.mxu0 0.0
    %215 = vmatpush1.msra.mxu0 0.0
    %216 = vmatprep.subr.mxu0 0.0
    %217 = vmatpush1.msra.mxu0 0.0
    %218 = vmatprep.subr.mxu0 0.0
    %219 = vmatpush1.msra.mxu0 0.0
    %220 = vmatprep.subr.mxu0 0.0
    %221 = vmatpush1.msra.mxu0 0.0
    %222 = vmatprep.subr.mxu0 0.0
    %223 = vmatpush1.msra.mxu0 0.0
    %224 = vmatprep.subr.mxu0 0.0
    %225 = vmatpush1.msra.mxu0 0.0
    %226 = vmatprep.subr.mxu0 0.0
    %227 = vmatpush1.msra.mxu0 0.0
    %228 = vmatprep.subr.mxu0 0.0
    %229 = vmatpush1.msra.mxu0 0.0
    %230 = vmatprep.subr.mxu0 0.0
    %231 = vmatpush1.msra.mxu0 0.0
    %232 = vmatprep.mubr.f32.mxu0 0.0
    %233 = vmatmul.mubr.f32.gmra.mrb[0].mxu0 %v135
    %v234 = vpop.f32.mrb[0].mxu0
    %v235 = vadd.f32 %v121, %v234
    %v236 = vpop.f32.mrb[0].mxu0
    %v237 = vadd.f32 %v125, %v236
    %238 = vmatprep.mubr.f32.mxu0 0.0
    %239 = vmatmul.mubr.f32.gmra.mrb[0].mxu0 %v138
    %v240 = vpop.f32.mrb[0].mxu0
    %v241 = vadd.f32 %v121, %v240
    %v242 = vpop.f32.mrb[0].mxu0
    %v243 = vadd.f32 %v125, %v242
    %244 = vmatprep.mubr.f32.mxu0 0.0
    %245 = vmatmul.mubr.f32.gmra.mrb[0].mxu0 %v141
    %v246 = vpop.f32.mrb[0].mxu0
    %v247 = vadd.f32 %v121, %v246
    %v248 = vpop.f32.mrb[0].mxu0
    %v249 = vadd.f32 %v125, %v248
    %250 = vmatprep.mubr.f32.mxu0 0.0
    %251 = vmatmul.mubr.f32.gmra.mrb[0].mxu0 %v144
    %v252 = vpop.f32.mrb[0].mxu0
    %v253 = vadd.f32 %v121, %v252
    %v254 = vpop.f32.mrb[0].mxu0
    %v255 = vadd.f32 %v125, %v254
    %256 = vmatprep.mubr.f32.mxu0 0.0
    %257 = vmatmul.mubr.f32.gmra.mrb[0].mxu0 %v147
    %v258 = vpop.f32.mrb[0].mxu0
    %v259 = vadd.f32 %v121, %v258
    %v260 = vpop.f32.mrb[0].mxu0
    %v261 = vadd.f32 %v125, %v260
    %262 = vmatprep.mubr.f32.mxu0 0.0
    %263 = vmatmul.mubr.f32.gmra.mrb[0].mxu0 %v150
    %v264 = vpop.f32.mrb[0].mxu0
    %v265 = vadd.f32 %v121, %v264
    %v266 = vpop.f32.mrb[0].mxu0
    %v267 = vadd.f32 %v125, %v266
    %268 = vmatprep.mubr.f32.mxu0 0.0
    %269 = vmatmul.mubr.f32.gmra.mrb[0].mxu0 %v153
    %v270 = vpop.f32.mrb[0].mxu0
    %v271 = vadd.f32 %v121, %v270
    %v272 = vpop.f32.mrb[0].mxu0
    %v273 = vadd.f32 %v125, %v272
    %274 = vmatprep.mubr.f32.mxu0 0.0
    %275 = vmatmul.mubr.f32.gmra.mrb[0].mxu0 %v156
    %v276 = vpop.f32.mrb[0].mxu0
    %v277 = vadd.f32 %v121, %v276
    %v278 = vpop.f32.mrb[0].mxu0
    %v279 = vadd.f32 %v125, %v278
    %280 = vdwg.mxu0
    %281 = vmatprep.subr.mxu0 0.0
    %282 = vmatpush1.msra.mxu0 %v166
    %283 = vmatprep.subr.mxu0 0.0
    %284 = vmatpush1.msra.mxu0 0.0
    %285 = vmatprep.subr.mxu0 0.0
    %286 = vmatpush1.msra.mxu0 0.0
    %287 = vmatprep.subr.mxu0 0.0
    %288 = vmatpush1.msra.mxu0 0.0
    %289 = vmatprep.subr.mxu0 0.0
    %290 = vmatpush1.msra.mxu0 0.0
    %291 = vmatprep.subr.mxu0 0.0
    %292 = vmatpush1.msra.mxu0 0.0
    %293 = vmatprep.subr.mxu0 0.0
    %294 = vmatpush1.msra.mxu0 0.0
    %295 = vmatprep.subr.mxu0 0.0
    %296 = vmatpush1.msra.mxu0 0.0
    %297 = vmatprep.subr.mxu0 0.0
    %298 = vmatpush1.msra.mxu0 0.0
    %299 = vmatprep.subr.mxu0 0.0
    %300 = vmatpush1.msra.mxu0 0.0
    %301 = vmatprep.subr.mxu0 0.0
    %302 = vmatpush1.msra.mxu0 0.0
    %303 = vmatprep.subr.mxu0 0.0
    %304 = vmatpush1.msra.mxu0 0.0
    %305 = vmatprep.subr.mxu0 0.0
    %306 = vmatpush1.msra.mxu0 0.0
    %307 = vmatprep.subr.mxu0 0.0
    %308 = vmatpush1.msra.mxu0 0.0
    %309 = vmatprep.subr.mxu0 0.0
    %310 = vmatpush1.msra.mxu0 0.0
    %311 = vmatprep.subr.mxu0 0.0
    %312 = vmatpush1.msra.mxu0 0.0
    %313 = vmatprep.subr.mxu0 0.0
    %314 = vmatpush1.msra.mxu0 0.0
    %315 = vmatprep.subr.mxu0 0.0
    %316 = vmatpush1.msra.mxu0 0.0
    %317 = vmatprep.subr.mxu0 0.0
    %318 = vmatpush1.msra.mxu0 0.0
    %319 = vmatprep.subr.mxu0 0.0
    %320 = vmatpush1.msra.mxu0 0.0
    %321 = vmatprep.subr.mxu0 0.0
    %322 = vmatpush1.msra.mxu0 0.0
    %323 = vmatprep.subr.mxu0 0.0
    %324 = vmatpush1.msra.mxu0 0.0
    %325 = vmatprep.subr.mxu0 0.0
    %326 = vmatpush1.msra.mxu0 0.0
    %327 = vmatprep.subr.mxu0 0.0
    %328 = vmatpush1.msra.mxu0 0.0
    %329 = vmatprep.subr.mxu0 0.0
    %330 = vmatpush1.msra.mxu0 0.0
    %331 = vmatprep.subr.mxu0 0.0
    %332 = vmatpush1.msra.mxu0 0.0
    %333 = vmatprep.subr.mxu0 0.0
    %334 = vmatpush1.msra.mxu0 0.0
    %335 = vmatprep.subr.mxu0 0.0
    %336 = vmatpush1.msra.mxu0 0.0
    %337 = vmatprep.subr.mxu0 0.0
    %338 = vmatpush1.msra.mxu0 0.0
    %339 = vmatprep.subr.mxu0 0.0
    %340 = vmatpush1.msra.mxu0 0.0
    %341 = vmatprep.subr.mxu0 0.0
    %342 = vmatpush1.msra.mxu0 0.0
    %343 = vmatprep.subr.mxu0 0.0
    %344 = vmatpush1.msra.mxu0 0.0
    %345 = vmatprep.mubr.f32.mxu0 0.0
    %346 = vmatmul.mubr.f32.gmra.mrb[0].mxu0 %v135
    %v347 = vpop.f32.mrb[0].mxu0
    %v348 = vadd.f32 %v129, %v347
    %v349 = vpop.f32.mrb[0].mxu0
    %350 = vmatprep.mubr.f32.mxu0 0.0
    %351 = vmatmul.mubr.f32.gmra.mrb[0].mxu0 %v138
    %v352 = vpop.f32.mrb[0].mxu0
    %v353 = vadd.f32 %v129, %v352
    %v354 = vpop.f32.mrb[0].mxu0
    %355 = vmatprep.mubr.f32.mxu0 0.0
    %356 = vmatmul.mubr.f32.gmra.mrb[0].mxu0 %v141
    %v357 = vpop.f32.mrb[0].mxu0
    %v358 = vadd.f32 %v129, %v357
    %v359 = vpop.f32.mrb[0].mxu0
    %360 = vmatprep.mubr.f32.mxu0 0.0
    %361 = vmatmul.mubr.f32.gmra.mrb[0].mxu0 %v144
    %v362 = vpop.f32.mrb[0].mxu0
    %v363 = vadd.f32 %v129, %v362
    %v364 = vpop.f32.mrb[0].mxu0
    %365 = vmatprep.mubr.f32.mxu0 0.0
    %366 = vmatmul.mubr.f32.gmra.mrb[0].mxu0 %v147
    %v367 = vpop.f32.mrb[0].mxu0
    %v368 = vadd.f32 %v129, %v367
    %v369 = vpop.f32.mrb[0].mxu0
    %370 = vmatprep.mubr.f32.mxu0 0.0
    %371 = vmatmul.mubr.f32.gmra.mrb[0].mxu0 %v150
    %v372 = vpop.f32.mrb[0].mxu0
    %v373 = vadd.f32 %v129, %v372
    %v374 = vpop.f32.mrb[0].mxu0
    %375 = vmatprep.mubr.f32.mxu0 0.0
    %376 = vmatmul.mubr.f32.gmra.mrb[0].mxu0 %v153
    %v377 = vpop.f32.mrb[0].mxu0
    %v378 = vadd.f32 %v129, %v377
    %v379 = vpop.f32.mrb[0].mxu0
    %380 = vmatprep.mubr.f32.mxu0 0.0
    %381 = vmatmul.mubr.f32.gmra.mrb[0].mxu0 %v156
    %v382 = vpop.f32.mrb[0].mxu0
    %v383 = vadd.f32 %v129, %v382
    %v384 = vpop.f32.mrb[0].mxu0
    %385 = vdwg.mxu0
    %386 = vst [vmem:[#allocation2] sm:$0xff] %v235
    %387 = vst [vmem:[#allocation2 + $0x8] sm:$0xff] %v237
    %388 = vst [vmem:[#allocation2 + $0x10] sm:$0xff] %v348
    %389 = vst [vmem:[#allocation2 + $0x18] sm:$0xff] %v241
    %390 = vst [vmem:[#allocation2 + $0x20] sm:$0xff] %v243
    %391 = vst [vmem:[#allocation2 + $0x28] sm:$0xff] %v353
    %392 = vst [vmem:[#allocation2 + $0x30] sm:$0xff] %v247
    %393 = vst [vmem:[#allocation2 + $0x38] sm:$0xff] %v249
    %394 = vst [vmem:[#allocation2 + $0x40] sm:$0xff] %v358
    %395 = vst [vmem:[#allocation2 + $0x48] sm:$0xff] %v253
    %396 = vst [vmem:[#allocation2 + $0x50] sm:$0xff] %v255
    %397 = vst [vmem:[#allocation2 + $0x58] sm:$0xff] %v363
    %398 = vst [vmem:[#allocation2 + $0x60] sm:$0xff] %v259
    %399 = vst [vmem:[#allocation2 + $0x68] sm:$0xff] %v261
    %400 = vst [vmem:[#allocation2 + $0x70] sm:$0xff] %v368
    %401 = vst [vmem:[#allocation2 + $0x78] sm:$0xff] %v265
    %402 = vst [vmem:[#allocation2 + $0x80] sm:$0xff] %v267
    %403 = vst [vmem:[#allocation2 + $0x88] sm:$0xff] %v373
    %404 = vst [vmem:[#allocation2 + $0x90] sm:$0xff] %v271
    %405 = vst [vmem:[#allocation2 + $0x98] sm:$0xff] %v273
    %406 = vst [vmem:[#allocation2 + $0xa0] sm:$0xff] %v378
    %407 = vst [vmem:[#allocation2 + $0xa8] sm:$0xff] %v277
    %408 = vst [vmem:[#allocation2 + $0xb0] sm:$0xff] %v279
    %409 = vst [vmem:[#allocation2 + $0xb8] sm:$0xff] %v383
    %v410 = vld [vmem:[%s4] sm:$0x7]
    %v412 = vlaneseq
    %v413 = vshrl.u32 %v412, 7
    %v414 = vsub.s32 0, %v413
    %v415 = vrot.slane %v410, %v414
    %v416 = vlaneseq
    %v417 = vshrl.u32 %v416, 7
    %v418 = vsub.s32 1, %v417
    %v419 = vrot.slane %v410, %v418
    %v420 = vlaneseq
    %v421 = vshrl.u32 %v420, 7
    %v422 = vsub.s32 2, %v421
    %v423 = vrot.slane %v410, %v422
    %v427 = vld [vmem:[%s5] sm:$0x7]
    %v429 = vlaneseq
    %v430 = vshrl.u32 %v429, 7
    %v431 = vsub.s32 0, %v430
    %v432 = vrot.slane %v427, %v431
    %v433 = vlaneseq
    %v434 = vshrl.u32 %v433, 7
    %v435 = vsub.s32 1, %v434
    %v436 = vrot.slane %v427, %v435
    %v437 = vlaneseq
    %v438 = vshrl.u32 %v437, 7
    %v439 = vsub.s32 2, %v438
    %v440 = vrot.slane %v427, %v439
    %v444 = vld [vmem:[%s7] sm:$0x7]
    %v446 = vlaneseq
    %v447 = vshrl.u32 %v446, 7
    %v448 = vsub.s32 0, %v447
    %v449 = vrot.slane %v444, %v448
    %v450 = vlaneseq
    %v451 = vshrl.u32 %v450, 7
    %v452 = vsub.s32 1, %v451
    %v453 = vrot.slane %v444, %v452
    %v454 = vlaneseq
    %v455 = vshrl.u32 %v454, 7
    %v456 = vsub.s32 2, %v455
    %v457 = vrot.slane %v444, %v456
    %v461 = vld [vmem:[#allocation3] sm:$0xff]
    %v462 = vld [vmem:[#allocation3 + $0x8] sm:$0xff]
    %v463 = vld [vmem:[#allocation4] sm:$0xff]
    %v464 = vld [vmem:[#allocation4 + $0x8] sm:$0xff]
    %v465 = vld [vmem:[#allocation4 + $0x10] sm:$0xff]
    %v466 = vld [vmem:[#allocation4 + $0x18] sm:$0xff]
    %v467 = vld [vmem:[#allocation4 + $0x20] sm:$0xff]
    %v468 = vld [vmem:[#allocation4 + $0x28] sm:$0xff]
    %v469 = vld [vmem:[#allocation4 + $0x30] sm:$0xff]
    %v470 = vld [vmem:[#allocation4 + $0x38] sm:$0xff]
    %v471 = vld [vmem:[#allocation4 + $0x40] sm:$0xff]
    %v472 = vld [vmem:[#allocation4 + $0x48] sm:$0xff]
    %v473 = vld [vmem:[#allocation4 + $0x50] sm:$0xff]
    %v474 = vld [vmem:[#allocation4 + $0x58] sm:$0xff]
    %v475 = vld [vmem:[#allocation4 + $0x60] sm:$0xff]
    %v476 = vld [vmem:[#allocation4 + $0x68] sm:$0xff]
    %v477 = vld [vmem:[#allocation4 + $0x70] sm:$0xff]
    %v478 = vld [vmem:[#allocation4 + $0x78] sm:$0xff]
    %v479 = vld [vmem:[#allocation4 + $0x80] sm:$0xff]
    %v480 = vld [vmem:[#allocation4 + $0x88] sm:$0xff]
    %v481 = vld [vmem:[#allocation4 + $0x90] sm:$0xff]
    %v482 = vld [vmem:[#allocation4 + $0x98] sm:$0xff]
    %v483 = vld [vmem:[#allocation4 + $0xa0] sm:$0xff]
    %v484 = vld [vmem:[#allocation4 + $0xa8] sm:$0xff]
    %v485 = vld [vmem:[#allocation4 + $0xb0] sm:$0xff]
    %v486 = vld [vmem:[#allocation4 + $0xb8] sm:$0xff]
    %v487 = vld [vmem:[#allocation4 + $0xc0] sm:$0xff]
    %v488 = vld [vmem:[#allocation4 + $0xc8] sm:$0xff]
    %v489 = vld [vmem:[#allocation4 + $0xd0] sm:$0xff]
    %v490 = vld [vmem:[#allocation4 + $0xd8] sm:$0xff]
    %v491 = vld [vmem:[#allocation4 + $0xe0] sm:$0xff]
    %v492 = vld [vmem:[#allocation4 + $0xe8] sm:$0xff]
    %v493 = vld [vmem:[#allocation4 + $0xf0] sm:$0xff]
    %v494 = vld [vmem:[#allocation4 + $0xf8] sm:$0xff]
    %v495 = vld [vmem:[#allocation4 + $0x100] sm:$0xff]
    %v496 = vld [vmem:[#allocation4 + $0x108] sm:$0xff]
    %v497 = vld [vmem:[#allocation4 + $0x110] sm:$0xff]
    %v498 = vld [vmem:[#allocation4 + $0x118] sm:$0xff]
    %v499 = vld [vmem:[#allocation4 + $0x120] sm:$0xff]
    %v500 = vld [vmem:[#allocation4 + $0x128] sm:$0xff]
    %v501 = vld [vmem:[#allocation4 + $0x130] sm:$0xff]
    %v502 = vld [vmem:[#allocation4 + $0x138] sm:$0xff]
    %v503 = vld [vmem:[#allocation4 + $0x140] sm:$0xff]
    %v504 = vld [vmem:[#allocation4 + $0x148] sm:$0xff]
    %v505 = vld [vmem:[#allocation4 + $0x150] sm:$0xff]
    %v506 = vld [vmem:[#allocation4 + $0x158] sm:$0xff]
    %v507 = vld [vmem:[#allocation4 + $0x160] sm:$0xff]
    %v508 = vld [vmem:[#allocation4 + $0x168] sm:$0xff]
    %v509 = vld [vmem:[#allocation4 + $0x170] sm:$0xff]
    %v510 = vld [vmem:[#allocation4 + $0x178] sm:$0xff]
    %v511 = vld [vmem:[#allocation4 + $0x180] sm:$0xff]
    %v512 = vld [vmem:[#allocation4 + $0x188] sm:$0xff]
    %v513 = vld [vmem:[#allocation4 + $0x190] sm:$0xff]
    %v514 = vld [vmem:[#allocation4 + $0x198] sm:$0xff]
    %v515 = vld [vmem:[#allocation4 + $0x1a0] sm:$0xff]
    %v516 = vld [vmem:[#allocation4 + $0x1a8] sm:$0xff]
    %v517 = vld [vmem:[#allocation4 + $0x1b0] sm:$0xff]
    %v518 = vld [vmem:[#allocation4 + $0x1b8] sm:$0xff]
    %v519 = vld [vmem:[#allocation4 + $0x1c0] sm:$0xff]
    %v520 = vld [vmem:[#allocation4 + $0x1c8] sm:$0xff]
    %v521 = vld [vmem:[#allocation4 + $0x1d0] sm:$0xff]
    %v522 = vld [vmem:[#allocation4 + $0x1d8] sm:$0xff]
    %v523 = vld [vmem:[#allocation4 + $0x1e0] sm:$0xff]
    %v524 = vld [vmem:[#allocation4 + $0x1e8] sm:$0xff]
    %v525 = vld [vmem:[#allocation4 + $0x1f0] sm:$0xff]
    %v526 = vld [vmem:[#allocation4 + $0x1f8] sm:$0xff]
    %v527 = vld [vmem:[#allocation4 + $0x200] sm:$0xff]
    %v528 = vld [vmem:[#allocation4 + $0x208] sm:$0xff]
    %v529 = vld [vmem:[#allocation4 + $0x210] sm:$0xff]
    %v530 = vld [vmem:[#allocation4 + $0x218] sm:$0xff]
    %v531 = vld [vmem:[#allocation4 + $0x220] sm:$0xff]
    %v532 = vld [vmem:[#allocation4 + $0x228] sm:$0xff]
    %v533 = vld [vmem:[#allocation4 + $0x230] sm:$0xff]
    %v534 = vld [vmem:[#allocation4 + $0x238] sm:$0xff]
    %v535 = vld [vmem:[#allocation4 + $0x240] sm:$0xff]
    %v536 = vld [vmem:[#allocation4 + $0x248] sm:$0xff]
    %v537 = vld [vmem:[#allocation4 + $0x250] sm:$0xff]
    %v538 = vld [vmem:[#allocation4 + $0x258] sm:$0xff]
    %v539 = vld [vmem:[#allocation4 + $0x260] sm:$0xff]
    %v540 = vld [vmem:[#allocation4 + $0x268] sm:$0xff]
    %v541 = vld [vmem:[#allocation4 + $0x270] sm:$0xff]
    %v542 = vld [vmem:[#allocation4 + $0x278] sm:$0xff]
    %v543 = vld [vmem:[#allocation4 + $0x280] sm:$0xff]
    %v544 = vld [vmem:[#allocation4 + $0x288] sm:$0xff]
    %v545 = vld [vmem:[#allocation4 + $0x290] sm:$0xff]
    %v546 = vld [vmem:[#allocation4 + $0x298] sm:$0xff]
    %v547 = vld [vmem:[#allocation4 + $0x2a0] sm:$0xff]
    %v548 = vld [vmem:[#allocation4 + $0x2a8] sm:$0xff]
    %v549 = vld [vmem:[#allocation4 + $0x2b0] sm:$0xff]
    %v550 = vld [vmem:[#allocation4 + $0x2b8] sm:$0xff]
    %v551 = vld [vmem:[#allocation4 + $0x2c0] sm:$0xff]
    %v552 = vld [vmem:[#allocation4 + $0x2c8] sm:$0xff]
    %v553 = vld [vmem:[#allocation4 + $0x2d0] sm:$0xff]
    %v554 = vld [vmem:[#allocation4 + $0x2d8] sm:$0xff]
    %v555 = vld [vmem:[#allocation4 + $0x2e0] sm:$0xff]
    %v556 = vld [vmem:[#allocation4 + $0x2e8] sm:$0xff]
    %v557 = vld [vmem:[#allocation4 + $0x2f0] sm:$0xff]
    %v558 = vld [vmem:[#allocation4 + $0x2f8] sm:$0xff]
    %559 = vmatprep.subr.mxu0 %v464
    %560 = vmatpush1.msra.mxu0 %v463
    %561 = vmatprep.subr.mxu0 %v470
    %562 = vmatpush1.msra.mxu0 %v469
    %563 = vmatprep.subr.mxu0 %v476
    %564 = vmatpush1.msra.mxu0 %v475
    %565 = vmatprep.subr.mxu0 %v482
    %566 = vmatpush1.msra.mxu0 %v481
    %567 = vmatprep.subr.mxu0 %v488
    %568 = vmatpush1.msra.mxu0 %v487
    %569 = vmatprep.subr.mxu0 %v494
    %570 = vmatpush1.msra.mxu0 %v493
    %571 = vmatprep.subr.mxu0 %v500
    %572 = vmatpush1.msra.mxu0 %v499
    %573 = vmatprep.subr.mxu0 %v506
    %574 = vmatpush1.msra.mxu0 %v505
    %575 = vmatprep.subr.mxu0 %v512
    %576 = vmatpush1.msra.mxu0 %v511
    %577 = vmatprep.subr.mxu0 %v518
    %578 = vmatpush1.msra.mxu0 %v517
    %579 = vmatprep.subr.mxu0 %v524
    %580 = vmatpush1.msra.mxu0 %v523
    %581 = vmatprep.subr.mxu0 %v530
    %582 = vmatpush1.msra.mxu0 %v529
    %583 = vmatprep.subr.mxu0 %v536
    %584 = vmatpush1.msra.mxu0 %v535
    %585 = vmatprep.subr.mxu0 %v542
    %586 = vmatpush1.msra.mxu0 %v541
    %587 = vmatprep.subr.mxu0 %v548
    %588 = vmatpush1.msra.mxu0 %v547
    %589 = vmatprep.subr.mxu0 %v554
    %590 = vmatpush1.msra.mxu0 %v553
    %591 = vmatprep.subr.mxu0 0.0
    %592 = vmatpush1.msra.mxu0 0.0
    %593 = vmatprep.subr.mxu0 0.0
    %594 = vmatpush1.msra.mxu0 0.0
    %595 = vmatprep.subr.mxu0 0.0
    %596 = vmatpush1.msra.mxu0 0.0
    %597 = vmatprep.subr.mxu0 0.0
    %598 = vmatpush1.msra.mxu0 0.0
    %599 = vmatprep.subr.mxu0 0.0
    %600 = vmatpush1.msra.mxu0 0.0
    %601 = vmatprep.subr.mxu0 0.0
    %602 = vmatpush1.msra.mxu0 0.0
    %603 = vmatprep.subr.mxu0 0.0
    %604 = vmatpush1.msra.mxu0 0.0
    %605 = vmatprep.subr.mxu0 0.0
    %606 = vmatpush1.msra.mxu0 0.0
    %607 = vmatprep.subr.mxu0 0.0
    %608 = vmatpush1.msra.mxu0 0.0
    %609 = vmatprep.subr.mxu0 0.0
    %610 = vmatpush1.msra.mxu0 0.0
    %611 = vmatprep.subr.mxu0 0.0
    %612 = vmatpush1.msra.mxu0 0.0
    %613 = vmatprep.subr.mxu0 0.0
    %614 = vmatpush1.msra.mxu0 0.0
    %615 = vmatprep.subr.mxu0 0.0
    %616 = vmatpush1.msra.mxu0 0.0
    %617 = vmatprep.subr.mxu0 0.0
    %618 = vmatpush1.msra.mxu0 0.0
    %619 = vmatprep.subr.mxu0 0.0
    %620 = vmatpush1.msra.mxu0 0.0
    %621 = vmatprep.subr.mxu0 0.0
    %622 = vmatpush1.msra.mxu0 0.0
    %623 = vmatprep.mubr.f32.mxu0 0.0
    %624 = vmatmul.mubr.f32.gmra.mrb[0].mxu0 %v461
    %v625 = vpop.f32.mrb[0].mxu0
    %v626 = vadd.f32 0.0, %v625
    %v627 = vpop.f32.mrb[0].mxu0
    %v628 = vadd.f32 0.0, %v627
    %629 = vmatprep.mubr.f32.mxu0 0.0
    %630 = vmatmul.mubr.f32.gmra.mrb[0].mxu0 %v462
    %v631 = vpop.f32.mrb[0].mxu0
    %v632 = vpop.f32.mrb[0].mxu0
    %633 = vdwg.mxu0
    %634 = vmatprep.subr.mxu0 %v466
    %635 = vmatpush1.msra.mxu0 %v465
    %636 = vmatprep.subr.mxu0 %v472
    %637 = vmatpush1.msra.mxu0 %v471
    %638 = vmatprep.subr.mxu0 %v478
    %639 = vmatpush1.msra.mxu0 %v477
    %640 = vmatprep.subr.mxu0 %v484
    %641 = vmatpush1.msra.mxu0 %v483
    %642 = vmatprep.subr.mxu0 %v490
    %643 = vmatpush1.msra.mxu0 %v489
    %644 = vmatprep.subr.mxu0 %v496
    %645 = vmatpush1.msra.mxu0 %v495
    %646 = vmatprep.subr.mxu0 %v502
    %647 = vmatpush1.msra.mxu0 %v501
    %648 = vmatprep.subr.mxu0 %v508
    %649 = vmatpush1.msra.mxu0 %v507
    %650 = vmatprep.subr.mxu0 %v514
    %651 = vmatpush1.msra.mxu0 %v513
    %652 = vmatprep.subr.mxu0 %v520
    %653 = vmatpush1.msra.mxu0 %v519
    %654 = vmatprep.subr.mxu0 %v526
    %655 = vmatpush1.msra.mxu0 %v525
    %656 = vmatprep.subr.mxu0 %v532
    %657 = vmatpush1.msra.mxu0 %v531
    %658 = vmatprep.subr.mxu0 %v538
    %659 = vmatpush1.msra.mxu0 %v537
    %660 = vmatprep.subr.mxu0 %v544
    %661 = vmatpush1.msra.mxu0 %v543
    %662 = vmatprep.subr.mxu0 %v550
    %663 = vmatpush1.msra.mxu0 %v549
    %664 = vmatprep.subr.mxu0 %v556
    %665 = vmatpush1.msra.mxu0 %v555
    %666 = vmatprep.subr.mxu0 0.0
    %667 = vmatpush1.msra.mxu0 0.0
    %668 = vmatprep.subr.mxu0 0.0
    %669 = vmatpush1.msra.mxu0 0.0
    %670 = vmatprep.subr.mxu0 0.0
    %671 = vmatpush1.msra.mxu0 0.0
    %672 = vmatprep.subr.mxu0 0.0
    %673 = vmatpush1.msra.mxu0 0.0
    %674 = vmatprep.subr.mxu0 0.0
    %675 = vmatpush1.msra.mxu0 0.0
    %676 = vmatprep.subr.mxu0 0.0
    %677 = vmatpush1.msra.mxu0 0.0
    %678 = vmatprep.subr.mxu0 0.0
    %679 = vmatpush1.msra.mxu0 0.0
    %680 = vmatprep.subr.mxu0 0.0
    %681 = vmatpush1.msra.mxu0 0.0
    %682 = vmatprep.subr.mxu0 0.0
    %683 = vmatpush1.msra.mxu0 0.0
    %684 = vmatprep.subr.mxu0 0.0
    %685 = vmatpush1.msra.mxu0 0.0
    %686 = vmatprep.subr.mxu0 0.0
    %687 = vmatpush1.msra.mxu0 0.0
    %688 = vmatprep.subr.mxu0 0.0
    %689 = vmatpush1.msra.mxu0 0.0
    %690 = vmatprep.subr.mxu0 0.0
    %691 = vmatpush1.msra.mxu0 0.0
    %692 = vmatprep.subr.mxu0 0.0
    %693 = vmatpush1.msra.mxu0 0.0
    %694 = vmatprep.subr.mxu0 0.0
    %695 = vmatpush1.msra.mxu0 0.0
    %696 = vmatprep.subr.mxu0 0.0
    %697 = vmatpush1.msra.mxu0 0.0
    %698 = vmatprep.mubr.f32.mxu0 0.0
    %699 = vmatmul.mubr.f32.gmra.mrb[0].mxu0 %v461
    %v700 = vpop.f32.mrb[0].mxu0
    %v701 = vadd.f32 0.0, %v700
    %v702 = vpop.f32.mrb[0].mxu0
    %703 = vmatprep.mubr.f32.mxu0 0.0
    %704 = vmatmul.mubr.f32.gmra.mrb[0].mxu0 %v462
    %v705 = vpop.f32.mrb[0].mxu0
    %v706 = vpop.f32.mrb[0].mxu0
    %v707 = vadd.f32 0.0, %v706
    %708 = vdwg.mxu0
    %709 = vmatprep.subr.mxu0 %v468
    %710 = vmatpush1.msra.mxu0 %v467
    %711 = vmatprep.subr.mxu0 %v474
    %712 = vmatpush1.msra.mxu0 %v473
    %713 = vmatprep.subr.mxu0 %v480
    %714 = vmatpush1.msra.mxu0 %v479
    %715 = vmatprep.subr.mxu0 %v486
    %716 = vmatpush1.msra.mxu0 %v485
    %717 = vmatprep.subr.mxu0 %v492
    %718 = vmatpush1.msra.mxu0 %v491
    %719 = vmatprep.subr.mxu0 %v498
    %720 = vmatpush1.msra.mxu0 %v497
    %721 = vmatprep.subr.mxu0 %v504
    %722 = vmatpush1.msra.mxu0 %v503
    %723 = vmatprep.subr.mxu0 %v510
    %724 = vmatpush1.msra.mxu0 %v509
    %725 = vmatprep.subr.mxu0 %v516
    %726 = vmatpush1.msra.mxu0 %v515
    %727 = vmatprep.subr.mxu0 %v522
    %728 = vmatpush1.msra.mxu0 %v521
    %729 = vmatprep.subr.mxu0 %v528
    %730 = vmatpush1.msra.mxu0 %v527
    %731 = vmatprep.subr.mxu0 %v534
    %732 = vmatpush1.msra.mxu0 %v533
    %733 = vmatprep.subr.mxu0 %v540
    %734 = vmatpush1.msra.mxu0 %v539
    %735 = vmatprep.subr.mxu0 %v546
    %736 = vmatpush1.msra.mxu0 %v545
    %737 = vmatprep.subr.mxu0 %v552
    %738 = vmatpush1.msra.mxu0 %v551
    %739 = vmatprep.subr.mxu0 %v558
    %740 = vmatpush1.msra.mxu0 %v557
    %741 = vmatprep.subr.mxu0 0.0
    %742 = vmatpush1.msra.mxu0 0.0
    %743 = vmatprep.subr.mxu0 0.0
    %744 = vmatpush1.msra.mxu0 0.0
    %745 = vmatprep.subr.mxu0 0.0
    %746 = vmatpush1.msra.mxu0 0.0
    %747 = vmatprep.subr.mxu0 0.0
    %748 = vmatpush1.msra.mxu0 0.0
    %749 = vmatprep.subr.mxu0 0.0
    %750 = vmatpush1.msra.mxu0 0.0
    %751 = vmatprep.subr.mxu0 0.0
    %752 = vmatpush1.msra.mxu0 0.0
    %753 = vmatprep.subr.mxu0 0.0
    %754 = vmatpush1.msra.mxu0 0.0
    %755 = vmatprep.subr.mxu0 0.0
    %756 = vmatpush1.msra.mxu0 0.0
    %757 = vmatprep.subr.mxu0 0.0
    %758 = vmatpush1.msra.mxu0 0.0
    %759 = vmatprep.subr.mxu0 0.0
    %760 = vmatpush1.msra.mxu0 0.0
    %761 = vmatprep.subr.mxu0 0.0
    %762 = vmatpush1.msra.mxu0 0.0
    %763 = vmatprep.subr.mxu0 0.0
    %764 = vmatpush1.msra.mxu0 0.0
    %765 = vmatprep.subr.mxu0 0.0
    %766 = vmatpush1.msra.mxu0 0.0
    %767 = vmatprep.subr.mxu0 0.0
    %768 = vmatpush1.msra.mxu0 0.0
    %769 = vmatprep.subr.mxu0 0.0
    %770 = vmatpush1.msra.mxu0 0.0
    %771 = vmatprep.subr.mxu0 0.0
    %772 = vmatpush1.msra.mxu0 0.0
    %773 = vmatprep.mubr.f32.mxu0 0.0
    %774 = vmatmul.mubr.f32.gmra.mrb[0].mxu0 %v461
    %v775 = vpop.f32.mrb[0].mxu0
    %v776 = vpop.f32.mrb[0].mxu0
    %777 = vmatprep.mubr.f32.mxu0 0.0
    %778 = vmatmul.mubr.f32.gmra.mrb[0].mxu0 %v462
    %v779 = vpop.f32.mrb[0].mxu0
    %v780 = vadd.f32 0.0, %v779
    %v781 = vpop.f32.mrb[0].mxu0
    %v782 = vadd.f32 0.0, %v781
    %783 = vdwg.mxu0
    %v784 = vadd.f32 %v626, %v415
    %v785 = vadd.f32 %v628, %v419
    %v786 = vadd.f32 %v701, %v423
    %v787 = vadd.f32 %v707, %v432
    %v788 = vadd.f32 %v780, %v436
    %v789 = vadd.f32 %v782, %v440
    %s790 = smul.u32 0, 3
    %s791 = smul.addr %s790, 8
    %s792 = scalar_lea.vmem [#allocation2], %s791
    %v793 = vld [vmem:[%s792] sm:$0xff]
    %v794 = vld [vmem:[%s792 + $0x8] sm:$0xff]
    %v795 = vld [vmem:[%s792 + $0x10] sm:$0xff]
    %v796 = vadd.f32 %v793, %v784
    %v797 = vmul.f32 %v796, 0.5
    %v798 = vtanh.pop %v797
    %v799 = vadd.f32 %v798, 1.0
    %v800 = vmul.f32 %v799, 0.5
    %v801 = vadd.f32 %v794, %v785
    %v802 = vmul.f32 %v801, 0.5
    %v803 = vtanh.pop %v802
    %v804 = vadd.f32 %v803, 1.0
    %v805 = vmul.f32 %v804, 0.5
    %v806 = vmul.f32 %v800, %v786
    %v807 = vadd.f32 %v795, %v806
    %v808 = vtanh.pop %v807
    %v809 = vsub.f32 1.0, %v805
    %v810 = vmul.f32 %v809, %v808
    %v811 = vmul.f32 %v805, %v461
    %v812 = vadd.f32 %v810, %v811
    %v813 = vld [vmem:[#allocation7] sm:$0xff]
    %v814 = vld [vmem:[#allocation7 + $0x8] sm:$0xff]
    %v815 = vld [vmem:[#allocation7 + $0x10] sm:$0xff]
    %v816 = vld [vmem:[#allocation7 + $0x18] sm:$0xff]
    %v817 = vld [vmem:[#allocation7 + $0x20] sm:$0xff]
    %v818 = vld [vmem:[#allocation7 + $0x28] sm:$0xff]
    %v819 = vld [vmem:[#allocation7 + $0x30] sm:$0xff]
    %v820 = vld [vmem:[#allocation7 + $0x38] sm:$0xff]
    %v821 = vld [vmem:[#allocation7 + $0x40] sm:$0xff]
    %v822 = vld [vmem:[#allocation7 + $0x48] sm:$0xff]
    %v823 = vld [vmem:[#allocation7 + $0x50] sm:$0xff]
    %v824 = vld [vmem:[#allocation7 + $0x58] sm:$0xff]
    %v825 = vld [vmem:[#allocation7 + $0x60] sm:$0xff]
    %v826 = vld [vmem:[#allocation7 + $0x68] sm:$0xff]
    %v827 = vld [vmem:[#allocation7 + $0x70] sm:$0xff]
    %v828 = vld [vmem:[#allocation7 + $0x78] sm:$0xff]
    %v829 = vld [vmem:[#allocation7 + $0x80] sm:$0xff]
    %v830 = vld [vmem:[#allocation7 + $0x88] sm:$0xff]
    %v831 = vld [vmem:[#allocation7 + $0x90] sm:$0xff]
    %v832 = vld [vmem:[#allocation7 + $0x98] sm:$0xff]
    %v833 = vld [vmem:[#allocation7 + $0xa0] sm:$0xff]
    %v834 = vld [vmem:[#allocation7 + $0xa8] sm:$0xff]
    %v835 = vld [vmem:[#allocation7 + $0xb0] sm:$0xff]
    %v836 = vld [vmem:[#allocation7 + $0xb8] sm:$0xff]
    %v837 = vld [vmem:[#allocation7 + $0xc0] sm:$0xff]
    %v838 = vld [vmem:[#allocation7 + $0xc8] sm:$0xff]
    %v839 = vld [vmem:[#allocation7 + $0xd0] sm:$0xff]
    %v840 = vld [vmem:[#allocation7 + $0xd8] sm:$0xff]
    %v841 = vld [vmem:[#allocation7 + $0xe0] sm:$0xff]
    %v842 = vld [vmem:[#allocation7 + $0xe8] sm:$0xff]
    %v843 = vld [vmem:[#allocation7 + $0xf0] sm:$0xff]
    %v844 = vld [vmem:[#allocation7 + $0xf8] sm:$0xff]
    %v845 = vld [vmem:[#allocation7 + $0x100] sm:$0xff]
    %v846 = vld [vmem:[#allocation7 + $0x108] sm:$0xff]
    %v847 = vld [vmem:[#allocation7 + $0x110] sm:$0xff]
    %v848 = vld [vmem:[#allocation7 + $0x118] sm:$0xff]
    %v849 = vld [vmem:[#allocation7 + $0x120] sm:$0xff]
    %v850 = vld [vmem:[#allocation7 + $0x128] sm:$0xff]
    %v851 = vld [vmem:[#allocation7 + $0x130] sm:$0xff]
    %v852 = vld [vmem:[#allocation7 + $0x138] sm:$0xff]
    %v853 = vld [vmem:[#allocation7 + $0x140] sm:$0xff]
    %v854 = vld [vmem:[#allocation7 + $0x148] sm:$0xff]
    %v855 = vld [vmem:[#allocation7 + $0x150] sm:$0xff]
    %v856 = vld [vmem:[#allocation7 + $0x158] sm:$0xff]
    %v857 = vld [vmem:[#allocation7 + $0x160] sm:$0xff]
    %v858 = vld [vmem:[#allocation7 + $0x168] sm:$0xff]
    %v859 = vld [vmem:[#allocation7 + $0x170] sm:$0xff]
    %v860 = vld [vmem:[#allocation7 + $0x178] sm:$0xff]
    %861 = vmatprep.subr.mxu0 %v814
    %862 = vmatpush1.msra.mxu0 %v813
    %863 = vmatprep.subr.mxu0 %v817
    %864 = vmatpush1.msra.mxu0 %v816
    %865 = vmatprep.subr.mxu0 %v820
    %866 = vmatpush1.msra.mxu0 %v819
    %867 = vmatprep.subr.mxu0 %v823
    %868 = vmatpush1.msra.mxu0 %v822
    %869 = vmatprep.subr.mxu0 %v826
    %870 = vmatpush1.msra.mxu0 %v825
    %871 = vmatprep.subr.mxu0 %v829
    %872 = vmatpush1.msra.mxu0 %v828
    %873 = vmatprep.subr.mxu0 %v832
    %874 = vmatpush1.msra.mxu0 %v831
    %875 = vmatprep.subr.mxu0 %v835
    %876 = vmatpush1.msra.mxu0 %v834
    %877 = vmatprep.subr.mxu0 %v838
    %878 = vmatpush1.msra.mxu0 %v837
    %879 = vmatprep.subr.mxu0 %v841
    %880 = vmatpush1.msra.mxu0 %v840
    %881 = vmatprep.subr.mxu0 %v844
    %882 = vmatpush1.msra.mxu0 %v843
    %883 = vmatprep.subr.mxu0 %v847
    %884 = vmatpush1.msra.mxu0 %v846
    %885 = vmatprep.subr.mxu0 %v850
    %886 = vmatpush1.msra.mxu0 %v849
    %887 = vmatprep.subr.mxu0 %v853
    %888 = vmatpush1.msra.mxu0 %v852
    %889 = vmatprep.subr.mxu0 %v856
    %890 = vmatpush1.msra.mxu0 %v855
    %891 = vmatprep.subr.mxu0 %v859
    %892 = vmatpush1.msra.mxu0 %v858
    %893 = vmatprep.subr.mxu0 0.0
    %894 = vmatpush1.msra.mxu0 0.0
    %895 = vmatprep.subr.mxu0 0.0
    %896 = vmatpush1.msra.mxu0 0.0
    %897 = vmatprep.subr.mxu0 0.0
    %898 = vmatpush1.msra.mxu0 0.0
    %899 = vmatprep.subr.mxu0 0.0
    %900 = vmatpush1.msra.mxu0 0.0
    %901 = vmatprep.subr.mxu0 0.0
    %902 = vmatpush1.msra.mxu0 0.0
    %903 = vmatprep.subr.mxu0 0.0
    %904 = vmatpush1.msra.mxu0 0.0
    %905 = vmatprep.subr.mxu0 0.0
    %906 = vmatpush1.msra.mxu0 0.0
    %907 = vmatprep.subr.mxu0 0.0
    %908 = vmatpush1.msra.mxu0 0.0
    %909 = vmatprep.subr.mxu0 0.0
    %910 = vmatpush1.msra.mxu0 0.0
    %911 = vmatprep.subr.mxu0 0.0
    %912 = vmatpush1.msra.mxu0 0.0
    %913 = vmatprep.subr.mxu0 0.0
    %914 = vmatpush1.msra.mxu0 0.0
    %915 = vmatprep.subr.mxu0 0.0
    %916 = vmatpush1.msra.mxu0 0.0
    %917 = vmatprep.subr.mxu0 0.0
    %918 = vmatpush1.msra.mxu0 0.0
    %919 = vmatprep.subr.mxu0 0.0
    %920 = vmatpush1.msra.mxu0 0.0
    %921 = vmatprep.subr.mxu0 0.0
    %922 = vmatpush1.msra.mxu0 0.0
    %923 = vmatprep.subr.mxu0 0.0
    %924 = vmatpush1.msra.mxu0 0.0
    %925 = vmatprep.mubr.f32.mxu0 0.0
    %926 = vmatmul.mubr.f32.gmra.mrb[0].mxu0 %v812
    %v927 = vpop.f32.mrb[0].mxu0
    %v928 = vadd.f32 %v449, %v927
    %v929 = vpop.f32.mrb[0].mxu0
    %v930 = vadd.f32 %v453, %v929
    %931 = vdwg.mxu0
    %932 = vmatprep.subr.mxu0 0.0
    %933 = vmatpush1.msra.mxu0 %v815
    %934 = vmatprep.subr.mxu0 0.0
    %935 = vmatpush1.msra.mxu0 %v818
    %936 = vmatprep.subr.mxu0 0.0
    %937 = vmatpush1.msra.mxu0 %v821
    %938 = vmatprep.subr.mxu0 0.0
    %939 = vmatpush1.msra.mxu0 %v824
    %940 = vmatprep.subr.mxu0 0.0
    %941 = vmatpush1.msra.mxu0 %v827
    %942 = vmatprep.subr.mxu0 0.0
    %943 = vmatpush1.msra.mxu0 %v830
    %944 = vmatprep.subr.mxu0 0.0
    %945 = vmatpush1.msra.mxu0 %v833
    %946 = vmatprep.subr.mxu0 0.0
    %947 = vmatpush1.msra.mxu0 %v836
    %948 = vmatprep.subr.mxu0 0.0
    %949 = vmatpush1.msra.mxu0 %v839
    %950 = vmatprep.subr.mxu0 0.0
    %951 = vmatpush1.msra.mxu0 %v842
    %952 = vmatprep.subr.mxu0 0.0
    %953 = vmatpush1.msra.mxu0 %v845
    %954 = vmatprep.subr.mxu0 0.0
    %955 = vmatpush1.msra.mxu0 %v848
    %956 = vmatprep.subr.mxu0 0.0
    %957 = vmatpush1.msra.mxu0 %v851
    %958 = vmatprep.subr.mxu0 0.0
    %959 = vmatpush1.msra.mxu0 %v854
    %960 = vmatprep.subr.mxu0 0.0
    %961 = vmatpush1.msra.mxu0 %v857
    %962 = vmatprep.subr.mxu0 0.0
    %963 = vmatpush1.msra.mxu0 %v860
    %964 = vmatprep.subr.mxu0 0.0
    %965 = vmatpush1.msra.mxu0 0.0
    %966 = vmatprep.subr.mxu0 0.0
    %967 = vmatpush1.msra.mxu0 0.0
    %968 = vmatprep.subr.mxu0 0.0
    %969 = vmatpush1.msra.mxu0 0.0
    %970 = vmatprep.subr.mxu0 0.0
    %971 = vmatpush1.msra.mxu0 0.0
    %972 = vmatprep.subr.mxu0 0.0
    %973 = vmatpush1.msra.mxu0 0.0
    %974 = vmatprep.subr.mxu0 0.0
    %975 = vmatpush1.msra.mxu0 0.0
    %976 = vmatprep.subr.mxu0 0.0
    %977 = vmatpush1.msra.mxu0 0.0
    %978 = vmatprep.subr.mxu0 0.0
    %979 = vmatpush1.msra.mxu0 0.0
    %980 = vmatprep.subr.mxu0 0.0
    %981 = vmatpush1.msra.mxu0 0.0
    %982 = vmatprep.subr.mxu0 0.0
    %983 = vmatpush1.msra.mxu0 0.0
    %984 = vmatprep.subr.mxu0 0.0
    %985 = vmatpush1.msra.mxu0 0.0
    %986 = vmatprep.subr.mxu0 0.0
    %987 = vmatpush1.msra.mxu0 0.0
    %988 = vmatprep.subr.mxu0 0.0
    %989 = vmatpush1.msra.mxu0 0.0
    %990 = vmatprep.subr.mxu0 0.0
    %991 = vmatpush1.msra.mxu0 0.0
    %992 = vmatprep.subr.mxu0 0.0
    %993 = vmatpush1.msra.mxu0 0.0
    %994 = vmatprep.subr.mxu0 0.0
    %995 = vmatpush1.msra.mxu0 0.0
    %996 = vmatprep.mubr.f32.mxu0 0.0
    %997 = vmatmul.mubr.f32.gmra.mrb[0].mxu0 %v812
    %v998 = vpop.f32.mrb[0].mxu0
    %v999 = vadd.f32 %v457, %v998
    %v1000 = vpop.f32.mrb[0].mxu0
    %1001 = vdwg.mxu0
    %v1002 = vadd.f32 %v928, %v787
    %v1003 = vmul.f32 %v1002, 0.5
    %v1004 = vtanh.pop %v1003
    %v1005 = vadd.f32 %v1004, 1.0
    %v1006 = vmul.f32 %v1005, 0.5
    %v1007 = vadd.f32 %v930, %v788
    %v1008 = vmul.f32 %v1007, 0.5
    %v1009 = vtanh.pop %v1008
    %v1010 = vadd.f32 %v1009, 1.0
    %v1011 = vmul.f32 %v1010, 0.5
    %v1012 = vmul.f32 %v1006, %v789
    %v1013 = vadd.f32 %v999, %v1012
    %v1014 = vtanh.pop %v1013
    %v1015 = vsub.f32 1.0, %v1011
    %v1016 = vmul.f32 %v1015, %v1014
    %v1017 = vmul.f32 %v1011, %v462
    %v1018 = vadd.f32 %v1016, %v1017
    %1019 = vmatprep.subr.mxu0 %v464
    %1020 = vmatpush1.msra.mxu0 %v463
    %1021 = vmatprep.subr.mxu0 %v470
    %1022 = vmatpush1.msra.mxu0 %v469
    %1023 = vmatprep.subr.mxu0 %v476
    %1024 = vmatpush1.msra.mxu0 %v475
    %1025 = vmatprep.subr.mxu0 %v482
    %1026 = vmatpush1.msra.mxu0 %v481
    %1027 = vmatprep.subr.mxu0 %v488
    %1028 = vmatpush1.msra.mxu0 %v487
    %1029 = vmatprep.subr.mxu0 %v494
    %1030 = vmatpush1.msra.mxu0 %v493
    %1031 = vmatprep.subr.mxu0 %v500
    %1032 = vmatpush1.msra.mxu0 %v499
    %1033 = vmatprep.subr.mxu0 %v506
    %1034 = vmatpush1.msra.mxu0 %v505
    %1035 = vmatprep.subr.mxu0 %v512
    %1036 = vmatpush1.msra.mxu0 %v511
    %1037 = vmatprep.subr.mxu0 %v518
    %1038 = vmatpush1.msra.mxu0 %v517
    %1039 = vmatprep.subr.mxu0 %v524
    %1040 = vmatpush1.msra.mxu0 %v523
    %1041 = vmatprep.subr.mxu0 %v530
    %1042 = vmatpush1.msra.mxu0 %v529
    %1043 = vmatprep.subr.mxu0 %v536
    %1044 = vmatpush1.msra.mxu0 %v535
    %1045 = vmatprep.subr.mxu0 %v542
    %1046 = vmatpush1.msra.mxu0 %v541
    %1047 = vmatprep.subr.mxu0 %v548
    %1048 = vmatpush1.msra.mxu0 %v547
    %1049 = vmatprep.subr.mxu0 %v554
    %1050 = vmatpush1.msra.mxu0 %v553
    %1051 = vmatprep.subr.mxu0 0.0
    %1052 = vmatpush1.msra.mxu0 0.0
    %1053 = vmatprep.subr.mxu0 0.0
    %1054 = vmatpush1.msra.mxu0 0.0
    %1055 = vmatprep.subr.mxu0 0.0
    %1056 = vmatpush1.msra.mxu0 0.0
    %1057 = vmatprep.subr.mxu0 0.0
    %1058 = vmatpush1.msra.mxu0 0.0
    %1059 = vmatprep.subr.mxu0 0.0
    %1060 = vmatpush1.msra.mxu0 0.0
    %1061 = vmatprep.subr.mxu0 0.0
    %1062 = vmatpush1.msra.mxu0 0.0
    %1063 = vmatprep.subr.mxu0 0.0
    %1064 = vmatpush1.msra.mxu0 0.0
    %1065 = vmatprep.subr.mxu0 0.0
    %1066 = vmatpush1.msra.mxu0 0.0
    %1067 = vmatprep.subr.mxu0 0.0
    %1068 = vmatpush1.msra.mxu0 0.0
    %1069 = vmatprep.subr.mxu0 0.0
    %1070 = vmatpush1.msra.mxu0 0.0
    %1071 = vmatprep.subr.mxu0 0.0
    %1072 = vmatpush1.msra.mxu0 0.0
    %1073 = vmatprep.subr.mxu0 0.0
    %1074 = vmatpush1.msra.mxu0 0.0
    %1075 = vmatprep.subr.mxu0 0.0
    %1076 = vmatpush1.msra.mxu0 0.0
    %1077 = vmatprep.subr.mxu0 0.0
    %1078 = vmatpush1.msra.mxu0 0.0
    %1079 = vmatprep.subr.mxu0 0.0
    %1080 = vmatpush1.msra.mxu0 0.0
    %1081 = vmatprep.subr.mxu0 0.0
    %1082 = vmatpush1.msra.mxu0 0.0
    %1083 = vmatprep.mubr.f32.mxu0 0.0
    %1084 = vmatmul.mubr.f32.gmra.mrb[0].mxu0 %v812
    %v1085 = vpop.f32.mrb[0].mxu0
    %v1086 = vadd.f32 0.0, %v1085
    %v1087 = vpop.f32.mrb[0].mxu0
    %v1088 = vadd.f32 0.0, %v1087
    %1089 = vmatprep.mubr.f32.mxu0 0.0
    %1090 = vmatmul.mubr.f32.gmra.mrb[0].mxu0 %v1018
    %v1091 = vpop.f32.mrb[0].mxu0
    %v1092 = vpop.f32.mrb[0].mxu0
    %1093 = vdwg.mxu0
    %1094 = vmatprep.subr.mxu0 %v466
    %1095 = vmatpush1.msra.mxu0 %v465
    %1096 = vmatprep.subr.mxu0 %v472
    %1097 = vmatpush1.msra.mxu0 %v471
    %1098 = vmatprep.subr.mxu0 %v478
    %1099 = vmatpush1.msra.mxu0 %v477
    %1100 = vmatprep.subr.mxu0 %v484
    %1101 = vmatpush1.msra.mxu0 %v483
    %1102 = vmatprep.subr.mxu0 %v490
    %1103 = vmatpush1.msra.mxu0 %v489
    %1104 = vmatprep.subr.mxu0 %v496
    %1105 = vmatpush1.msra.mxu0 %v495
    %1106 = vmatprep.subr.mxu0 %v502
    %1107 = vmatpush1.msra.mxu0 %v501
    %1108 = vmatprep.subr.mxu0 %v508
    %1109 = vmatpush1.msra.mxu0 %v507
    %1110 = vmatprep.subr.mxu0 %v514
    %1111 = vmatpush1.msra.mxu0 %v513
    %1112 = vmatprep.subr.mxu0 %v520
    %1113 = vmatpush1.msra.mxu0 %v519
    %1114 = vmatprep.subr.mxu0 %v526
    %1115 = vmatpush1.msra.mxu0 %v525
    %1116 = vmatprep.subr.mxu0 %v532
    %1117 = vmatpush1.msra.mxu0 %v531
    %1118 = vmatprep.subr.mxu0 %v538
    %1119 = vmatpush1.msra.mxu0 %v537
    %1120 = vmatprep.subr.mxu0 %v544
    %1121 = vmatpush1.msra.mxu0 %v543
    %1122 = vmatprep.subr.mxu0 %v550
    %1123 = vmatpush1.msra.mxu0 %v549
    %1124 = vmatprep.subr.mxu0 %v556
    %1125 = vmatpush1.msra.mxu0 %v555
    %1126 = vmatprep.subr.mxu0 0.0
    %1127 = vmatpush1.msra.mxu0 0.0
    %1128 = vmatprep.subr.mxu0 0.0
    %1129 = vmatpush1.msra.mxu0 0.0
    %1130 = vmatprep.subr.mxu0 0.0
    %1131 = vmatpush1.msra.mxu0 0.0
    %1132 = vmatprep.subr.mxu0 0.0
    %1133 = vmatpush1.msra.mxu0 0.0
    %1134 = vmatprep.subr.mxu0 0.0
    %1135 = vmatpush1.msra.mxu0 0.0
    %1136 = vmatprep.subr.mxu0 0.0
    %1137 = vmatpush1.msra.mxu0 0.0
    %1138 = vmatprep.subr.mxu0 0.0
    %1139 = vmatpush1.msra.mxu0 0.0
    %1140 = vmatprep.subr.mxu0 0.0
    %1141 = vmatpush1.msra.mxu0 0.0
    %1142 = vmatprep.subr.mxu0 0.0
    %1143 = vmatpush1.msra.mxu0 0.0
    %1144 = vmatprep.subr.mxu0 0.0
    %1145 = vmatpush1.msra.mxu0 0.0
    %1146 = vmatprep.subr.mxu0 0.0
    %1147 = vmatpush1.msra.mxu0 0.0
    %1148 = vmatprep.subr.mxu0 0.0
    %1149 = vmatpush1.msra.mxu0 0.0
    %1150 = vmatprep.subr.mxu0 0.0
    %1151 = vmatpush1.msra.mxu0 0.0
    %1152 = vmatprep.subr.mxu0 0.0
    %1153 = vmatpush1.msra.mxu0 0.0
    %1154 = vmatprep.subr.mxu0 0.0
    %1155 = vmatpush1.msra.mxu0 0.0
    %1156 = vmatprep.subr.mxu0 0.0
    %1157 = vmatpush1.msra.mxu0 0.0
    %1158 = vmatprep.mubr.f32.mxu0 0.0
    %1159 = vmatmul.mubr.f32.gmra.mrb[0].mxu0 %v812
    %v1160 = vpop.f32.mrb[0].mxu0
    %v1161 = vadd.f32 0.0, %v1160
    %v1162 = vpop.f32.mrb[0].mxu0
    %1163 = vmatprep.mubr.f32.mxu0 0.0
    %1164 = vmatmul.mubr.f32.gmra.mrb[0].mxu0 %v1018
    %v1165 = vpop.f32.mrb[0].mxu0
    %v1166 = vpop.f32.mrb[0].mxu0
    %v1167 = vadd.f32 0.0, %v1166
    %1168 = vdwg.mxu0
    %1169 = vmatprep.subr.mxu0 %v468
    %1170 = vmatpush1.msra.mxu0 %v467
    %1171 = vmatprep.subr.mxu0 %v474
    %1172 = vmatpush1.msra.mxu0 %v473
    %1173 = vmatprep.subr.mxu0 %v480
    %1174 = vmatpush1.msra.mxu0 %v479
    %1175 = vmatprep.subr.mxu0 %v486
    %1176 = vmatpush1.msra.mxu0 %v485
    %1177 = vmatprep.subr.mxu0 %v492
    %1178 = vmatpush1.msra.mxu0 %v491
    %1179 = vmatprep.subr.mxu0 %v498
    %1180 = vmatpush1.msra.mxu0 %v497
    %1181 = vmatprep.subr.mxu0 %v504
    %1182 = vmatpush1.msra.mxu0 %v503
    %1183 = vmatprep.subr.mxu0 %v510
    %1184 = vmatpush1.msra.mxu0 %v509
    %1185 = vmatprep.subr.mxu0 %v516
    %1186 = vmatpush1.msra.mxu0 %v515
    %1187 = vmatprep.subr.mxu0 %v522
    %1188 = vmatpush1.msra.mxu0 %v521
    %1189 = vmatprep.subr.mxu0 %v528
    %1190 = vmatpush1.msra.mxu0 %v527
    %1191 = vmatprep.subr.mxu0 %v534
    %1192 = vmatpush1.msra.mxu0 %v533
    %1193 = vmatprep.subr.mxu0 %v540
    %1194 = vmatpush1.msra.mxu0 %v539
    %1195 = vmatprep.subr.mxu0 %v546
    %1196 = vmatpush1.msra.mxu0 %v545
    %1197 = vmatprep.subr.mxu0 %v552
    %1198 = vmatpush1.msra.mxu0 %v551
    %1199 = vmatprep.subr.mxu0 %v558
    %1200 = vmatpush1.msra.mxu0 %v557
    %1201 = vmatprep.subr.mxu0 0.0
    %1202 = vmatpush1.msra.mxu0 0.0
    %1203 = vmatprep.subr.mxu0 0.0
    %1204 = vmatpush1.msra.mxu0 0.0
    %1205 = vmatprep.subr.mxu0 0.0
    %1206 = vmatpush1.msra.mxu0 0.0
    %1207 = vmatprep.subr.mxu0 0.0
    %1208 = vmatpush1.msra.mxu0 0.0
    %1209 = vmatprep.subr.mxu0 0.0
    %1210 = vmatpush1.msra.mxu0 0.0
    %1211 = vmatprep.subr.mxu0 0.0
    %1212 = vmatpush1.msra.mxu0 0.0
    %1213 = vmatprep.subr.mxu0 0.0
    %1214 = vmatpush1.msra.mxu0 0.0
    %1215 = vmatprep.subr.mxu0 0.0
    %1216 = vmatpush1.msra.mxu0 0.0
    %1217 = vmatprep.subr.mxu0 0.0
    %1218 = vmatpush1.msra.mxu0 0.0
    %1219 = vmatprep.subr.mxu0 0.0
    %1220 = vmatpush1.msra.mxu0 0.0
    %1221 = vmatprep.subr.mxu0 0.0
    %1222 = vmatpush1.msra.mxu0 0.0
    %1223 = vmatprep.subr.mxu0 0.0
    %1224 = vmatpush1.msra.mxu0 0.0
    %1225 = vmatprep.subr.mxu0 0.0
    %1226 = vmatpush1.msra.mxu0 0.0
    %1227 = vmatprep.subr.mxu0 0.0
    %1228 = vmatpush1.msra.mxu0 0.0
    %1229 = vmatprep.subr.mxu0 0.0
    %1230 = vmatpush1.msra.mxu0 0.0
    %1231 = vmatprep.subr.mxu0 0.0
    %1232 = vmatpush1.msra.mxu0 0.0
    %1233 = vmatprep.mubr.f32.mxu0 0.0
    %1234 = vmatmul.mubr.f32.gmra.mrb[0].mxu0 %v812
    %v1235 = vpop.f32.mrb[0].mxu0
    %v1236 = vpop.f32.mrb[0].mxu0
    %1237 = vmatprep.mubr.f32.mxu0 0.0
    %1238 = vmatmul.mubr.f32.gmra.mrb[0].mxu0 %v1018
    %v1239 = vpop.f32.mrb[0].mxu0
    %v1240 = vadd.f32 0.0, %v1239
    %v1241 = vpop.f32.mrb[0].mxu0
    %v1242 = vadd.f32 0.0, %v1241
    %1243 = vdwg.mxu0
    %v1244 = vadd.f32 %v1086, %v415
    %v1245 = vadd.f32 %v1088, %v419
    %v1246 = vadd.f32 %v1161, %v423
    %v1247 = vadd.f32 %v1167, %v432
    %v1248 = vadd.f32 %v1240, %v436
    %v1249 = vadd.f32 %v1242, %v440
    %s1250 = smul.u32 1, 3
    %s1251 = smul.addr %s1250, 8
    %s1252 = scalar_lea.vmem [#allocation2], %s1251
    %v1253 = vld [vmem:[%s1252] sm:$0xff]
    %v1254 = vld [vmem:[%s1252 + $0x8] sm:$0xff]
    %v1255 = vld [vmem:[%s1252 + $0x10] sm:$0xff]
    %v1256 = vadd.f32 %v1253, %v1244
    %v1257 = vmul.f32 %v1256, 0.5
    %v1258 = vtanh.pop %v1257
    %v1259 = vadd.f32 %v1258, 1.0
    %v1260 = vmul.f32 %v1259, 0.5
    %v1261 = vadd.f32 %v1254, %v1245
    %v1262 = vmul.f32 %v1261, 0.5
    %v1263 = vtanh.pop %v1262
    %v1264 = vadd.f32 %v1263, 1.0
    %v1265 = vmul.f32 %v1264, 0.5
    %v1266 = vmul.f32 %v1260, %v1246
    %v1267 = vadd.f32 %v1255, %v1266
    %v1268 = vtanh.pop %v1267
    %v1269 = vsub.f32 1.0, %v1265
    %v1270 = vmul.f32 %v1269, %v1268
    %v1271 = vmul.f32 %v1265, %v812
    %v1272 = vadd.f32 %v1270, %v1271
    %1273 = vmatprep.subr.mxu0 %v814
    %1274 = vmatpush1.msra.mxu0 %v813
    %1275 = vmatprep.subr.mxu0 %v817
    %1276 = vmatpush1.msra.mxu0 %v816
    %1277 = vmatprep.subr.mxu0 %v820
    %1278 = vmatpush1.msra.mxu0 %v819
    %1279 = vmatprep.subr.mxu0 %v823
    %1280 = vmatpush1.msra.mxu0 %v822
    %1281 = vmatprep.subr.mxu0 %v826
    %1282 = vmatpush1.msra.mxu0 %v825
    %1283 = vmatprep.subr.mxu0 %v829
    %1284 = vmatpush1.msra.mxu0 %v828
    %1285 = vmatprep.subr.mxu0 %v832
    %1286 = vmatpush1.msra.mxu0 %v831
    %1287 = vmatprep.subr.mxu0 %v835
    %1288 = vmatpush1.msra.mxu0 %v834
    %1289 = vmatprep.subr.mxu0 %v838
    %1290 = vmatpush1.msra.mxu0 %v837
    %1291 = vmatprep.subr.mxu0 %v841
    %1292 = vmatpush1.msra.mxu0 %v840
    %1293 = vmatprep.subr.mxu0 %v844
    %1294 = vmatpush1.msra.mxu0 %v843
    %1295 = vmatprep.subr.mxu0 %v847
    %1296 = vmatpush1.msra.mxu0 %v846
    %1297 = vmatprep.subr.mxu0 %v850
    %1298 = vmatpush1.msra.mxu0 %v849
    %1299 = vmatprep.subr.mxu0 %v853
    %1300 = vmatpush1.msra.mxu0 %v852
    %1301 = vmatprep.subr.mxu0 %v856
    %1302 = vmatpush1.msra.mxu0 %v855
    %1303 = vmatprep.subr.mxu0 %v859
    %1304 = vmatpush1.msra.mxu0 %v858
    %1305 = vmatprep.subr.mxu0 0.0
    %1306 = vmatpush1.msra.mxu0 0.0
    %1307 = vmatprep.subr.mxu0 0.0
    %1308 = vmatpush1.msra.mxu0 0.0
    %1309 = vmatprep.subr.mxu0 0.0
    %1310 = vmatpush1.msra.mxu0 0.0
    %1311 = vmatprep.subr.mxu0 0.0
    %1312 = vmatpush1.msra.mxu0 0.0
    %1313 = vmatprep.subr.mxu0 0.0
    %1314 = vmatpush1.msra.mxu0 0.0
    %1315 = vmatprep.subr.mxu0 0.0
    %1316 = vmatpush1.msra.mxu0 0.0
    %1317 = vmatprep.subr.mxu0 0.0
    %1318 = vmatpush1.msra.mxu0 0.0
    %1319 = vmatprep.subr.mxu0 0.0
    %1320 = vmatpush1.msra.mxu0 0.0
    %1321 = vmatprep.subr.mxu0 0.0
    %1322 = vmatpush1.msra.mxu0 0.0
    %1323 = vmatprep.subr.mxu0 0.0
    %1324 = vmatpush1.msra.mxu0 0.0
    %1325 = vmatprep.subr.mxu0 0.0
    %1326 = vmatpush1.msra.mxu0 0.0
    %1327 = vmatprep.subr.mxu0 0.0
    %1328 = vmatpush1.msra.mxu0 0.0
    %1329 = vmatprep.subr.mxu0 0.0
    %1330 = vmatpush1.msra.mxu0 0.0
    %1331 = vmatprep.subr.mxu0 0.0
    %1332 = vmatpush1.msra.mxu0 0.0
    %1333 = vmatprep.subr.mxu0 0.0
    %1334 = vmatpush1.msra.mxu0 0.0
    %1335 = vmatprep.subr.mxu0 0.0
    %1336 = vmatpush1.msra.mxu0 0.0
    %1337 = vmatprep.mubr.f32.mxu0 0.0
    %1338 = vmatmul.mubr.f32.gmra.mrb[0].mxu0 %v1272
    %v1339 = vpop.f32.mrb[0].mxu0
    %v1340 = vadd.f32 %v449, %v1339
    %v1341 = vpop.f32.mrb[0].mxu0
    %v1342 = vadd.f32 %v453, %v1341
    %1343 = vdwg.mxu0
    %1344 = vmatprep.subr.mxu0 0.0
    %1345 = vmatpush1.msra.mxu0 %v815
    %1346 = vmatprep.subr.mxu0 0.0
    %1347 = vmatpush1.msra.mxu0 %v818
    %1348 = vmatprep.subr.mxu0 0.0
    %1349 = vmatpush1.msra.mxu0 %v821
    %1350 = vmatprep.subr.mxu0 0.0
    %1351 = vmatpush1.msra.mxu0 %v824
    %1352 = vmatprep.subr.mxu0 0.0
    %1353 = vmatpush1.msra.mxu0 %v827
    %1354 = vmatprep.subr.mxu0 0.0
    %1355 = vmatpush1.msra.mxu0 %v830
    %1356 = vmatprep.subr.mxu0 0.0
    %1357 = vmatpush1.msra.mxu0 %v833
    %1358 = vmatprep.subr.mxu0 0.0
    %1359 = vmatpush1.msra.mxu0 %v836
    %1360 = vmatprep.subr.mxu0 0.0
    %1361 = vmatpush1.msra.mxu0 %v839
    %1362 = vmatprep.subr.mxu0 0.0
    %1363 = vmatpush1.msra.mxu0 %v842
    %1364 = vmatprep.subr.mxu0 0.0
    %1365 = vmatpush1.msra.mxu0 %v845
    %1366 = vmatprep.subr.mxu0 0.0
    %1367 = vmatpush1.msra.mxu0 %v848
    %1368 = vmatprep.subr.mxu0 0.0
    %1369 = vmatpush1.msra.mxu0 %v851
    %1370 = vmatprep.subr.mxu0 0.0
    %1371 = vmatpush1.msra.mxu0 %v854
    %1372 = vmatprep.subr.mxu0 0.0
    %1373 = vmatpush1.msra.mxu0 %v857
    %1374 = vmatprep.subr.mxu0 0.0
    %1375 = vmatpush1.msra.mxu0 %v860
    %1376 = vmatprep.subr.mxu0 0.0
    %1377 = vmatpush1.msra.mxu0 0.0
    %1378 = vmatprep.subr.mxu0 0.0
    %1379 = vmatpush1.msra.mxu0 0.0
    %1380 = vmatprep.subr.mxu0 0.0
    %1381 = vmatpush1.msra.mxu0 0.0
    %1382 = vmatprep.subr.mxu0 0.0
    %1383 = vmatpush1.msra.mxu0 0.0
    %1384 = vmatprep.subr.mxu0 0.0
    %1385 = vmatpush1.msra.mxu0 0.0
    %1386 = vmatprep.subr.mxu0 0.0
    %1387 = vmatpush1.msra.mxu0 0.0
    %1388 = vmatprep.subr.mxu0 0.0
    %1389 = vmatpush1.msra.mxu0 0.0
    %1390 = vmatprep.subr.mxu0 0.0
    %1391 = vmatpush1.msra.mxu0 0.0
    %1392 = vmatprep.subr.mxu0 0.0
    %1393 = vmatpush1.msra.mxu0 0.0
    %1394 = vmatprep.subr.mxu0 0.0
    %1395 = vmatpush1.msra.mxu0 0.0
    %1396 = vmatprep.subr.mxu0 0.0
    %1397 = vmatpush1.msra.mxu0 0.0
    %1398 = vmatprep.subr.mxu0 0.0
    %1399 = vmatpush1.msra.mxu0 0.0
    %1400 = vmatprep.subr.mxu0 0.0
    %1401 = vmatpush1.msra.mxu0 0.0
    %1402 = vmatprep.subr.mxu0 0.0
    %1403 = vmatpush1.msra.mxu0 0.0
    %1404 = vmatprep.subr.mxu0 0.0
    %1405 = vmatpush1.msra.mxu0 0.0
    %1406 = vmatprep.subr.mxu0 0.0
    %1407 = vmatpush1.msra.mxu0 0.0
    %1408 = vmatprep.mubr.f32.mxu0 0.0
    %1409 = vmatmul.mubr.f32.gmra.mrb[0].mxu0 %v1272
    %v1410 = vpop.f32.mrb[0].mxu0
    %v1411 = vadd.f32 %v457, %v1410
    %v1412 = vpop.f32.mrb[0].mxu0
    %1413 = vdwg.mxu0
    %v1414 = vadd.f32 %v1340, %v1247
    %v1415 = vmul.f32 %v1414, 0.5
    %v1416 = vtanh.pop %v1415
    %v1417 = vadd.f32 %v1416, 1.0
    %v1418 = vmul.f32 %v1417, 0.5
    %v1419 = vadd.f32 %v1342, %v1248
    %v1420 = vmul.f32 %v1419, 0.5
    %v1421 = vtanh.pop %v1420
    %v1422 = vadd.f32 %v1421, 1.0
    %v1423 = vmul.f32 %v1422, 0.5
    %v1424 = vmul.f32 %v1418, %v1249
    %v1425 = vadd.f32 %v1411, %v1424
    %v1426 = vtanh.pop %v1425
    %v1427 = vsub.f32 1.0, %v1423
    %v1428 = vmul.f32 %v1427, %v1426
    %v1429 = vmul.f32 %v1423, %v1018
    %v1430 = vadd.f32 %v1428, %v1429
    %1431 = vmatprep.subr.mxu0 %v464
    %1432 = vmatpush1.msra.mxu0 %v463
    %1433 = vmatprep.subr.mxu0 %v470
    %1434 = vmatpush1.msra.mxu0 %v469
    %1435 = vmatprep.subr.mxu0 %v476
    %1436 = vmatpush1.msra.mxu0 %v475
    %1437 = vmatprep.subr.mxu0 %v482
    %1438 = vmatpush1.msra.mxu0 %v481
    %1439 = vmatprep.subr.mxu0 %v488
    %1440 = vmatpush1.msra.mxu0 %v487
    %1441 = vmatprep.subr.mxu0 %v494
    %1442 = vmatpush1.msra.mxu0 %v493
    %1443 = vmatprep.subr.mxu0 %v500
    %1444 = vmatpush1.msra.mxu0 %v499
    %1445 = vmatprep.subr.mxu0 %v506
    %1446 = vmatpush1.msra.mxu0 %v505
    %1447 = vmatprep.subr.mxu0 %v512
    %1448 = vmatpush1.msra.mxu0 %v511
    %1449 = vmatprep.subr.mxu0 %v518
    %1450 = vmatpush1.msra.mxu0 %v517
    %1451 = vmatprep.subr.mxu0 %v524
    %1452 = vmatpush1.msra.mxu0 %v523
    %1453 = vmatprep.subr.mxu0 %v530
    %1454 = vmatpush1.msra.mxu0 %v529
    %1455 = vmatprep.subr.mxu0 %v536
    %1456 = vmatpush1.msra.mxu0 %v535
    %1457 = vmatprep.subr.mxu0 %v542
    %1458 = vmatpush1.msra.mxu0 %v541
    %1459 = vmatprep.subr.mxu0 %v548
    %1460 = vmatpush1.msra.mxu0 %v547
    %1461 = vmatprep.subr.mxu0 %v554
    %1462 = vmatpush1.msra.mxu0 %v553
    %1463 = vmatprep.subr.mxu0 0.0
    %1464 = vmatpush1.msra.mxu0 0.0
    %1465 = vmatprep.subr.mxu0 0.0
    %1466 = vmatpush1.msra.mxu0 0.0
    %1467 = vmatprep.subr.mxu0 0.0
    %1468 = vmatpush1.msra.mxu0 0.0
    %1469 = vmatprep.subr.mxu0 0.0
    %1470 = vmatpush1.msra.mxu0 0.0
    %1471 = vmatprep.subr.mxu0 0.0
    %1472 = vmatpush1.msra.mxu0 0.0
    %1473 = vmatprep.subr.mxu0 0.0
    %1474 = vmatpush1.msra.mxu0 0.0
    %1475 = vmatprep.subr.mxu0 0.0
    %1476 = vmatpush1.msra.mxu0 0.0
    %1477 = vmatprep.subr.mxu0 0.0
    %1478 = vmatpush1.msra.mxu0 0.0
    %1479 = vmatprep.subr.mxu0 0.0
    %1480 = vmatpush1.msra.mxu0 0.0
    %1481 = vmatprep.subr.mxu0 0.0
    %1482 = vmatpush1.msra.mxu0 0.0
    %1483 = vmatprep.subr.mxu0 0.0
    %1484 = vmatpush1.msra.mxu0 0.0
    %1485 = vmatprep.subr.mxu0 0.0
    %1486 = vmatpush1.msra.mxu0 0.0
    %1487 = vmatprep.subr.mxu0 0.0
    %1488 = vmatpush1.msra.mxu0 0.0
    %1489 = vmatprep.subr.mxu0 0.0
    %1490 = vmatpush1.msra.mxu0 0.0
    %1491 = vmatprep.subr.mxu0 0.0
    %1492 = vmatpush1.msra.mxu0 0.0
    %1493 = vmatprep.subr.mxu0 0.0
    %1494 = vmatpush1.msra.mxu0 0.0
    %1495 = vmatprep.mubr.f32.mxu0 0.0
    %1496 = vmatmul.mubr.f32.gmra.mrb[0].mxu0 %v1272
    %v1497 = vpop.f32.mrb[0].mxu0
    %v1498 = vadd.f32 0.0, %v1497
    %v1499 = vpop.f32.mrb[0].mxu0
    %v1500 = vadd.f32 0.0, %v1499
    %1501 = vmatprep.mubr.f32.mxu0 0.0
    %1502 = vmatmul.mubr.f32.gmra.mrb[0].mxu0 %v1430
    %v1503 = vpop.f32.mrb[0].mxu0
    %v1504 = vpop.f32.mrb[0].mxu0
    %1505 = vdwg.mxu0
    %1506 = vmatprep.subr.mxu0 %v466
    %1507 = vmatpush1.msra.mxu0 %v465
    %1508 = vmatprep.subr.mxu0 %v472
    %1509 = vmatpush1.msra.mxu0 %v471
    %1510 = vmatprep.subr.mxu0 %v478
    %1511 = vmatpush1.msra.mxu0 %v477
    %1512 = vmatprep.subr.mxu0 %v484
    %1513 = vmatpush1.msra.mxu0 %v483
    %1514 = vmatprep.subr.mxu0 %v490
    %1515 = vmatpush1.msra.mxu0 %v489
    %1516 = vmatprep.subr.mxu0 %v496
    %1517 = vmatpush1.msra.mxu0 %v495
    %1518 = vmatprep.subr.mxu0 %v502
    %1519 = vmatpush1.msra.mxu0 %v501
    %1520 = vmatprep.subr.mxu0 %v508
    %1521 = vmatpush1.msra.mxu0 %v507
    %1522 = vmatprep.subr.mxu0 %v514
    %1523 = vmatpush1.msra.mxu0 %v513
    %1524 = vmatprep.subr.mxu0 %v520
    %1525 = vmatpush1.msra.mxu0 %v519
    %1526 = vmatprep.subr.mxu0 %v526
    %1527 = vmatpush1.msra.mxu0 %v525
    %1528 = vmatprep.subr.mxu0 %v532
    %1529 = vmatpush1.msra.mxu0 %v531
    %1530 = vmatprep.subr.mxu0 %v538
    %1531 = vmatpush1.msra.mxu0 %v537
    %1532 = vmatprep.subr.mxu0 %v544
    %1533 = vmatpush1.msra.mxu0 %v543
    %1534 = vmatprep.subr.mxu0 %v550
    %1535 = vmatpush1.msra.mxu0 %v549
    %1536 = vmatprep.subr.mxu0 %v556
    %1537 = vmatpush1.msra.mxu0 %v555
    %1538 = vmatprep.subr.mxu0 0.0
    %1539 = vmatpush1.msra.mxu0 0.0
    %1540 = vmatprep.subr.mxu0 0.0
    %1541 = vmatpush1.msra.mxu0 0.0
    %1542 = vmatprep.subr.mxu0 0.0
    %1543 = vmatpush1.msra.mxu0 0.0
    %1544 = vmatprep.subr.mxu0 0.0
    %1545 = vmatpush1.msra.mxu0 0.0
    %1546 = vmatprep.subr.mxu0 0.0
    %1547 = vmatpush1.msra.mxu0 0.0
    %1548 = vmatprep.subr.mxu0 0.0
    %1549 = vmatpush1.msra.mxu0 0.0
    %1550 = vmatprep.subr.mxu0 0.0
    %1551 = vmatpush1.msra.mxu0 0.0
    %1552 = vmatprep.subr.mxu0 0.0
    %1553 = vmatpush1.msra.mxu0 0.0
    %1554 = vmatprep.subr.mxu0 0.0
    %1555 = vmatpush1.msra.mxu0 0.0
    %1556 = vmatprep.subr.mxu0 0.0
    %1557 = vmatpush1.msra.mxu0 0.0
    %1558 = vmatprep.subr.mxu0 0.0
    %1559 = vmatpush1.msra.mxu0 0.0
    %1560 = vmatprep.subr.mxu0 0.0
    %1561 = vmatpush1.msra.mxu0 0.0
    %1562 = vmatprep.subr.mxu0 0.0
    %1563 = vmatpush1.msra.mxu0 0.0
    %1564 = vmatprep.subr.mxu0 0.0
    %1565 = vmatpush1.msra.mxu0 0.0
    %1566 = vmatprep.subr.mxu0 0.0
    %1567 = vmatpush1.msra.mxu0 0.0
    %1568 = vmatprep.subr.mxu0 0.0
    %1569 = vmatpush1.msra.mxu0 0.0
    %1570 = vmatprep.mubr.f32.mxu0 0.0
    %1571 = vmatmul.mubr.f32.gmra.mrb[0].mxu0 %v1272
    %v1572 = vpop.f32.mrb[0].mxu0
    %v1573 = vadd.f32 0.0, %v1572
    %v1574 = vpop.f32.mrb[0].mxu0
    %1575 = vmatprep.mubr.f32.mxu0 0.0
    %1576 = vmatmul.mubr.f32.gmra.mrb[0].mxu0 %v1430
    %v1577 = vpop.f32.mrb[0].mxu0
    %v1578 = vpop.f32.mrb[0].mxu0
    %v1579 = vadd.f32 0.0, %v1578
    %1580 = vdwg.mxu0
    %1581 = vmatprep.subr.mxu0 %v468
    %1582 = vmatpush1.msra.mxu0 %v467
    %1583 = vmatprep.subr.mxu0 %v474
    %1584 = vmatpush1.msra.mxu0 %v473
    %1585 = vmatprep.subr.mxu0 %v480
    %1586 = vmatpush1.msra.mxu0 %v479
    %1587 = vmatprep.subr.mxu0 %v486
    %1588 = vmatpush1.msra.mxu0 %v485
    %1589 = vmatprep.subr.mxu0 %v492
    %1590 = vmatpush1.msra.mxu0 %v491
    %1591 = vmatprep.subr.mxu0 %v498
    %1592 = vmatpush1.msra.mxu0 %v497
    %1593 = vmatprep.subr.mxu0 %v504
    %1594 = vmatpush1.msra.mxu0 %v503
    %1595 = vmatprep.subr.mxu0 %v510
    %1596 = vmatpush1.msra.mxu0 %v509
    %1597 = vmatprep.subr.mxu0 %v516
    %1598 = vmatpush1.msra.mxu0 %v515
    %1599 = vmatprep.subr.mxu0 %v522
    %1600 = vmatpush1.msra.mxu0 %v521
    %1601 = vmatprep.subr.mxu0 %v528
    %1602 = vmatpush1.msra.mxu0 %v527
    %1603 = vmatprep.subr.mxu0 %v534
    %1604 = vmatpush1.msra.mxu0 %v533
    %1605 = vmatprep.subr.mxu0 %v540
    %1606 = vmatpush1.msra.mxu0 %v539
    %1607 = vmatprep.subr.mxu0 %v546
    %1608 = vmatpush1.msra.mxu0 %v545
    %1609 = vmatprep.subr.mxu0 %v552
    %1610 = vmatpush1.msra.mxu0 %v551
    %1611 = vmatprep.subr.mxu0 %v558
    %1612 = vmatpush1.msra.mxu0 %v557
    %1613 = vmatprep.subr.mxu0 0.0
    %1614 = vmatpush1.msra.mxu0 0.0
    %1615 = vmatprep.subr.mxu0 0.0
    %1616 = vmatpush1.msra.mxu0 0.0
    %1617 = vmatprep.subr.mxu0 0.0
    %1618 = vmatpush1.msra.mxu0 0.0
    %1619 = vmatprep.subr.mxu0 0.0
    %1620 = vmatpush1.msra.mxu0 0.0
    %1621 = vmatprep.subr.mxu0 0.0
    %1622 = vmatpush1.msra.mxu0 0.0
    %1623 = vmatprep.subr.mxu0 0.0
    %1624 = vmatpush1.msra.mxu0 0.0
    %1625 = vmatprep.subr.mxu0 0.0
    %1626 = vmatpush1.msra.mxu0 0.0
    %1627 = vmatprep.subr.mxu0 0.0
    %1628 = vmatpush1.msra.mxu0 0.0
    %1629 = vmatprep.subr.mxu0 0.0
    %1630 = vmatpush1.msra.mxu0 0.0
    %1631 = vmatprep.subr.mxu0 0.0
    %1632 = vmatpush1.msra.mxu0 0.0
    %1633 = vmatprep.subr.mxu0 0.0
    %1634 = vmatpush1.msra.mxu0 0.0
    %1635 = vmatprep.subr.mxu0 0.0
    %1636 = vmatpush1.msra.mxu0 0.0
    %1637 = vmatprep.subr.mxu0 0.0
    %1638 = vmatpush1.msra.mxu0 0.0
    %1639 = vmatprep.subr.mxu0 0.0
    %1640 = vmatpush1.msra.mxu0 0.0
    %1641 = vmatprep.subr.mxu0 0.0
    %1642 = vmatpush1.msra.mxu0 0.0
    %1643 = vmatprep.subr.mxu0 0.0
    %1644 = vmatpush1.msra.mxu0 0.0
    %1645 = vmatprep.mubr.f32.mxu0 0.0
    %1646 = vmatmul.mubr.f32.gmra.mrb[0].mxu0 %v1272
    %v1647 = vpop.f32.mrb[0].mxu0
    %v1648 = vpop.f32.mrb[0].mxu0
    %1649 = vmatprep.mubr.f32.mxu0 0.0
    %1650 = vmatmul.mubr.f32.gmra.mrb[0].mxu0 %v1430
    %v1651 = vpop.f32.mrb[0].mxu0
    %v1652 = vadd.f32 0.0, %v1651
    %v1653 = vpop.f32.mrb[0].mxu0
    %v1654 = vadd.f32 0.0, %v1653
    %1655 = vdwg.mxu0
    %v1656 = vadd.f32 %v1498, %v415
    %v1657 = vadd.f32 %v1500, %v419
    %v1658 = vadd.f32 %v1573, %v423
    %v1659 = vadd.f32 %v1579, %v432
    %v1660 = vadd.f32 %v1652, %v436
    %v1661 = vadd.f32 %v1654, %v440
    %s1662 = smul.u32 2, 3
    %s1663 = smul.addr %s1662, 8
    %s1664 = scalar_lea.vmem [#allocation2], %s1663
    %v1665 = vld [vmem:[%s1664] sm:$0xff]
    %v1666 = vld [vmem:[%s1664 + $0x8] sm:$0xff]
    %v1667 = vld [vmem:[%s1664 + $0x10] sm:$0xff]
    %v1668 = vadd.f32 %v1665, %v1656
    %v1669 = vmul.f32 %v1668, 0.5
    %v1670 = vtanh.pop %v1669
    %v1671 = vadd.f32 %v1670, 1.0
    %v1672 = vmul.f32 %v1671, 0.5
    %v1673 = vadd.f32 %v1666, %v1657
    %v1674 = vmul.f32 %v1673, 0.5
    %v1675 = vtanh.pop %v1674
    %v1676 = vadd.f32 %v1675, 1.0
    %v1677 = vmul.f32 %v1676, 0.5
    %v1678 = vmul.f32 %v1672, %v1658
    %v1679 = vadd.f32 %v1667, %v1678
    %v1680 = vtanh.pop %v1679
    %v1681 = vsub.f32 1.0, %v1677
    %v1682 = vmul.f32 %v1681, %v1680
    %v1683 = vmul.f32 %v1677, %v1272
    %v1684 = vadd.f32 %v1682, %v1683
    %1685 = vmatprep.subr.mxu0 %v814
    %1686 = vmatpush1.msra.mxu0 %v813
    %1687 = vmatprep.subr.mxu0 %v817
    %1688 = vmatpush1.msra.mxu0 %v816
    %1689 = vmatprep.subr.mxu0 %v820
    %1690 = vmatpush1.msra.mxu0 %v819
    %1691 = vmatprep.subr.mxu0 %v823
    %1692 = vmatpush1.msra.mxu0 %v822
    %1693 = vmatprep.subr.mxu0 %v826
    %1694 = vmatpush1.msra.mxu0 %v825
    %1695 = vmatprep.subr.mxu0 %v829
    %1696 = vmatpush1.msra.mxu0 %v828
    %1697 = vmatprep.subr.mxu0 %v832
    %1698 = vmatpush1.msra.mxu0 %v831
    %1699 = vmatprep.subr.mxu0 %v835
    %1700 = vmatpush1.msra.mxu0 %v834
    %1701 = vmatprep.subr.mxu0 %v838
    %1702 = vmatpush1.msra.mxu0 %v837
    %1703 = vmatprep.subr.mxu0 %v841
    %1704 = vmatpush1.msra.mxu0 %v840
    %1705 = vmatprep.subr.mxu0 %v844
    %1706 = vmatpush1.msra.mxu0 %v843
    %1707 = vmatprep.subr.mxu0 %v847
    %1708 = vmatpush1.msra.mxu0 %v846
    %1709 = vmatprep.subr.mxu0 %v850
    %1710 = vmatpush1.msra.mxu0 %v849
    %1711 = vmatprep.subr.mxu0 %v853
    %1712 = vmatpush1.msra.mxu0 %v852
    %1713 = vmatprep.subr.mxu0 %v856
    %1714 = vmatpush1.msra.mxu0 %v855
    %1715 = vmatprep.subr.mxu0 %v859
    %1716 = vmatpush1.msra.mxu0 %v858
    %1717 = vmatprep.subr.mxu0 0.0
    %1718 = vmatpush1.msra.mxu0 0.0
    %1719 = vmatprep.subr.mxu0 0.0
    %1720 = vmatpush1.msra.mxu0 0.0
    %1721 = vmatprep.subr.mxu0 0.0
    %1722 = vmatpush1.msra.mxu0 0.0
    %1723 = vmatprep.subr.mxu0 0.0
    %1724 = vmatpush1.msra.mxu0 0.0
    %1725 = vmatprep.subr.mxu0 0.0
    %1726 = vmatpush1.msra.mxu0 0.0
    %1727 = vmatprep.subr.mxu0 0.0
    %1728 = vmatpush1.msra.mxu0 0.0
    %1729 = vmatprep.subr.mxu0 0.0
    %1730 = vmatpush1.msra.mxu0 0.0
    %1731 = vmatprep.subr.mxu0 0.0
    %1732 = vmatpush1.msra.mxu0 0.0
    %1733 = vmatprep.subr.mxu0 0.0
    %1734 = vmatpush1.msra.mxu0 0.0
    %1735 = vmatprep.subr.mxu0 0.0
    %1736 = vmatpush1.msra.mxu0 0.0
    %1737 = vmatprep.subr.mxu0 0.0
    %1738 = vmatpush1.msra.mxu0 0.0
    %1739 = vmatprep.subr.mxu0 0.0
    %1740 = vmatpush1.msra.mxu0 0.0
    %1741 = vmatprep.subr.mxu0 0.0
    %1742 = vmatpush1.msra.mxu0 0.0
    %1743 = vmatprep.subr.mxu0 0.0
    %1744 = vmatpush1.msra.mxu0 0.0
    %1745 = vmatprep.subr.mxu0 0.0
    %1746 = vmatpush1.msra.mxu0 0.0
    %1747 = vmatprep.subr.mxu0 0.0
    %1748 = vmatpush1.msra.mxu0 0.0
    %1749 = vmatprep.mubr.f32.mxu0 0.0
    %1750 = vmatmul.mubr.f32.gmra.mrb[0].mxu0 %v1684
    %v1751 = vpop.f32.mrb[0].mxu0
    %v1752 = vadd.f32 %v449, %v1751
    %v1753 = vpop.f32.mrb[0].mxu0
    %v1754 = vadd.f32 %v453, %v1753
    %1755 = vdwg.mxu0
    %1756 = vmatprep.subr.mxu0 0.0
    %1757 = vmatpush1.msra.mxu0 %v815
    %1758 = vmatprep.subr.mxu0 0.0
    %1759 = vmatpush1.msra.mxu0 %v818
    %1760 = vmatprep.subr.mxu0 0.0
    %1761 = vmatpush1.msra.mxu0 %v821
    %1762 = vmatprep.subr.mxu0 0.0
    %1763 = vmatpush1.msra.mxu0 %v824
    %1764 = vmatprep.subr.mxu0 0.0
    %1765 = vmatpush1.msra.mxu0 %v827
    %1766 = vmatprep.subr.mxu0 0.0
    %1767 = vmatpush1.msra.mxu0 %v830
    %1768 = vmatprep.subr.mxu0 0.0
    %1769 = vmatpush1.msra.mxu0 %v833
    %1770 = vmatprep.subr.mxu0 0.0
    %1771 = vmatpush1.msra.mxu0 %v836
    %1772 = vmatprep.subr.mxu0 0.0
    %1773 = vmatpush1.msra.mxu0 %v839
    %1774 = vmatprep.subr.mxu0 0.0
    %1775 = vmatpush1.msra.mxu0 %v842
    %1776 = vmatprep.subr.mxu0 0.0
    %1777 = vmatpush1.msra.mxu0 %v845
    %1778 = vmatprep.subr.mxu0 0.0
    %1779 = vmatpush1.msra.mxu0 %v848
    %1780 = vmatprep.subr.mxu0 0.0
    %1781 = vmatpush1.msra.mxu0 %v851
    %1782 = vmatprep.subr.mxu0 0.0
    %1783 = vmatpush1.msra.mxu0 %v854
    %1784 = vmatprep.subr.mxu0 0.0
    %1785 = vmatpush1.msra.mxu0 %v857
    %1786 = vmatprep.subr.mxu0 0.0
    %1787 = vmatpush1.msra.mxu0 %v860
    %1788 = vmatprep.subr.mxu0 0.0
    %1789 = vmatpush1.msra.mxu0 0.0
    %1790 = vmatprep.subr.mxu0 0.0
    %1791 = vmatpush1.msra.mxu0 0.0
    %1792 = vmatprep.subr.mxu0 0.0
    %1793 = vmatpush1.msra.mxu0 0.0
    %1794 = vmatprep.subr.mxu0 0.0
    %1795 = vmatpush1.msra.mxu0 0.0
    %1796 = vmatprep.subr.mxu0 0.0
    %1797 = vmatpush1.msra.mxu0 0.0
    %1798 = vmatprep.subr.mxu0 0.0
    %1799 = vmatpush1.msra.mxu0 0.0
    %1800 = vmatprep.subr.mxu0 0.0
    %1801 = vmatpush1.msra.mxu0 0.0
    %1802 = vmatprep.subr.mxu0 0.0
    %1803 = vmatpush1.msra.mxu0 0.0
    %1804 = vmatprep.subr.mxu0 0.0
    %1805 = vmatpush1.msra.mxu0 0.0
    %1806 = vmatprep.subr.mxu0 0.0
    %1807 = vmatpush1.msra.mxu0 0.0
    %1808 = vmatprep.subr.mxu0 0.0
    %1809 = vmatpush1.msra.mxu0 0.0
    %1810 = vmatprep.subr.mxu0 0.0
    %1811 = vmatpush1.msra.mxu0 0.0
    %1812 = vmatprep.subr.mxu0 0.0
    %1813 = vmatpush1.msra.mxu0 0.0
    %1814 = vmatprep.subr.mxu0 0.0
    %1815 = vmatpush1.msra.mxu0 0.0
    %1816 = vmatprep.subr.mxu0 0.0
    %1817 = vmatpush1.msra.mxu0 0.0
    %1818 = vmatprep.subr.mxu0 0.0
    %1819 = vmatpush1.msra.mxu0 0.0
    %1820 = vmatprep.mubr.f32.mxu0 0.0
    %1821 = vmatmul.mubr.f32.gmra.mrb[0].mxu0 %v1684
    %v1822 = vpop.f32.mrb[0].mxu0
    %v1823 = vadd.f32 %v457, %v1822
    %v1824 = vpop.f32.mrb[0].mxu0
    %1825 = vdwg.mxu0
    %v1826 = vadd.f32 %v1752, %v1659
    %v1827 = vmul.f32 %v1826, 0.5
    %v1828 = vtanh.pop %v1827
    %v1829 = vadd.f32 %v1828, 1.0
    %v1830 = vmul.f32 %v1829, 0.5
    %v1831 = vadd.f32 %v1754, %v1660
    %v1832 = vmul.f32 %v1831, 0.5
    %v1833 = vtanh.pop %v1832
    %v1834 = vadd.f32 %v1833, 1.0
    %v1835 = vmul.f32 %v1834, 0.5
    %v1836 = vmul.f32 %v1830, %v1661
    %v1837 = vadd.f32 %v1823, %v1836
    %v1838 = vtanh.pop %v1837
    %v1839 = vsub.f32 1.0, %v1835
    %v1840 = vmul.f32 %v1839, %v1838
    %v1841 = vmul.f32 %v1835, %v1430
    %v1842 = vadd.f32 %v1840, %v1841
    %1843 = vmatprep.subr.mxu0 %v464
    %1844 = vmatpush1.msra.mxu0 %v463
    %1845 = vmatprep.subr.mxu0 %v470
    %1846 = vmatpush1.msra.mxu0 %v469
    %1847 = vmatprep.subr.mxu0 %v476
    %1848 = vmatpush1.msra.mxu0 %v475
    %1849 = vmatprep.subr.mxu0 %v482
    %1850 = vmatpush1.msra.mxu0 %v481
    %1851 = vmatprep.subr.mxu0 %v488
    %1852 = vmatpush1.msra.mxu0 %v487
    %1853 = vmatprep.subr.mxu0 %v494
    %1854 = vmatpush1.msra.mxu0 %v493
    %1855 = vmatprep.subr.mxu0 %v500
    %1856 = vmatpush1.msra.mxu0 %v499
    %1857 = vmatprep.subr.mxu0 %v506
    %1858 = vmatpush1.msra.mxu0 %v505
    %1859 = vmatprep.subr.mxu0 %v512
    %1860 = vmatpush1.msra.mxu0 %v511
    %1861 = vmatprep.subr.mxu0 %v518
    %1862 = vmatpush1.msra.mxu0 %v517
    %1863 = vmatprep.subr.mxu0 %v524
    %1864 = vmatpush1.msra.mxu0 %v523
    %1865 = vmatprep.subr.mxu0 %v530
    %1866 = vmatpush1.msra.mxu0 %v529
    %1867 = vmatprep.subr.mxu0 %v536
    %1868 = vmatpush1.msra.mxu0 %v535
    %1869 = vmatprep.subr.mxu0 %v542
    %1870 = vmatpush1.msra.mxu0 %v541
    %1871 = vmatprep.subr.mxu0 %v548
    %1872 = vmatpush1.msra.mxu0 %v547
    %1873 = vmatprep.subr.mxu0 %v554
    %1874 = vmatpush1.msra.mxu0 %v553
    %1875 = vmatprep.subr.mxu0 0.0
    %1876 = vmatpush1.msra.mxu0 0.0
    %1877 = vmatprep.subr.mxu0 0.0
    %1878 = vmatpush1.msra.mxu0 0.0
    %1879 = vmatprep.subr.mxu0 0.0
    %1880 = vmatpush1.msra.mxu0 0.0
    %1881 = vmatprep.subr.mxu0 0.0
    %1882 = vmatpush1.msra.mxu0 0.0
    %1883 = vmatprep.subr.mxu0 0.0
    %1884 = vmatpush1.msra.mxu0 0.0
    %1885 = vmatprep.subr.mxu0 0.0
    %1886 = vmatpush1.msra.mxu0 0.0
    %1887 = vmatprep.subr.mxu0 0.0
    %1888 = vmatpush1.msra.mxu0 0.0
    %1889 = vmatprep.subr.mxu0 0.0
    %1890 = vmatpush1.msra.mxu0 0.0
    %1891 = vmatprep.subr.mxu0 0.0
    %1892 = vmatpush1.msra.mxu0 0.0
    %1893 = vmatprep.subr.mxu0 0.0
    %1894 = vmatpush1.msra.mxu0 0.0
    %1895 = vmatprep.subr.mxu0 0.0
    %1896 = vmatpush1.msra.mxu0 0.0
    %1897 = vmatprep.subr.mxu0 0.0
    %1898 = vmatpush1.msra.mxu0 0.0
    %1899 = vmatprep.subr.mxu0 0.0
    %1900 = vmatpush1.msra.mxu0 0.0
    %1901 = vmatprep.subr.mxu0 0.0
    %1902 = vmatpush1.msra.mxu0 0.0
    %1903 = vmatprep.subr.mxu0 0.0
    %1904 = vmatpush1.msra.mxu0 0.0
    %1905 = vmatprep.subr.mxu0 0.0
    %1906 = vmatpush1.msra.mxu0 0.0
    %1907 = vmatprep.mubr.f32.mxu0 0.0
    %1908 = vmatmul.mubr.f32.gmra.mrb[0].mxu0 %v1684
    %v1909 = vpop.f32.mrb[0].mxu0
    %v1910 = vadd.f32 0.0, %v1909
    %v1911 = vpop.f32.mrb[0].mxu0
    %v1912 = vadd.f32 0.0, %v1911
    %1913 = vmatprep.mubr.f32.mxu0 0.0
    %1914 = vmatmul.mubr.f32.gmra.mrb[0].mxu0 %v1842
    %v1915 = vpop.f32.mrb[0].mxu0
    %v1916 = vpop.f32.mrb[0].mxu0
    %1917 = vdwg.mxu0
    %1918 = vmatprep.subr.mxu0 %v466
    %1919 = vmatpush1.msra.mxu0 %v465
    %1920 = vmatprep.subr.mxu0 %v472
    %1921 = vmatpush1.msra.mxu0 %v471
    %1922 = vmatprep.subr.mxu0 %v478
    %1923 = vmatpush1.msra.mxu0 %v477
    %1924 = vmatprep.subr.mxu0 %v484
    %1925 = vmatpush1.msra.mxu0 %v483
    %1926 = vmatprep.subr.mxu0 %v490
    %1927 = vmatpush1.msra.mxu0 %v489
    %1928 = vmatprep.subr.mxu0 %v496
    %1929 = vmatpush1.msra.mxu0 %v495
    %1930 = vmatprep.subr.mxu0 %v502
    %1931 = vmatpush1.msra.mxu0 %v501
    %1932 = vmatprep.subr.mxu0 %v508
    %1933 = vmatpush1.msra.mxu0 %v507
    %1934 = vmatprep.subr.mxu0 %v514
    %1935 = vmatpush1.msra.mxu0 %v513
    %1936 = vmatprep.subr.mxu0 %v520
    %1937 = vmatpush1.msra.mxu0 %v519
    %1938 = vmatprep.subr.mxu0 %v526
    %1939 = vmatpush1.msra.mxu0 %v525
    %1940 = vmatprep.subr.mxu0 %v532
    %1941 = vmatpush1.msra.mxu0 %v531
    %1942 = vmatprep.subr.mxu0 %v538
    %1943 = vmatpush1.msra.mxu0 %v537
    %1944 = vmatprep.subr.mxu0 %v544
    %1945 = vmatpush1.msra.mxu0 %v543
    %1946 = vmatprep.subr.mxu0 %v550
    %1947 = vmatpush1.msra.mxu0 %v549
    %1948 = vmatprep.subr.mxu0 %v556
    %1949 = vmatpush1.msra.mxu0 %v555
    %1950 = vmatprep.subr.mxu0 0.0
    %1951 = vmatpush1.msra.mxu0 0.0
    %1952 = vmatprep.subr.mxu0 0.0
    %1953 = vmatpush1.msra.mxu0 0.0
    %1954 = vmatprep.subr.mxu0 0.0
    %1955 = vmatpush1.msra.mxu0 0.0
    %1956 = vmatprep.subr.mxu0 0.0
    %1957 = vmatpush1.msra.mxu0 0.0
    %1958 = vmatprep.subr.mxu0 0.0
    %1959 = vmatpush1.msra.mxu0 0.0
    %1960 = vmatprep.subr.mxu0 0.0
    %1961 = vmatpush1.msra.mxu0 0.0
    %1962 = vmatprep.subr.mxu0 0.0
    %1963 = vmatpush1.msra.mxu0 0.0
    %1964 = vmatprep.subr.mxu0 0.0
    %1965 = vmatpush1.msra.mxu0 0.0
    %1966 = vmatprep.subr.mxu0 0.0
    %1967 = vmatpush1.msra.mxu0 0.0
    %1968 = vmatprep.subr.mxu0 0.0
    %1969 = vmatpush1.msra.mxu0 0.0
    %1970 = vmatprep.subr.mxu0 0.0
    %1971 = vmatpush1.msra.mxu0 0.0
    %1972 = vmatprep.subr.mxu0 0.0
    %1973 = vmatpush1.msra.mxu0 0.0
    %1974 = vmatprep.subr.mxu0 0.0
    %1975 = vmatpush1.msra.mxu0 0.0
    %1976 = vmatprep.subr.mxu0 0.0
    %1977 = vmatpush1.msra.mxu0 0.0
    %1978 = vmatprep.subr.mxu0 0.0
    %1979 = vmatpush1.msra.mxu0 0.0
    %1980 = vmatprep.subr.mxu0 0.0
    %1981 = vmatpush1.msra.mxu0 0.0
    %1982 = vmatprep.mubr.f32.mxu0 0.0
    %1983 = vmatmul.mubr.f32.gmra.mrb[0].mxu0 %v1684
    %v1984 = vpop.f32.mrb[0].mxu0
    %v1985 = vadd.f32 0.0, %v1984
    %v1986 = vpop.f32.mrb[0].mxu0
    %1987 = vmatprep.mubr.f32.mxu0 0.0
    %1988 = vmatmul.mubr.f32.gmra.mrb[0].mxu0 %v1842
    %v1989 = vpop.f32.mrb[0].mxu0
    %v1990 = vpop.f32.mrb[0].mxu0
    %v1991 = vadd.f32 0.0, %v1990
    %1992 = vdwg.mxu0
    %1993 = vmatprep.subr.mxu0 %v468
    %1994 = vmatpush1.msra.mxu0 %v467
    %1995 = vmatprep.subr.mxu0 %v474
    %1996 = vmatpush1.msra.mxu0 %v473
    %1997 = vmatprep.subr.mxu0 %v480
    %1998 = vmatpush1.msra.mxu0 %v479
    %1999 = vmatprep.subr.mxu0 %v486
    %2000 = vmatpush1.msra.mxu0 %v485
    %2001 = vmatprep.subr.mxu0 %v492
    %2002 = vmatpush1.msra.mxu0 %v491
    %2003 = vmatprep.subr.mxu0 %v498
    %2004 = vmatpush1.msra.mxu0 %v497
    %2005 = vmatprep.subr.mxu0 %v504
    %2006 = vmatpush1.msra.mxu0 %v503
    %2007 = vmatprep.subr.mxu0 %v510
    %2008 = vmatpush1.msra.mxu0 %v509
    %2009 = vmatprep.subr.mxu0 %v516
    %2010 = vmatpush1.msra.mxu0 %v515
    %2011 = vmatprep.subr.mxu0 %v522
    %2012 = vmatpush1.msra.mxu0 %v521
    %2013 = vmatprep.subr.mxu0 %v528
    %2014 = vmatpush1.msra.mxu0 %v527
    %2015 = vmatprep.subr.mxu0 %v534
    %2016 = vmatpush1.msra.mxu0 %v533
    %2017 = vmatprep.subr.mxu0 %v540
    %2018 = vmatpush1.msra.mxu0 %v539
    %2019 = vmatprep.subr.mxu0 %v546
    %2020 = vmatpush1.msra.mxu0 %v545
    %2021 = vmatprep.subr.mxu0 %v552
    %2022 = vmatpush1.msra.mxu0 %v551
    %2023 = vmatprep.subr.mxu0 %v558
    %2024 = vmatpush1.msra.mxu0 %v557
    %2025 = vmatprep.subr.mxu0 0.0
    %2026 = vmatpush1.msra.mxu0 0.0
    %2027 = vmatprep.subr.mxu0 0.0
    %2028 = vmatpush1.msra.mxu0 0.0
    %2029 = vmatprep.subr.mxu0 0.0
    %2030 = vmatpush1.msra.mxu0 0.0
    %2031 = vmatprep.subr.mxu0 0.0
    %2032 = vmatpush1.msra.mxu0 0.0
    %2033 = vmatprep.subr.mxu0 0.0
    %2034 = vmatpush1.msra.mxu0 0.0
    %2035 = vmatprep.subr.mxu0 0.0
    %2036 = vmatpush1.msra.mxu0 0.0
    %2037 = vmatprep.subr.mxu0 0.0
    %2038 = vmatpush1.msra.mxu0 0.0
    %2039 = vmatprep.subr.mxu0 0.0
    %2040 = vmatpush1.msra.mxu0 0.0
    %2041 = vmatprep.subr.mxu0 0.0
    %2042 = vmatpush1.msra.mxu0 0.0
    %2043 = vmatprep.subr.mxu0 0.0
    %2044 = vmatpush1.msra.mxu0 0.0
    %2045 = vmatprep.subr.mxu0 0.0
    %2046 = vmatpush1.msra.mxu0 0.0
    %2047 = vmatprep.subr.mxu0 0.0
    %2048 = vmatpush1.msra.mxu0 0.0
    %2049 = vmatprep.subr.mxu0 0.0
    %2050 = vmatpush1.msra.mxu0 0.0
    %2051 = vmatprep.subr.mxu0 0.0
    %2052 = vmatpush1.msra.mxu0 0.0
    %2053 = vmatprep.subr.mxu0 0.0
    %2054 = vmatpush1.msra.mxu0 0.0
    %2055 = vmatprep.subr.mxu0 0.0
    %2056 = vmatpush1.msra.mxu0 0.0
    %2057 = vmatprep.mubr.f32.mxu0 0.0
    %2058 = vmatmul.mubr.f32.gmra.mrb[0].mxu0 %v1684
    %v2059 = vpop.f32.mrb[0].mxu0
    %v2060 = vpop.f32.mrb[0].mxu0
    %2061 = vmatprep.mubr.f32.mxu0 0.0
    %2062 = vmatmul.mubr.f32.gmra.mrb[0].mxu0 %v1842
    %v2063 = vpop.f32.mrb[0].mxu0
    %v2064 = vadd.f32 0.0, %v2063
    %v2065 = vpop.f32.mrb[0].mxu0
    %v2066 = vadd.f32 0.0, %v2065
    %2067 = vdwg.mxu0
    %v2068 = vadd.f32 %v1910, %v415
    %v2069 = vadd.f32 %v1912, %v419
    %v2070 = vadd.f32 %v1985, %v423
    %v2071 = vadd.f32 %v1991, %v432
    %v2072 = vadd.f32 %v2064, %v436
    %v2073 = vadd.f32 %v2066, %v440
    %s2074 = smul.u32 3, 3
    %s2075 = smul.addr %s2074, 8
    %s2076 = scalar_lea.vmem [#allocation2], %s2075
    %v2077 = vld [vmem:[%s2076] sm:$0xff]
    %v2078 = vld [vmem:[%s2076 + $0x8] sm:$0xff]
    %v2079 = vld [vmem:[%s2076 + $0x10] sm:$0xff]
    %v2080 = vadd.f32 %v2077, %v2068
    %v2081 = vmul.f32 %v2080, 0.5
    %v2082 = vtanh.pop %v2081
    %v2083 = vadd.f32 %v2082, 1.0
    %v2084 = vmul.f32 %v2083, 0.5
    %v2085 = vadd.f32 %v2078, %v2069
    %v2086 = vmul.f32 %v2085, 0.5
    %v2087 = vtanh.pop %v2086
    %v2088 = vadd.f32 %v2087, 1.0
    %v2089 = vmul.f32 %v2088, 0.5
    %v2090 = vmul.f32 %v2084, %v2070
    %v2091 = vadd.f32 %v2079, %v2090
    %v2092 = vtanh.pop %v2091
    %v2093 = vsub.f32 1.0, %v2089
    %v2094 = vmul.f32 %v2093, %v2092
    %v2095 = vmul.f32 %v2089, %v1684
    %v2096 = vadd.f32 %v2094, %v2095
    %2097 = vmatprep.subr.mxu0 %v814
    %2098 = vmatpush1.msra.mxu0 %v813
    %2099 = vmatprep.subr.mxu0 %v817
    %2100 = vmatpush1.msra.mxu0 %v816
    %2101 = vmatprep.subr.mxu0 %v820
    %2102 = vmatpush1.msra.mxu0 %v819
    %2103 = vmatprep.subr.mxu0 %v823
    %2104 = vmatpush1.msra.mxu0 %v822
    %2105 = vmatprep.subr.mxu0 %v826
    %2106 = vmatpush1.msra.mxu0 %v825
    %2107 = vmatprep.subr.mxu0 %v829
    %2108 = vmatpush1.msra.mxu0 %v828
    %2109 = vmatprep.subr.mxu0 %v832
    %2110 = vmatpush1.msra.mxu0 %v831
    %2111 = vmatprep.subr.mxu0 %v835
    %2112 = vmatpush1.msra.mxu0 %v834
    %2113 = vmatprep.subr.mxu0 %v838
    %2114 = vmatpush1.msra.mxu0 %v837
    %2115 = vmatprep.subr.mxu0 %v841
    %2116 = vmatpush1.msra.mxu0 %v840
    %2117 = vmatprep.subr.mxu0 %v844
    %2118 = vmatpush1.msra.mxu0 %v843
    %2119 = vmatprep.subr.mxu0 %v847
    %2120 = vmatpush1.msra.mxu0 %v846
    %2121 = vmatprep.subr.mxu0 %v850
    %2122 = vmatpush1.msra.mxu0 %v849
    %2123 = vmatprep.subr.mxu0 %v853
    %2124 = vmatpush1.msra.mxu0 %v852
    %2125 = vmatprep.subr.mxu0 %v856
    %2126 = vmatpush1.msra.mxu0 %v855
    %2127 = vmatprep.subr.mxu0 %v859
    %2128 = vmatpush1.msra.mxu0 %v858
    %2129 = vmatprep.subr.mxu0 0.0
    %2130 = vmatpush1.msra.mxu0 0.0
    %2131 = vmatprep.subr.mxu0 0.0
    %2132 = vmatpush1.msra.mxu0 0.0
    %2133 = vmatprep.subr.mxu0 0.0
    %2134 = vmatpush1.msra.mxu0 0.0
    %2135 = vmatprep.subr.mxu0 0.0
    %2136 = vmatpush1.msra.mxu0 0.0
    %2137 = vmatprep.subr.mxu0 0.0
    %2138 = vmatpush1.msra.mxu0 0.0
    %2139 = vmatprep.subr.mxu0 0.0
    %2140 = vmatpush1.msra.mxu0 0.0
    %2141 = vmatprep.subr.mxu0 0.0
    %2142 = vmatpush1.msra.mxu0 0.0
    %2143 = vmatprep.subr.mxu0 0.0
    %2144 = vmatpush1.msra.mxu0 0.0
    %2145 = vmatprep.subr.mxu0 0.0
    %2146 = vmatpush1.msra.mxu0 0.0
    %2147 = vmatprep.subr.mxu0 0.0
    %2148 = vmatpush1.msra.mxu0 0.0
    %2149 = vmatprep.subr.mxu0 0.0
    %2150 = vmatpush1.msra.mxu0 0.0
    %2151 = vmatprep.subr.mxu0 0.0
    %2152 = vmatpush1.msra.mxu0 0.0
    %2153 = vmatprep.subr.mxu0 0.0
    %2154 = vmatpush1.msra.mxu0 0.0
    %2155 = vmatprep.subr.mxu0 0.0
    %2156 = vmatpush1.msra.mxu0 0.0
    %2157 = vmatprep.subr.mxu0 0.0
    %2158 = vmatpush1.msra.mxu0 0.0
    %2159 = vmatprep.subr.mxu0 0.0
    %2160 = vmatpush1.msra.mxu0 0.0
    %2161 = vmatprep.mubr.f32.mxu0 0.0
    %2162 = vmatmul.mubr.f32.gmra.mrb[0].mxu0 %v2096
    %v2163 = vpop.f32.mrb[0].mxu0
    %v2164 = vadd.f32 %v449, %v2163
    %v2165 = vpop.f32.mrb[0].mxu0
    %v2166 = vadd.f32 %v453, %v2165
    %2167 = vdwg.mxu0
    %2168 = vmatprep.subr.mxu0 0.0
    %2169 = vmatpush1.msra.mxu0 %v815
    %2170 = vmatprep.subr.mxu0 0.0
    %2171 = vmatpush1.msra.mxu0 %v818
    %2172 = vmatprep.subr.mxu0 0.0
    %2173 = vmatpush1.msra.mxu0 %v821
    %2174 = vmatprep.subr.mxu0 0.0
    %2175 = vmatpush1.msra.mxu0 %v824
    %2176 = vmatprep.subr.mxu0 0.0
    %2177 = vmatpush1.msra.mxu0 %v827
    %2178 = vmatprep.subr.mxu0 0.0
    %2179 = vmatpush1.msra.mxu0 %v830
    %2180 = vmatprep.subr.mxu0 0.0
    %2181 = vmatpush1.msra.mxu0 %v833
    %2182 = vmatprep.subr.mxu0 0.0
    %2183 = vmatpush1.msra.mxu0 %v836
    %2184 = vmatprep.subr.mxu0 0.0
    %2185 = vmatpush1.msra.mxu0 %v839
    %2186 = vmatprep.subr.mxu0 0.0
    %2187 = vmatpush1.msra.mxu0 %v842
    %2188 = vmatprep.subr.mxu0 0.0
    %2189 = vmatpush1.msra.mxu0 %v845
    %2190 = vmatprep.subr.mxu0 0.0
    %2191 = vmatpush1.msra.mxu0 %v848
    %2192 = vmatprep.subr.mxu0 0.0
    %2193 = vmatpush1.msra.mxu0 %v851
    %2194 = vmatprep.subr.mxu0 0.0
    %2195 = vmatpush1.msra.mxu0 %v854
    %2196 = vmatprep.subr.mxu0 0.0
    %2197 = vmatpush1.msra.mxu0 %v857
    %2198 = vmatprep.subr.mxu0 0.0
    %2199 = vmatpush1.msra.mxu0 %v860
    %2200 = vmatprep.subr.mxu0 0.0
    %2201 = vmatpush1.msra.mxu0 0.0
    %2202 = vmatprep.subr.mxu0 0.0
    %2203 = vmatpush1.msra.mxu0 0.0
    %2204 = vmatprep.subr.mxu0 0.0
    %2205 = vmatpush1.msra.mxu0 0.0
    %2206 = vmatprep.subr.mxu0 0.0
    %2207 = vmatpush1.msra.mxu0 0.0
    %2208 = vmatprep.subr.mxu0 0.0
    %2209 = vmatpush1.msra.mxu0 0.0
    %2210 = vmatprep.subr.mxu0 0.0
    %2211 = vmatpush1.msra.mxu0 0.0
    %2212 = vmatprep.subr.mxu0 0.0
    %2213 = vmatpush1.msra.mxu0 0.0
    %2214 = vmatprep.subr.mxu0 0.0
    %2215 = vmatpush1.msra.mxu0 0.0
    %2216 = vmatprep.subr.mxu0 0.0
    %2217 = vmatpush1.msra.mxu0 0.0
    %2218 = vmatprep.subr.mxu0 0.0
    %2219 = vmatpush1.msra.mxu0 0.0
    %2220 = vmatprep.subr.mxu0 0.0
    %2221 = vmatpush1.msra.mxu0 0.0
    %2222 = vmatprep.subr.mxu0 0.0
    %2223 = vmatpush1.msra.mxu0 0.0
    %2224 = vmatprep.subr.mxu0 0.0
    %2225 = vmatpush1.msra.mxu0 0.0
    %2226 = vmatprep.subr.mxu0 0.0
    %2227 = vmatpush1.msra.mxu0 0.0
    %2228 = vmatprep.subr.mxu0 0.0
    %2229 = vmatpush1.msra.mxu0 0.0
    %2230 = vmatprep.subr.mxu0 0.0
    %2231 = vmatpush1.msra.mxu0 0.0
    %2232 = vmatprep.mubr.f32.mxu0 0.0
    %2233 = vmatmul.mubr.f32.gmra.mrb[0].mxu0 %v2096
    %v2234 = vpop.f32.mrb[0].mxu0
    %v2235 = vadd.f32 %v457, %v2234
    %v2236 = vpop.f32.mrb[0].mxu0
    %2237 = vdwg.mxu0
    %v2238 = vadd.f32 %v2164, %v2071
    %v2239 = vmul.f32 %v2238, 0.5
    %v2240 = vtanh.pop %v2239
    %v2241 = vadd.f32 %v2240, 1.0
    %v2242 = vmul.f32 %v2241, 0.5
    %v2243 = vadd.f32 %v2166, %v2072
    %v2244 = vmul.f32 %v2243, 0.5
    %v2245 = vtanh.pop %v2244
    %v2246 = vadd.f32 %v2245, 1.0
    %v2247 = vmul.f32 %v2246, 0.5
    %v2248 = vmul.f32 %v2242, %v2073
    %v2249 = vadd.f32 %v2235, %v2248
    %v2250 = vtanh.pop %v2249
    %v2251 = vsub.f32 1.0, %v2247
    %v2252 = vmul.f32 %v2251, %v2250
    %v2253 = vmul.f32 %v2247, %v1842
    %v2254 = vadd.f32 %v2252, %v2253
    %2255 = vmatprep.subr.mxu0 %v464
    %2256 = vmatpush1.msra.mxu0 %v463
    %2257 = vmatprep.subr.mxu0 %v470
    %2258 = vmatpush1.msra.mxu0 %v469
    %2259 = vmatprep.subr.mxu0 %v476
    %2260 = vmatpush1.msra.mxu0 %v475
    %2261 = vmatprep.subr.mxu0 %v482
    %2262 = vmatpush1.msra.mxu0 %v481
    %2263 = vmatprep.subr.mxu0 %v488
    %2264 = vmatpush1.msra.mxu0 %v487
    %2265 = vmatprep.subr.mxu0 %v494
    %2266 = vmatpush1.msra.mxu0 %v493
    %2267 = vmatprep.subr.mxu0 %v500
    %2268 = vmatpush1.msra.mxu0 %v499
    %2269 = vmatprep.subr.mxu0 %v506
    %2270 = vmatpush1.msra.mxu0 %v505
    %2271 = vmatprep.subr.mxu0 %v512
    %2272 = vmatpush1.msra.mxu0 %v511
    %2273 = vmatprep.subr.mxu0 %v518
    %2274 = vmatpush1.msra.mxu0 %v517
    %2275 = vmatprep.subr.mxu0 %v524
    %2276 = vmatpush1.msra.mxu0 %v523
    %2277 = vmatprep.subr.mxu0 %v530
    %2278 = vmatpush1.msra.mxu0 %v529
    %2279 = vmatprep.subr.mxu0 %v536
    %2280 = vmatpush1.msra.mxu0 %v535
    %2281 = vmatprep.subr.mxu0 %v542
    %2282 = vmatpush1.msra.mxu0 %v541
    %2283 = vmatprep.subr.mxu0 %v548
    %2284 = vmatpush1.msra.mxu0 %v547
    %2285 = vmatprep.subr.mxu0 %v554
    %2286 = vmatpush1.msra.mxu0 %v553
    %2287 = vmatprep.subr.mxu0 0.0
    %2288 = vmatpush1.msra.mxu0 0.0
    %2289 = vmatprep.subr.mxu0 0.0
    %2290 = vmatpush1.msra.mxu0 0.0
    %2291 = vmatprep.subr.mxu0 0.0
    %2292 = vmatpush1.msra.mxu0 0.0
    %2293 = vmatprep.subr.mxu0 0.0
    %2294 = vmatpush1.msra.mxu0 0.0
    %2295 = vmatprep.subr.mxu0 0.0
    %2296 = vmatpush1.msra.mxu0 0.0
    %2297 = vmatprep.subr.mxu0 0.0
    %2298 = vmatpush1.msra.mxu0 0.0
    %2299 = vmatprep.subr.mxu0 0.0
    %2300 = vmatpush1.msra.mxu0 0.0
    %2301 = vmatprep.subr.mxu0 0.0
    %2302 = vmatpush1.msra.mxu0 0.0
    %2303 = vmatprep.subr.mxu0 0.0
    %2304 = vmatpush1.msra.mxu0 0.0
    %2305 = vmatprep.subr.mxu0 0.0
    %2306 = vmatpush1.msra.mxu0 0.0
    %2307 = vmatprep.subr.mxu0 0.0
    %2308 = vmatpush1.msra.mxu0 0.0
    %2309 = vmatprep.subr.mxu0 0.0
    %2310 = vmatpush1.msra.mxu0 0.0
    %2311 = vmatprep.subr.mxu0 0.0
    %2312 = vmatpush1.msra.mxu0 0.0
    %2313 = vmatprep.subr.mxu0 0.0
    %2314 = vmatpush1.msra.mxu0 0.0
    %2315 = vmatprep.subr.mxu0 0.0
    %2316 = vmatpush1.msra.mxu0 0.0
    %2317 = vmatprep.subr.mxu0 0.0
    %2318 = vmatpush1.msra.mxu0 0.0
    %2319 = vmatprep.mubr.f32.mxu0 0.0
    %2320 = vmatmul.mubr.f32.gmra.mrb[0].mxu0 %v2096
    %v2321 = vpop.f32.mrb[0].mxu0
    %v2322 = vadd.f32 0.0, %v2321
    %v2323 = vpop.f32.mrb[0].mxu0
    %v2324 = vadd.f32 0.0, %v2323
    %2325 = vmatprep.mubr.f32.mxu0 0.0
    %2326 = vmatmul.mubr.f32.gmra.mrb[0].mxu0 %v2254
    %v2327 = vpop.f32.mrb[0].mxu0
    %v2328 = vpop.f32.mrb[0].mxu0
    %2329 = vdwg.mxu0
    %2330 = vmatprep.subr.mxu0 %v466
    %2331 = vmatpush1.msra.mxu0 %v465
    %2332 = vmatprep.subr.mxu0 %v472
    %2333 = vmatpush1.msra.mxu0 %v471
    %2334 = vmatprep.subr.mxu0 %v478
    %2335 = vmatpush1.msra.mxu0 %v477
    %2336 = vmatprep.subr.mxu0 %v484
    %2337 = vmatpush1.msra.mxu0 %v483
    %2338 = vmatprep.subr.mxu0 %v490
    %2339 = vmatpush1.msra.mxu0 %v489
    %2340 = vmatprep.subr.mxu0 %v496
    %2341 = vmatpush1.msra.mxu0 %v495
    %2342 = vmatprep.subr.mxu0 %v502
    %2343 = vmatpush1.msra.mxu0 %v501
    %2344 = vmatprep.subr.mxu0 %v508
    %2345 = vmatpush1.msra.mxu0 %v507
    %2346 = vmatprep.subr.mxu0 %v514
    %2347 = vmatpush1.msra.mxu0 %v513
    %2348 = vmatprep.subr.mxu0 %v520
    %2349 = vmatpush1.msra.mxu0 %v519
    %2350 = vmatprep.subr.mxu0 %v526
    %2351 = vmatpush1.msra.mxu0 %v525
    %2352 = vmatprep.subr.mxu0 %v532
    %2353 = vmatpush1.msra.mxu0 %v531
    %2354 = vmatprep.subr.mxu0 %v538
    %2355 = vmatpush1.msra.mxu0 %v537
    %2356 = vmatprep.subr.mxu0 %v544
    %2357 = vmatpush1.msra.mxu0 %v543
    %2358 = vmatprep.subr.mxu0 %v550
    %2359 = vmatpush1.msra.mxu0 %v549
    %2360 = vmatprep.subr.mxu0 %v556
    %2361 = vmatpush1.msra.mxu0 %v555
    %2362 = vmatprep.subr.mxu0 0.0
    %2363 = vmatpush1.msra.mxu0 0.0
    %2364 = vmatprep.subr.mxu0 0.0
    %2365 = vmatpush1.msra.mxu0 0.0
    %2366 = vmatprep.subr.mxu0 0.0
    %2367 = vmatpush1.msra.mxu0 0.0
    %2368 = vmatprep.subr.mxu0 0.0
    %2369 = vmatpush1.msra.mxu0 0.0
    %2370 = vmatprep.subr.mxu0 0.0
    %2371 = vmatpush1.msra.mxu0 0.0
    %2372 = vmatprep.subr.mxu0 0.0
    %2373 = vmatpush1.msra.mxu0 0.0
    %2374 = vmatprep.subr.mxu0 0.0
    %2375 = vmatpush1.msra.mxu0 0.0
    %2376 = vmatprep.subr.mxu0 0.0
    %2377 = vmatpush1.msra.mxu0 0.0
    %2378 = vmatprep.subr.mxu0 0.0
    %2379 = vmatpush1.msra.mxu0 0.0
    %2380 = vmatprep.subr.mxu0 0.0
    %2381 = vmatpush1.msra.mxu0 0.0
    %2382 = vmatprep.subr.mxu0 0.0
    %2383 = vmatpush1.msra.mxu0 0.0
    %2384 = vmatprep.subr.mxu0 0.0
    %2385 = vmatpush1.msra.mxu0 0.0
    %2386 = vmatprep.subr.mxu0 0.0
    %2387 = vmatpush1.msra.mxu0 0.0
    %2388 = vmatprep.subr.mxu0 0.0
    %2389 = vmatpush1.msra.mxu0 0.0
    %2390 = vmatprep.subr.mxu0 0.0
    %2391 = vmatpush1.msra.mxu0 0.0
    %2392 = vmatprep.subr.mxu0 0.0
    %2393 = vmatpush1.msra.mxu0 0.0
    %2394 = vmatprep.mubr.f32.mxu0 0.0
    %2395 = vmatmul.mubr.f32.gmra.mrb[0].mxu0 %v2096
    %v2396 = vpop.f32.mrb[0].mxu0
    %v2397 = vadd.f32 0.0, %v2396
    %v2398 = vpop.f32.mrb[0].mxu0
    %2399 = vmatprep.mubr.f32.mxu0 0.0
    %2400 = vmatmul.mubr.f32.gmra.mrb[0].mxu0 %v2254
    %v2401 = vpop.f32.mrb[0].mxu0
    %v2402 = vpop.f32.mrb[0].mxu0
    %v2403 = vadd.f32 0.0, %v2402
    %2404 = vdwg.mxu0
    %2405 = vmatprep.subr.mxu0 %v468
    %2406 = vmatpush1.msra.mxu0 %v467
    %2407 = vmatprep.subr.mxu0 %v474
    %2408 = vmatpush1.msra.mxu0 %v473
    %2409 = vmatprep.subr.mxu0 %v480
    %2410 = vmatpush1.msra.mxu0 %v479
    %2411 = vmatprep.subr.mxu0 %v486
    %2412 = vmatpush1.msra.mxu0 %v485
    %2413 = vmatprep.subr.mxu0 %v492
    %2414 = vmatpush1.msra.mxu0 %v491
    %2415 = vmatprep.subr.mxu0 %v498
    %2416 = vmatpush1.msra.mxu0 %v497
    %2417 = vmatprep.subr.mxu0 %v504
    %2418 = vmatpush1.msra.mxu0 %v503
    %2419 = vmatprep.subr.mxu0 %v510
    %2420 = vmatpush1.msra.mxu0 %v509
    %2421 = vmatprep.subr.mxu0 %v516
    %2422 = vmatpush1.msra.mxu0 %v515
    %2423 = vmatprep.subr.mxu0 %v522
    %2424 = vmatpush1.msra.mxu0 %v521
    %2425 = vmatprep.subr.mxu0 %v528
    %2426 = vmatpush1.msra.mxu0 %v527
    %2427 = vmatprep.subr.mxu0 %v534
    %2428 = vmatpush1.msra.mxu0 %v533
    %2429 = vmatprep.subr.mxu0 %v540
    %2430 = vmatpush1.msra.mxu0 %v539
    %2431 = vmatprep.subr.mxu0 %v546
    %2432 = vmatpush1.msra.mxu0 %v545
    %2433 = vmatprep.subr.mxu0 %v552
    %2434 = vmatpush1.msra.mxu0 %v551
    %2435 = vmatprep.subr.mxu0 %v558
    %2436 = vmatpush1.msra.mxu0 %v557
    %2437 = vmatprep.subr.mxu0 0.0
    %2438 = vmatpush1.msra.mxu0 0.0
    %2439 = vmatprep.subr.mxu0 0.0
    %2440 = vmatpush1.msra.mxu0 0.0
    %2441 = vmatprep.subr.mxu0 0.0
    %2442 = vmatpush1.msra.mxu0 0.0
    %2443 = vmatprep.subr.mxu0 0.0
    %2444 = vmatpush1.msra.mxu0 0.0
    %2445 = vmatprep.subr.mxu0 0.0
    %2446 = vmatpush1.msra.mxu0 0.0
    %2447 = vmatprep.subr.mxu0 0.0
    %2448 = vmatpush1.msra.mxu0 0.0
    %2449 = vmatprep.subr.mxu0 0.0
    %2450 = vmatpush1.msra.mxu0 0.0
    %2451 = vmatprep.subr.mxu0 0.0
    %2452 = vmatpush1.msra.mxu0 0.0
    %2453 = vmatprep.subr.mxu0 0.0
    %2454 = vmatpush1.msra.mxu0 0.0
    %2455 = vmatprep.subr.mxu0 0.0
    %2456 = vmatpush1.msra.mxu0 0.0
    %2457 = vmatprep.subr.mxu0 0.0
    %2458 = vmatpush1.msra.mxu0 0.0
    %2459 = vmatprep.subr.mxu0 0.0
    %2460 = vmatpush1.msra.mxu0 0.0
    %2461 = vmatprep.subr.mxu0 0.0
    %2462 = vmatpush1.msra.mxu0 0.0
    %2463 = vmatprep.subr.mxu0 0.0
    %2464 = vmatpush1.msra.mxu0 0.0
    %2465 = vmatprep.subr.mxu0 0.0
    %2466 = vmatpush1.msra.mxu0 0.0
    %2467 = vmatprep.subr.mxu0 0.0
    %2468 = vmatpush1.msra.mxu0 0.0
    %2469 = vmatprep.mubr.f32.mxu0 0.0
    %2470 = vmatmul.mubr.f32.gmra.mrb[0].mxu0 %v2096
    %v2471 = vpop.f32.mrb[0].mxu0
    %v2472 = vpop.f32.mrb[0].mxu0
    %2473 = vmatprep.mubr.f32.mxu0 0.0
    %2474 = vmatmul.mubr.f32.gmra.mrb[0].mxu0 %v2254
    %v2475 = vpop.f32.mrb[0].mxu0
    %v2476 = vadd.f32 0.0, %v2475
    %v2477 = vpop.f32.mrb[0].mxu0
    %v2478 = vadd.f32 0.0, %v2477
    %2479 = vdwg.mxu0
    %v2480 = vadd.f32 %v2322, %v415
    %v2481 = vadd.f32 %v2324, %v419
    %v2482 = vadd.f32 %v2397, %v423
    %v2483 = vadd.f32 %v2403, %v432
    %v2484 = vadd.f32 %v2476, %v436
    %v2485 = vadd.f32 %v2478, %v440
    %s2486 = smul.u32 4, 3
    %s2487 = smul.addr %s2486, 8
    %s2488 = scalar_lea.vmem [#allocation2], %s2487
    %v2489 = vld [vmem:[%s2488] sm:$0xff]
    %v2490 = vld [vmem:[%s2488 + $0x8] sm:$0xff]
    %v2491 = vld [vmem:[%s2488 + $0x10] sm:$0xff]
    %v2492 = vadd.f32 %v2489, %v2480
    %v2493 = vmul.f32 %v2492, 0.5
    %v2494 = vtanh.pop %v2493
    %v2495 = vadd.f32 %v2494, 1.0
    %v2496 = vmul.f32 %v2495, 0.5
    %v2497 = vadd.f32 %v2490, %v2481
    %v2498 = vmul.f32 %v2497, 0.5
    %v2499 = vtanh.pop %v2498
    %v2500 = vadd.f32 %v2499, 1.0
    %v2501 = vmul.f32 %v2500, 0.5
    %v2502 = vmul.f32 %v2496, %v2482
    %v2503 = vadd.f32 %v2491, %v2502
    %v2504 = vtanh.pop %v2503
    %v2505 = vsub.f32 1.0, %v2501
    %v2506 = vmul.f32 %v2505, %v2504
    %v2507 = vmul.f32 %v2501, %v2096
    %v2508 = vadd.f32 %v2506, %v2507
    %2509 = vmatprep.subr.mxu0 %v814
    %2510 = vmatpush1.msra.mxu0 %v813
    %2511 = vmatprep.subr.mxu0 %v817
    %2512 = vmatpush1.msra.mxu0 %v816
    %2513 = vmatprep.subr.mxu0 %v820
    %2514 = vmatpush1.msra.mxu0 %v819
    %2515 = vmatprep.subr.mxu0 %v823
    %2516 = vmatpush1.msra.mxu0 %v822
    %2517 = vmatprep.subr.mxu0 %v826
    %2518 = vmatpush1.msra.mxu0 %v825
    %2519 = vmatprep.subr.mxu0 %v829
    %2520 = vmatpush1.msra.mxu0 %v828
    %2521 = vmatprep.subr.mxu0 %v832
    %2522 = vmatpush1.msra.mxu0 %v831
    %2523 = vmatprep.subr.mxu0 %v835
    %2524 = vmatpush1.msra.mxu0 %v834
    %2525 = vmatprep.subr.mxu0 %v838
    %2526 = vmatpush1.msra.mxu0 %v837
    %2527 = vmatprep.subr.mxu0 %v841
    %2528 = vmatpush1.msra.mxu0 %v840
    %2529 = vmatprep.subr.mxu0 %v844
    %2530 = vmatpush1.msra.mxu0 %v843
    %2531 = vmatprep.subr.mxu0 %v847
    %2532 = vmatpush1.msra.mxu0 %v846
    %2533 = vmatprep.subr.mxu0 %v850
    %2534 = vmatpush1.msra.mxu0 %v849
    %2535 = vmatprep.subr.mxu0 %v853
    %2536 = vmatpush1.msra.mxu0 %v852
    %2537 = vmatprep.subr.mxu0 %v856
    %2538 = vmatpush1.msra.mxu0 %v855
    %2539 = vmatprep.subr.mxu0 %v859
    %2540 = vmatpush1.msra.mxu0 %v858
    %2541 = vmatprep.subr.mxu0 0.0
    %2542 = vmatpush1.msra.mxu0 0.0
    %2543 = vmatprep.subr.mxu0 0.0
    %2544 = vmatpush1.msra.mxu0 0.0
    %2545 = vmatprep.subr.mxu0 0.0
    %2546 = vmatpush1.msra.mxu0 0.0
    %2547 = vmatprep.subr.mxu0 0.0
    %2548 = vmatpush1.msra.mxu0 0.0
    %2549 = vmatprep.subr.mxu0 0.0
    %2550 = vmatpush1.msra.mxu0 0.0
    %2551 = vmatprep.subr.mxu0 0.0
    %2552 = vmatpush1.msra.mxu0 0.0
    %2553 = vmatprep.subr.mxu0 0.0
    %2554 = vmatpush1.msra.mxu0 0.0
    %2555 = vmatprep.subr.mxu0 0.0
    %2556 = vmatpush1.msra.mxu0 0.0
    %2557 = vmatprep.subr.mxu0 0.0
    %2558 = vmatpush1.msra.mxu0 0.0
    %2559 = vmatprep.subr.mxu0 0.0
    %2560 = vmatpush1.msra.mxu0 0.0
    %2561 = vmatprep.subr.mxu0 0.0
    %2562 = vmatpush1.msra.mxu0 0.0
    %2563 = vmatprep.subr.mxu0 0.0
    %2564 = vmatpush1.msra.mxu0 0.0
    %2565 = vmatprep.subr.mxu0 0.0
    %2566 = vmatpush1.msra.mxu0 0.0
    %2567 = vmatprep.subr.mxu0 0.0
    %2568 = vmatpush1.msra.mxu0 0.0
    %2569 = vmatprep.subr.mxu0 0.0
    %2570 = vmatpush1.msra.mxu0 0.0
    %2571 = vmatprep.subr.mxu0 0.0
    %2572 = vmatpush1.msra.mxu0 0.0
    %2573 = vmatprep.mubr.f32.mxu0 0.0
    %2574 = vmatmul.mubr.f32.gmra.mrb[0].mxu0 %v2508
    %v2575 = vpop.f32.mrb[0].mxu0
    %v2576 = vadd.f32 %v449, %v2575
    %v2577 = vpop.f32.mrb[0].mxu0
    %v2578 = vadd.f32 %v453, %v2577
    %2579 = vdwg.mxu0
    %2580 = vmatprep.subr.mxu0 0.0
    %2581 = vmatpush1.msra.mxu0 %v815
    %2582 = vmatprep.subr.mxu0 0.0
    %2583 = vmatpush1.msra.mxu0 %v818
    %2584 = vmatprep.subr.mxu0 0.0
    %2585 = vmatpush1.msra.mxu0 %v821
    %2586 = vmatprep.subr.mxu0 0.0
    %2587 = vmatpush1.msra.mxu0 %v824
    %2588 = vmatprep.subr.mxu0 0.0
    %2589 = vmatpush1.msra.mxu0 %v827
    %2590 = vmatprep.subr.mxu0 0.0
    %2591 = vmatpush1.msra.mxu0 %v830
    %2592 = vmatprep.subr.mxu0 0.0
    %2593 = vmatpush1.msra.mxu0 %v833
    %2594 = vmatprep.subr.mxu0 0.0
    %2595 = vmatpush1.msra.mxu0 %v836
    %2596 = vmatprep.subr.mxu0 0.0
    %2597 = vmatpush1.msra.mxu0 %v839
    %2598 = vmatprep.subr.mxu0 0.0
    %2599 = vmatpush1.msra.mxu0 %v842
    %2600 = vmatprep.subr.mxu0 0.0
    %2601 = vmatpush1.msra.mxu0 %v845
    %2602 = vmatprep.subr.mxu0 0.0
    %2603 = vmatpush1.msra.mxu0 %v848
    %2604 = vmatprep.subr.mxu0 0.0
    %2605 = vmatpush1.msra.mxu0 %v851
    %2606 = vmatprep.subr.mxu0 0.0
    %2607 = vmatpush1.msra.mxu0 %v854
    %2608 = vmatprep.subr.mxu0 0.0
    %2609 = vmatpush1.msra.mxu0 %v857
    %2610 = vmatprep.subr.mxu0 0.0
    %2611 = vmatpush1.msra.mxu0 %v860
    %2612 = vmatprep.subr.mxu0 0.0
    %2613 = vmatpush1.msra.mxu0 0.0
    %2614 = vmatprep.subr.mxu0 0.0
    %2615 = vmatpush1.msra.mxu0 0.0
    %2616 = vmatprep.subr.mxu0 0.0
    %2617 = vmatpush1.msra.mxu0 0.0
    %2618 = vmatprep.subr.mxu0 0.0
    %2619 = vmatpush1.msra.mxu0 0.0
    %2620 = vmatprep.subr.mxu0 0.0
    %2621 = vmatpush1.msra.mxu0 0.0
    %2622 = vmatprep.subr.mxu0 0.0
    %2623 = vmatpush1.msra.mxu0 0.0
    %2624 = vmatprep.subr.mxu0 0.0
    %2625 = vmatpush1.msra.mxu0 0.0
    %2626 = vmatprep.subr.mxu0 0.0
    %2627 = vmatpush1.msra.mxu0 0.0
    %2628 = vmatprep.subr.mxu0 0.0
    %2629 = vmatpush1.msra.mxu0 0.0
    %2630 = vmatprep.subr.mxu0 0.0
    %2631 = vmatpush1.msra.mxu0 0.0
    %2632 = vmatprep.subr.mxu0 0.0
    %2633 = vmatpush1.msra.mxu0 0.0
    %2634 = vmatprep.subr.mxu0 0.0
    %2635 = vmatpush1.msra.mxu0 0.0
    %2636 = vmatprep.subr.mxu0 0.0
    %2637 = vmatpush1.msra.mxu0 0.0
    %2638 = vmatprep.subr.mxu0 0.0
    %2639 = vmatpush1.msra.mxu0 0.0
    %2640 = vmatprep.subr.mxu0 0.0
    %2641 = vmatpush1.msra.mxu0 0.0
    %2642 = vmatprep.subr.mxu0 0.0
    %2643 = vmatpush1.msra.mxu0 0.0
    %2644 = vmatprep.mubr.f32.mxu0 0.0
    %2645 = vmatmul.mubr.f32.gmra.mrb[0].mxu0 %v2508
    %v2646 = vpop.f32.mrb[0].mxu0
    %v2647 = vadd.f32 %v457, %v2646
    %v2648 = vpop.f32.mrb[0].mxu0
    %2649 = vdwg.mxu0
    %v2650 = vadd.f32 %v2576, %v2483
    %v2651 = vmul.f32 %v2650, 0.5
    %v2652 = vtanh.pop %v2651
    %v2653 = vadd.f32 %v2652, 1.0
    %v2654 = vmul.f32 %v2653, 0.5
    %v2655 = vadd.f32 %v2578, %v2484
    %v2656 = vmul.f32 %v2655, 0.5
    %v2657 = vtanh.pop %v2656
    %v2658 = vadd.f32 %v2657, 1.0
    %v2659 = vmul.f32 %v2658, 0.5
    %v2660 = vmul.f32 %v2654, %v2485
    %v2661 = vadd.f32 %v2647, %v2660
    %v2662 = vtanh.pop %v2661
    %v2663 = vsub.f32 1.0, %v2659
    %v2664 = vmul.f32 %v2663, %v2662
    %v2665 = vmul.f32 %v2659, %v2254
    %v2666 = vadd.f32 %v2664, %v2665
    %2667 = vmatprep.subr.mxu0 %v464
    %2668 = vmatpush1.msra.mxu0 %v463
    %2669 = vmatprep.subr.mxu0 %v470
    %2670 = vmatpush1.msra.mxu0 %v469
    %2671 = vmatprep.subr.mxu0 %v476
    %2672 = vmatpush1.msra.mxu0 %v475
    %2673 = vmatprep.subr.mxu0 %v482
    %2674 = vmatpush1.msra.mxu0 %v481
    %2675 = vmatprep.subr.mxu0 %v488
    %2676 = vmatpush1.msra.mxu0 %v487
    %2677 = vmatprep.subr.mxu0 %v494
    %2678 = vmatpush1.msra.mxu0 %v493
    %2679 = vmatprep.subr.mxu0 %v500
    %2680 = vmatpush1.msra.mxu0 %v499
    %2681 = vmatprep.subr.mxu0 %v506
    %2682 = vmatpush1.msra.mxu0 %v505
    %2683 = vmatprep.subr.mxu0 %v512
    %2684 = vmatpush1.msra.mxu0 %v511
    %2685 = vmatprep.subr.mxu0 %v518
    %2686 = vmatpush1.msra.mxu0 %v517
    %2687 = vmatprep.subr.mxu0 %v524
    %2688 = vmatpush1.msra.mxu0 %v523
    %2689 = vmatprep.subr.mxu0 %v530
    %2690 = vmatpush1.msra.mxu0 %v529
    %2691 = vmatprep.subr.mxu0 %v536
    %2692 = vmatpush1.msra.mxu0 %v535
    %2693 = vmatprep.subr.mxu0 %v542
    %2694 = vmatpush1.msra.mxu0 %v541
    %2695 = vmatprep.subr.mxu0 %v548
    %2696 = vmatpush1.msra.mxu0 %v547
    %2697 = vmatprep.subr.mxu0 %v554
    %2698 = vmatpush1.msra.mxu0 %v553
    %2699 = vmatprep.subr.mxu0 0.0
    %2700 = vmatpush1.msra.mxu0 0.0
    %2701 = vmatprep.subr.mxu0 0.0
    %2702 = vmatpush1.msra.mxu0 0.0
    %2703 = vmatprep.subr.mxu0 0.0
    %2704 = vmatpush1.msra.mxu0 0.0
    %2705 = vmatprep.subr.mxu0 0.0
    %2706 = vmatpush1.msra.mxu0 0.0
    %2707 = vmatprep.subr.mxu0 0.0
    %2708 = vmatpush1.msra.mxu0 0.0
    %2709 = vmatprep.subr.mxu0 0.0
    %2710 = vmatpush1.msra.mxu0 0.0
    %2711 = vmatprep.subr.mxu0 0.0
    %2712 = vmatpush1.msra.mxu0 0.0
    %2713 = vmatprep.subr.mxu0 0.0
    %2714 = vmatpush1.msra.mxu0 0.0
    %2715 = vmatprep.subr.mxu0 0.0
    %2716 = vmatpush1.msra.mxu0 0.0
    %2717 = vmatprep.subr.mxu0 0.0
    %2718 = vmatpush1.msra.mxu0 0.0
    %2719 = vmatprep.subr.mxu0 0.0
    %2720 = vmatpush1.msra.mxu0 0.0
    %2721 = vmatprep.subr.mxu0 0.0
    %2722 = vmatpush1.msra.mxu0 0.0
    %2723 = vmatprep.subr.mxu0 0.0
    %2724 = vmatpush1.msra.mxu0 0.0
    %2725 = vmatprep.subr.mxu0 0.0
    %2726 = vmatpush1.msra.mxu0 0.0
    %2727 = vmatprep.subr.mxu0 0.0
    %2728 = vmatpush1.msra.mxu0 0.0
    %2729 = vmatprep.subr.mxu0 0.0
    %2730 = vmatpush1.msra.mxu0 0.0
    %2731 = vmatprep.mubr.f32.mxu0 0.0
    %2732 = vmatmul.mubr.f32.gmra.mrb[0].mxu0 %v2508
    %v2733 = vpop.f32.mrb[0].mxu0
    %v2734 = vadd.f32 0.0, %v2733
    %v2735 = vpop.f32.mrb[0].mxu0
    %v2736 = vadd.f32 0.0, %v2735
    %2737 = vmatprep.mubr.f32.mxu0 0.0
    %2738 = vmatmul.mubr.f32.gmra.mrb[0].mxu0 %v2666
    %v2739 = vpop.f32.mrb[0].mxu0
    %v2740 = vpop.f32.mrb[0].mxu0
    %2741 = vdwg.mxu0
    %2742 = vmatprep.subr.mxu0 %v466
    %2743 = vmatpush1.msra.mxu0 %v465
    %2744 = vmatprep.subr.mxu0 %v472
    %2745 = vmatpush1.msra.mxu0 %v471
    %2746 = vmatprep.subr.mxu0 %v478
    %2747 = vmatpush1.msra.mxu0 %v477
    %2748 = vmatprep.subr.mxu0 %v484
    %2749 = vmatpush1.msra.mxu0 %v483
    %2750 = vmatprep.subr.mxu0 %v490
    %2751 = vmatpush1.msra.mxu0 %v489
    %2752 = vmatprep.subr.mxu0 %v496
    %2753 = vmatpush1.msra.mxu0 %v495
    %2754 = vmatprep.subr.mxu0 %v502
    %2755 = vmatpush1.msra.mxu0 %v501
    %2756 = vmatprep.subr.mxu0 %v508
    %2757 = vmatpush1.msra.mxu0 %v507
    %2758 = vmatprep.subr.mxu0 %v514
    %2759 = vmatpush1.msra.mxu0 %v513
    %2760 = vmatprep.subr.mxu0 %v520
    %2761 = vmatpush1.msra.mxu0 %v519
    %2762 = vmatprep.subr.mxu0 %v526
    %2763 = vmatpush1.msra.mxu0 %v525
    %2764 = vmatprep.subr.mxu0 %v532
    %2765 = vmatpush1.msra.mxu0 %v531
    %2766 = vmatprep.subr.mxu0 %v538
    %2767 = vmatpush1.msra.mxu0 %v537
    %2768 = vmatprep.subr.mxu0 %v544
    %2769 = vmatpush1.msra.mxu0 %v543
    %2770 = vmatprep.subr.mxu0 %v550
    %2771 = vmatpush1.msra.mxu0 %v549
    %2772 = vmatprep.subr.mxu0 %v556
    %2773 = vmatpush1.msra.mxu0 %v555
    %2774 = vmatprep.subr.mxu0 0.0
    %2775 = vmatpush1.msra.mxu0 0.0
    %2776 = vmatprep.subr.mxu0 0.0
    %2777 = vmatpush1.msra.mxu0 0.0
    %2778 = vmatprep.subr.mxu0 0.0
    %2779 = vmatpush1.msra.mxu0 0.0
    %2780 = vmatprep.subr.mxu0 0.0
    %2781 = vmatpush1.msra.mxu0 0.0
    %2782 = vmatprep.subr.mxu0 0.0
    %2783 = vmatpush1.msra.mxu0 0.0
    %2784 = vmatprep.subr.mxu0 0.0
    %2785 = vmatpush1.msra.mxu0 0.0
    %2786 = vmatprep.subr.mxu0 0.0
    %2787 = vmatpush1.msra.mxu0 0.0
    %2788 = vmatprep.subr.mxu0 0.0
    %2789 = vmatpush1.msra.mxu0 0.0
    %2790 = vmatprep.subr.mxu0 0.0
    %2791 = vmatpush1.msra.mxu0 0.0
    %2792 = vmatprep.subr.mxu0 0.0
    %2793 = vmatpush1.msra.mxu0 0.0
    %2794 = vmatprep.subr.mxu0 0.0
    %2795 = vmatpush1.msra.mxu0 0.0
    %2796 = vmatprep.subr.mxu0 0.0
    %2797 = vmatpush1.msra.mxu0 0.0
    %2798 = vmatprep.subr.mxu0 0.0
    %2799 = vmatpush1.msra.mxu0 0.0
    %2800 = vmatprep.subr.mxu0 0.0
    %2801 = vmatpush1.msra.mxu0 0.0
    %2802 = vmatprep.subr.mxu0 0.0
    %2803 = vmatpush1.msra.mxu0 0.0
    %2804 = vmatprep.subr.mxu0 0.0
    %2805 = vmatpush1.msra.mxu0 0.0
    %2806 = vmatprep.mubr.f32.mxu0 0.0
    %2807 = vmatmul.mubr.f32.gmra.mrb[0].mxu0 %v2508
    %v2808 = vpop.f32.mrb[0].mxu0
    %v2809 = vadd.f32 0.0, %v2808
    %v2810 = vpop.f32.mrb[0].mxu0
    %2811 = vmatprep.mubr.f32.mxu0 0.0
    %2812 = vmatmul.mubr.f32.gmra.mrb[0].mxu0 %v2666
    %v2813 = vpop.f32.mrb[0].mxu0
    %v2814 = vpop.f32.mrb[0].mxu0
    %v2815 = vadd.f32 0.0, %v2814
    %2816 = vdwg.mxu0
    %2817 = vmatprep.subr.mxu0 %v468
    %2818 = vmatpush1.msra.mxu0 %v467
    %2819 = vmatprep.subr.mxu0 %v474
    %2820 = vmatpush1.msra.mxu0 %v473
    %2821 = vmatprep.subr.mxu0 %v480
    %2822 = vmatpush1.msra.mxu0 %v479
    %2823 = vmatprep.subr.mxu0 %v486
    %2824 = vmatpush1.msra.mxu0 %v485
    %2825 = vmatprep.subr.mxu0 %v492
    %2826 = vmatpush1.msra.mxu0 %v491
    %2827 = vmatprep.subr.mxu0 %v498
    %2828 = vmatpush1.msra.mxu0 %v497
    %2829 = vmatprep.subr.mxu0 %v504
    %2830 = vmatpush1.msra.mxu0 %v503
    %2831 = vmatprep.subr.mxu0 %v510
    %2832 = vmatpush1.msra.mxu0 %v509
    %2833 = vmatprep.subr.mxu0 %v516
    %2834 = vmatpush1.msra.mxu0 %v515
    %2835 = vmatprep.subr.mxu0 %v522
    %2836 = vmatpush1.msra.mxu0 %v521
    %2837 = vmatprep.subr.mxu0 %v528
    %2838 = vmatpush1.msra.mxu0 %v527
    %2839 = vmatprep.subr.mxu0 %v534
    %2840 = vmatpush1.msra.mxu0 %v533
    %2841 = vmatprep.subr.mxu0 %v540
    %2842 = vmatpush1.msra.mxu0 %v539
    %2843 = vmatprep.subr.mxu0 %v546
    %2844 = vmatpush1.msra.mxu0 %v545
    %2845 = vmatprep.subr.mxu0 %v552
    %2846 = vmatpush1.msra.mxu0 %v551
    %2847 = vmatprep.subr.mxu0 %v558
    %2848 = vmatpush1.msra.mxu0 %v557
    %2849 = vmatprep.subr.mxu0 0.0
    %2850 = vmatpush1.msra.mxu0 0.0
    %2851 = vmatprep.subr.mxu0 0.0
    %2852 = vmatpush1.msra.mxu0 0.0
    %2853 = vmatprep.subr.mxu0 0.0
    %2854 = vmatpush1.msra.mxu0 0.0
    %2855 = vmatprep.subr.mxu0 0.0
    %2856 = vmatpush1.msra.mxu0 0.0
    %2857 = vmatprep.subr.mxu0 0.0
    %2858 = vmatpush1.msra.mxu0 0.0
    %2859 = vmatprep.subr.mxu0 0.0
    %2860 = vmatpush1.msra.mxu0 0.0
    %2861 = vmatprep.subr.mxu0 0.0
    %2862 = vmatpush1.msra.mxu0 0.0
    %2863 = vmatprep.subr.mxu0 0.0
    %2864 = vmatpush1.msra.mxu0 0.0
    %2865 = vmatprep.subr.mxu0 0.0
    %2866 = vmatpush1.msra.mxu0 0.0
    %2867 = vmatprep.subr.mxu0 0.0
    %2868 = vmatpush1.msra.mxu0 0.0
    %2869 = vmatprep.subr.mxu0 0.0
    %2870 = vmatpush1.msra.mxu0 0.0
    %2871 = vmatprep.subr.mxu0 0.0
    %2872 = vmatpush1.msra.mxu0 0.0
    %2873 = vmatprep.subr.mxu0 0.0
    %2874 = vmatpush1.msra.mxu0 0.0
    %2875 = vmatprep.subr.mxu0 0.0
    %2876 = vmatpush1.msra.mxu0 0.0
    %2877 = vmatprep.subr.mxu0 0.0
    %2878 = vmatpush1.msra.mxu0 0.0
    %2879 = vmatprep.subr.mxu0 0.0
    %2880 = vmatpush1.msra.mxu0 0.0
    %2881 = vmatprep.mubr.f32.mxu0 0.0
    %2882 = vmatmul.mubr.f32.gmra.mrb[0].mxu0 %v2508
    %v2883 = vpop.f32.mrb[0].mxu0
    %v2884 = vpop.f32.mrb[0].mxu0
    %2885 = vmatprep.mubr.f32.mxu0 0.0
    %2886 = vmatmul.mubr.f32.gmra.mrb[0].mxu0 %v2666
    %v2887 = vpop.f32.mrb[0].mxu0
    %v2888 = vadd.f32 0.0, %v2887
    %v2889 = vpop.f32.mrb[0].mxu0
    %v2890 = vadd.f32 0.0, %v2889
    %2891 = vdwg.mxu0
    %v2892 = vadd.f32 %v2734, %v415
    %v2893 = vadd.f32 %v2736, %v419
    %v2894 = vadd.f32 %v2809, %v423
    %v2895 = vadd.f32 %v2815, %v432
    %v2896 = vadd.f32 %v2888, %v436
    %v2897 = vadd.f32 %v2890, %v440
    %s2898 = smul.u32 5, 3
    %s2899 = smul.addr %s2898, 8
    %s2900 = scalar_lea.vmem [#allocation2], %s2899
    %v2901 = vld [vmem:[%s2900] sm:$0xff]
    %v2902 = vld [vmem:[%s2900 + $0x8] sm:$0xff]
    %v2903 = vld [vmem:[%s2900 + $0x10] sm:$0xff]
    %v2904 = vadd.f32 %v2901, %v2892
    %v2905 = vmul.f32 %v2904, 0.5
    %v2906 = vtanh.pop %v2905
    %v2907 = vadd.f32 %v2906, 1.0
    %v2908 = vmul.f32 %v2907, 0.5
    %v2909 = vadd.f32 %v2902, %v2893
    %v2910 = vmul.f32 %v2909, 0.5
    %v2911 = vtanh.pop %v2910
    %v2912 = vadd.f32 %v2911, 1.0
    %v2913 = vmul.f32 %v2912, 0.5
    %v2914 = vmul.f32 %v2908, %v2894
    %v2915 = vadd.f32 %v2903, %v2914
    %v2916 = vtanh.pop %v2915
    %v2917 = vsub.f32 1.0, %v2913
    %v2918 = vmul.f32 %v2917, %v2916
    %v2919 = vmul.f32 %v2913, %v2508
    %v2920 = vadd.f32 %v2918, %v2919
    %2921 = vmatprep.subr.mxu0 %v814
    %2922 = vmatpush1.msra.mxu0 %v813
    %2923 = vmatprep.subr.mxu0 %v817
    %2924 = vmatpush1.msra.mxu0 %v816
    %2925 = vmatprep.subr.mxu0 %v820
    %2926 = vmatpush1.msra.mxu0 %v819
    %2927 = vmatprep.subr.mxu0 %v823
    %2928 = vmatpush1.msra.mxu0 %v822
    %2929 = vmatprep.subr.mxu0 %v826
    %2930 = vmatpush1.msra.mxu0 %v825
    %2931 = vmatprep.subr.mxu0 %v829
    %2932 = vmatpush1.msra.mxu0 %v828
    %2933 = vmatprep.subr.mxu0 %v832
    %2934 = vmatpush1.msra.mxu0 %v831
    %2935 = vmatprep.subr.mxu0 %v835
    %2936 = vmatpush1.msra.mxu0 %v834
    %2937 = vmatprep.subr.mxu0 %v838
    %2938 = vmatpush1.msra.mxu0 %v837
    %2939 = vmatprep.subr.mxu0 %v841
    %2940 = vmatpush1.msra.mxu0 %v840
    %2941 = vmatprep.subr.mxu0 %v844
    %2942 = vmatpush1.msra.mxu0 %v843
    %2943 = vmatprep.subr.mxu0 %v847
    %2944 = vmatpush1.msra.mxu0 %v846
    %2945 = vmatprep.subr.mxu0 %v850
    %2946 = vmatpush1.msra.mxu0 %v849
    %2947 = vmatprep.subr.mxu0 %v853
    %2948 = vmatpush1.msra.mxu0 %v852
    %2949 = vmatprep.subr.mxu0 %v856
    %2950 = vmatpush1.msra.mxu0 %v855
    %2951 = vmatprep.subr.mxu0 %v859
    %2952 = vmatpush1.msra.mxu0 %v858
    %2953 = vmatprep.subr.mxu0 0.0
    %2954 = vmatpush1.msra.mxu0 0.0
    %2955 = vmatprep.subr.mxu0 0.0
    %2956 = vmatpush1.msra.mxu0 0.0
    %2957 = vmatprep.subr.mxu0 0.0
    %2958 = vmatpush1.msra.mxu0 0.0
    %2959 = vmatprep.subr.mxu0 0.0
    %2960 = vmatpush1.msra.mxu0 0.0
    %2961 = vmatprep.subr.mxu0 0.0
    %2962 = vmatpush1.msra.mxu0 0.0
    %2963 = vmatprep.subr.mxu0 0.0
    %2964 = vmatpush1.msra.mxu0 0.0
    %2965 = vmatprep.subr.mxu0 0.0
    %2966 = vmatpush1.msra.mxu0 0.0
    %2967 = vmatprep.subr.mxu0 0.0
    %2968 = vmatpush1.msra.mxu0 0.0
    %2969 = vmatprep.subr.mxu0 0.0
    %2970 = vmatpush1.msra.mxu0 0.0
    %2971 = vmatprep.subr.mxu0 0.0
    %2972 = vmatpush1.msra.mxu0 0.0
    %2973 = vmatprep.subr.mxu0 0.0
    %2974 = vmatpush1.msra.mxu0 0.0
    %2975 = vmatprep.subr.mxu0 0.0
    %2976 = vmatpush1.msra.mxu0 0.0
    %2977 = vmatprep.subr.mxu0 0.0
    %2978 = vmatpush1.msra.mxu0 0.0
    %2979 = vmatprep.subr.mxu0 0.0
    %2980 = vmatpush1.msra.mxu0 0.0
    %2981 = vmatprep.subr.mxu0 0.0
    %2982 = vmatpush1.msra.mxu0 0.0
    %2983 = vmatprep.subr.mxu0 0.0
    %2984 = vmatpush1.msra.mxu0 0.0
    %2985 = vmatprep.mubr.f32.mxu0 0.0
    %2986 = vmatmul.mubr.f32.gmra.mrb[0].mxu0 %v2920
    %v2987 = vpop.f32.mrb[0].mxu0
    %v2988 = vadd.f32 %v449, %v2987
    %v2989 = vpop.f32.mrb[0].mxu0
    %v2990 = vadd.f32 %v453, %v2989
    %2991 = vdwg.mxu0
    %2992 = vmatprep.subr.mxu0 0.0
    %2993 = vmatpush1.msra.mxu0 %v815
    %2994 = vmatprep.subr.mxu0 0.0
    %2995 = vmatpush1.msra.mxu0 %v818
    %2996 = vmatprep.subr.mxu0 0.0
    %2997 = vmatpush1.msra.mxu0 %v821
    %2998 = vmatprep.subr.mxu0 0.0
    %2999 = vmatpush1.msra.mxu0 %v824
    %3000 = vmatprep.subr.mxu0 0.0
    %3001 = vmatpush1.msra.mxu0 %v827
    %3002 = vmatprep.subr.mxu0 0.0
    %3003 = vmatpush1.msra.mxu0 %v830
    %3004 = vmatprep.subr.mxu0 0.0
    %3005 = vmatpush1.msra.mxu0 %v833
    %3006 = vmatprep.subr.mxu0 0.0
    %3007 = vmatpush1.msra.mxu0 %v836
    %3008 = vmatprep.subr.mxu0 0.0
    %3009 = vmatpush1.msra.mxu0 %v839
    %3010 = vmatprep.subr.mxu0 0.0
    %3011 = vmatpush1.msra.mxu0 %v842
    %3012 = vmatprep.subr.mxu0 0.0
    %3013 = vmatpush1.msra.mxu0 %v845
    %3014 = vmatprep.subr.mxu0 0.0
    %3015 = vmatpush1.msra.mxu0 %v848
    %3016 = vmatprep.subr.mxu0 0.0
    %3017 = vmatpush1.msra.mxu0 %v851
    %3018 = vmatprep.subr.mxu0 0.0
    %3019 = vmatpush1.msra.mxu0 %v854
    %3020 = vmatprep.subr.mxu0 0.0
    %3021 = vmatpush1.msra.mxu0 %v857
    %3022 = vmatprep.subr.mxu0 0.0
    %3023 = vmatpush1.msra.mxu0 %v860
    %3024 = vmatprep.subr.mxu0 0.0
    %3025 = vmatpush1.msra.mxu0 0.0
    %3026 = vmatprep.subr.mxu0 0.0
    %3027 = vmatpush1.msra.mxu0 0.0
    %3028 = vmatprep.subr.mxu0 0.0
    %3029 = vmatpush1.msra.mxu0 0.0
    %3030 = vmatprep.subr.mxu0 0.0
    %3031 = vmatpush1.msra.mxu0 0.0
    %3032 = vmatprep.subr.mxu0 0.0
    %3033 = vmatpush1.msra.mxu0 0.0
    %3034 = vmatprep.subr.mxu0 0.0
    %3035 = vmatpush1.msra.mxu0 0.0
    %3036 = vmatprep.subr.mxu0 0.0
    %3037 = vmatpush1.msra.mxu0 0.0
    %3038 = vmatprep.subr.mxu0 0.0
    %3039 = vmatpush1.msra.mxu0 0.0
    %3040 = vmatprep.subr.mxu0 0.0
    %3041 = vmatpush1.msra.mxu0 0.0
    %3042 = vmatprep.subr.mxu0 0.0
    %3043 = vmatpush1.msra.mxu0 0.0
    %3044 = vmatprep.subr.mxu0 0.0
    %3045 = vmatpush1.msra.mxu0 0.0
    %3046 = vmatprep.subr.mxu0 0.0
    %3047 = vmatpush1.msra.mxu0 0.0
    %3048 = vmatprep.subr.mxu0 0.0
    %3049 = vmatpush1.msra.mxu0 0.0
    %3050 = vmatprep.subr.mxu0 0.0
    %3051 = vmatpush1.msra.mxu0 0.0
    %3052 = vmatprep.subr.mxu0 0.0
    %3053 = vmatpush1.msra.mxu0 0.0
    %3054 = vmatprep.subr.mxu0 0.0
    %3055 = vmatpush1.msra.mxu0 0.0
    %3056 = vmatprep.mubr.f32.mxu0 0.0
    %3057 = vmatmul.mubr.f32.gmra.mrb[0].mxu0 %v2920
    %v3058 = vpop.f32.mrb[0].mxu0
    %v3059 = vadd.f32 %v457, %v3058
    %v3060 = vpop.f32.mrb[0].mxu0
    %3061 = vdwg.mxu0
    %v3062 = vadd.f32 %v2988, %v2895
    %v3063 = vmul.f32 %v3062, 0.5
    %v3064 = vtanh.pop %v3063
    %v3065 = vadd.f32 %v3064, 1.0
    %v3066 = vmul.f32 %v3065, 0.5
    %v3067 = vadd.f32 %v2990, %v2896
    %v3068 = vmul.f32 %v3067, 0.5
    %v3069 = vtanh.pop %v3068
    %v3070 = vadd.f32 %v3069, 1.0
    %v3071 = vmul.f32 %v3070, 0.5
    %v3072 = vmul.f32 %v3066, %v2897
    %v3073 = vadd.f32 %v3059, %v3072
    %v3074 = vtanh.pop %v3073
    %v3075 = vsub.f32 1.0, %v3071
    %v3076 = vmul.f32 %v3075, %v3074
    %v3077 = vmul.f32 %v3071, %v2666
    %v3078 = vadd.f32 %v3076, %v3077
    %3079 = vmatprep.subr.mxu0 %v464
    %3080 = vmatpush1.msra.mxu0 %v463
    %3081 = vmatprep.subr.mxu0 %v470
    %3082 = vmatpush1.msra.mxu0 %v469
    %3083 = vmatprep.subr.mxu0 %v476
    %3084 = vmatpush1.msra.mxu0 %v475
    %3085 = vmatprep.subr.mxu0 %v482
    %3086 = vmatpush1.msra.mxu0 %v481
    %3087 = vmatprep.subr.mxu0 %v488
    %3088 = vmatpush1.msra.mxu0 %v487
    %3089 = vmatprep.subr.mxu0 %v494
    %3090 = vmatpush1.msra.mxu0 %v493
    %3091 = vmatprep.subr.mxu0 %v500
    %3092 = vmatpush1.msra.mxu0 %v499
    %3093 = vmatprep.subr.mxu0 %v506
    %3094 = vmatpush1.msra.mxu0 %v505
    %3095 = vmatprep.subr.mxu0 %v512
    %3096 = vmatpush1.msra.mxu0 %v511
    %3097 = vmatprep.subr.mxu0 %v518
    %3098 = vmatpush1.msra.mxu0 %v517
    %3099 = vmatprep.subr.mxu0 %v524
    %3100 = vmatpush1.msra.mxu0 %v523
    %3101 = vmatprep.subr.mxu0 %v530
    %3102 = vmatpush1.msra.mxu0 %v529
    %3103 = vmatprep.subr.mxu0 %v536
    %3104 = vmatpush1.msra.mxu0 %v535
    %3105 = vmatprep.subr.mxu0 %v542
    %3106 = vmatpush1.msra.mxu0 %v541
    %3107 = vmatprep.subr.mxu0 %v548
    %3108 = vmatpush1.msra.mxu0 %v547
    %3109 = vmatprep.subr.mxu0 %v554
    %3110 = vmatpush1.msra.mxu0 %v553
    %3111 = vmatprep.subr.mxu0 0.0
    %3112 = vmatpush1.msra.mxu0 0.0
    %3113 = vmatprep.subr.mxu0 0.0
    %3114 = vmatpush1.msra.mxu0 0.0
    %3115 = vmatprep.subr.mxu0 0.0
    %3116 = vmatpush1.msra.mxu0 0.0
    %3117 = vmatprep.subr.mxu0 0.0
    %3118 = vmatpush1.msra.mxu0 0.0
    %3119 = vmatprep.subr.mxu0 0.0
    %3120 = vmatpush1.msra.mxu0 0.0
    %3121 = vmatprep.subr.mxu0 0.0
    %3122 = vmatpush1.msra.mxu0 0.0
    %3123 = vmatprep.subr.mxu0 0.0
    %3124 = vmatpush1.msra.mxu0 0.0
    %3125 = vmatprep.subr.mxu0 0.0
    %3126 = vmatpush1.msra.mxu0 0.0
    %3127 = vmatprep.subr.mxu0 0.0
    %3128 = vmatpush1.msra.mxu0 0.0
    %3129 = vmatprep.subr.mxu0 0.0
    %3130 = vmatpush1.msra.mxu0 0.0
    %3131 = vmatprep.subr.mxu0 0.0
    %3132 = vmatpush1.msra.mxu0 0.0
    %3133 = vmatprep.subr.mxu0 0.0
    %3134 = vmatpush1.msra.mxu0 0.0
    %3135 = vmatprep.subr.mxu0 0.0
    %3136 = vmatpush1.msra.mxu0 0.0
    %3137 = vmatprep.subr.mxu0 0.0
    %3138 = vmatpush1.msra.mxu0 0.0
    %3139 = vmatprep.subr.mxu0 0.0
    %3140 = vmatpush1.msra.mxu0 0.0
    %3141 = vmatprep.subr.mxu0 0.0
    %3142 = vmatpush1.msra.mxu0 0.0
    %3143 = vmatprep.mubr.f32.mxu0 0.0
    %3144 = vmatmul.mubr.f32.gmra.mrb[0].mxu0 %v2920
    %v3145 = vpop.f32.mrb[0].mxu0
    %v3146 = vadd.f32 0.0, %v3145
    %v3147 = vpop.f32.mrb[0].mxu0
    %v3148 = vadd.f32 0.0, %v3147
    %3149 = vmatprep.mubr.f32.mxu0 0.0
    %3150 = vmatmul.mubr.f32.gmra.mrb[0].mxu0 %v3078
    %v3151 = vpop.f32.mrb[0].mxu0
    %v3152 = vpop.f32.mrb[0].mxu0
    %3153 = vdwg.mxu0
    %3154 = vmatprep.subr.mxu0 %v466
    %3155 = vmatpush1.msra.mxu0 %v465
    %3156 = vmatprep.subr.mxu0 %v472
    %3157 = vmatpush1.msra.mxu0 %v471
    %3158 = vmatprep.subr.mxu0 %v478
    %3159 = vmatpush1.msra.mxu0 %v477
    %3160 = vmatprep.subr.mxu0 %v484
    %3161 = vmatpush1.msra.mxu0 %v483
    %3162 = vmatprep.subr.mxu0 %v490
    %3163 = vmatpush1.msra.mxu0 %v489
    %3164 = vmatprep.subr.mxu0 %v496
    %3165 = vmatpush1.msra.mxu0 %v495
    %3166 = vmatprep.subr.mxu0 %v502
    %3167 = vmatpush1.msra.mxu0 %v501
    %3168 = vmatprep.subr.mxu0 %v508
    %3169 = vmatpush1.msra.mxu0 %v507
    %3170 = vmatprep.subr.mxu0 %v514
    %3171 = vmatpush1.msra.mxu0 %v513
    %3172 = vmatprep.subr.mxu0 %v520
    %3173 = vmatpush1.msra.mxu0 %v519
    %3174 = vmatprep.subr.mxu0 %v526
    %3175 = vmatpush1.msra.mxu0 %v525
    %3176 = vmatprep.subr.mxu0 %v532
    %3177 = vmatpush1.msra.mxu0 %v531
    %3178 = vmatprep.subr.mxu0 %v538
    %3179 = vmatpush1.msra.mxu0 %v537
    %3180 = vmatprep.subr.mxu0 %v544
    %3181 = vmatpush1.msra.mxu0 %v543
    %3182 = vmatprep.subr.mxu0 %v550
    %3183 = vmatpush1.msra.mxu0 %v549
    %3184 = vmatprep.subr.mxu0 %v556
    %3185 = vmatpush1.msra.mxu0 %v555
    %3186 = vmatprep.subr.mxu0 0.0
    %3187 = vmatpush1.msra.mxu0 0.0
    %3188 = vmatprep.subr.mxu0 0.0
    %3189 = vmatpush1.msra.mxu0 0.0
    %3190 = vmatprep.subr.mxu0 0.0
    %3191 = vmatpush1.msra.mxu0 0.0
    %3192 = vmatprep.subr.mxu0 0.0
    %3193 = vmatpush1.msra.mxu0 0.0
    %3194 = vmatprep.subr.mxu0 0.0
    %3195 = vmatpush1.msra.mxu0 0.0
    %3196 = vmatprep.subr.mxu0 0.0
    %3197 = vmatpush1.msra.mxu0 0.0
    %3198 = vmatprep.subr.mxu0 0.0
    %3199 = vmatpush1.msra.mxu0 0.0
    %3200 = vmatprep.subr.mxu0 0.0
    %3201 = vmatpush1.msra.mxu0 0.0
    %3202 = vmatprep.subr.mxu0 0.0
    %3203 = vmatpush1.msra.mxu0 0.0
    %3204 = vmatprep.subr.mxu0 0.0
    %3205 = vmatpush1.msra.mxu0 0.0
    %3206 = vmatprep.subr.mxu0 0.0
    %3207 = vmatpush1.msra.mxu0 0.0
    %3208 = vmatprep.subr.mxu0 0.0
    %3209 = vmatpush1.msra.mxu0 0.0
    %3210 = vmatprep.subr.mxu0 0.0
    %3211 = vmatpush1.msra.mxu0 0.0
    %3212 = vmatprep.subr.mxu0 0.0
    %3213 = vmatpush1.msra.mxu0 0.0
    %3214 = vmatprep.subr.mxu0 0.0
    %3215 = vmatpush1.msra.mxu0 0.0
    %3216 = vmatprep.subr.mxu0 0.0
    %3217 = vmatpush1.msra.mxu0 0.0
    %3218 = vmatprep.mubr.f32.mxu0 0.0
    %3219 = vmatmul.mubr.f32.gmra.mrb[0].mxu0 %v2920
    %v3220 = vpop.f32.mrb[0].mxu0
    %v3221 = vadd.f32 0.0, %v3220
    %v3222 = vpop.f32.mrb[0].mxu0
    %3223 = vmatprep.mubr.f32.mxu0 0.0
    %3224 = vmatmul.mubr.f32.gmra.mrb[0].mxu0 %v3078
    %v3225 = vpop.f32.mrb[0].mxu0
    %v3226 = vpop.f32.mrb[0].mxu0
    %v3227 = vadd.f32 0.0, %v3226
    %3228 = vdwg.mxu0
    %3229 = vmatprep.subr.mxu0 %v468
    %3230 = vmatpush1.msra.mxu0 %v467
    %3231 = vmatprep.subr.mxu0 %v474
    %3232 = vmatpush1.msra.mxu0 %v473
    %3233 = vmatprep.subr.mxu0 %v480
    %3234 = vmatpush1.msra.mxu0 %v479
    %3235 = vmatprep.subr.mxu0 %v486
    %3236 = vmatpush1.msra.mxu0 %v485
    %3237 = vmatprep.subr.mxu0 %v492
    %3238 = vmatpush1.msra.mxu0 %v491
    %3239 = vmatprep.subr.mxu0 %v498
    %3240 = vmatpush1.msra.mxu0 %v497
    %3241 = vmatprep.subr.mxu0 %v504
    %3242 = vmatpush1.msra.mxu0 %v503
    %3243 = vmatprep.subr.mxu0 %v510
    %3244 = vmatpush1.msra.mxu0 %v509
    %3245 = vmatprep.subr.mxu0 %v516
    %3246 = vmatpush1.msra.mxu0 %v515
    %3247 = vmatprep.subr.mxu0 %v522
    %3248 = vmatpush1.msra.mxu0 %v521
    %3249 = vmatprep.subr.mxu0 %v528
    %3250 = vmatpush1.msra.mxu0 %v527
    %3251 = vmatprep.subr.mxu0 %v534
    %3252 = vmatpush1.msra.mxu0 %v533
    %3253 = vmatprep.subr.mxu0 %v540
    %3254 = vmatpush1.msra.mxu0 %v539
    %3255 = vmatprep.subr.mxu0 %v546
    %3256 = vmatpush1.msra.mxu0 %v545
    %3257 = vmatprep.subr.mxu0 %v552
    %3258 = vmatpush1.msra.mxu0 %v551
    %3259 = vmatprep.subr.mxu0 %v558
    %3260 = vmatpush1.msra.mxu0 %v557
    %3261 = vmatprep.subr.mxu0 0.0
    %3262 = vmatpush1.msra.mxu0 0.0
    %3263 = vmatprep.subr.mxu0 0.0
    %3264 = vmatpush1.msra.mxu0 0.0
    %3265 = vmatprep.subr.mxu0 0.0
    %3266 = vmatpush1.msra.mxu0 0.0
    %3267 = vmatprep.subr.mxu0 0.0
    %3268 = vmatpush1.msra.mxu0 0.0
    %3269 = vmatprep.subr.mxu0 0.0
    %3270 = vmatpush1.msra.mxu0 0.0
    %3271 = vmatprep.subr.mxu0 0.0
    %3272 = vmatpush1.msra.mxu0 0.0
    %3273 = vmatprep.subr.mxu0 0.0
    %3274 = vmatpush1.msra.mxu0 0.0
    %3275 = vmatprep.subr.mxu0 0.0
    %3276 = vmatpush1.msra.mxu0 0.0
    %3277 = vmatprep.subr.mxu0 0.0
    %3278 = vmatpush1.msra.mxu0 0.0
    %3279 = vmatprep.subr.mxu0 0.0
    %3280 = vmatpush1.msra.mxu0 0.0
    %3281 = vmatprep.subr.mxu0 0.0
    %3282 = vmatpush1.msra.mxu0 0.0
    %3283 = vmatprep.subr.mxu0 0.0
    %3284 = vmatpush1.msra.mxu0 0.0
    %3285 = vmatprep.subr.mxu0 0.0
    %3286 = vmatpush1.msra.mxu0 0.0
    %3287 = vmatprep.subr.mxu0 0.0
    %3288 = vmatpush1.msra.mxu0 0.0
    %3289 = vmatprep.subr.mxu0 0.0
    %3290 = vmatpush1.msra.mxu0 0.0
    %3291 = vmatprep.subr.mxu0 0.0
    %3292 = vmatpush1.msra.mxu0 0.0
    %3293 = vmatprep.mubr.f32.mxu0 0.0
    %3294 = vmatmul.mubr.f32.gmra.mrb[0].mxu0 %v2920
    %v3295 = vpop.f32.mrb[0].mxu0
    %v3296 = vpop.f32.mrb[0].mxu0
    %3297 = vmatprep.mubr.f32.mxu0 0.0
    %3298 = vmatmul.mubr.f32.gmra.mrb[0].mxu0 %v3078
    %v3299 = vpop.f32.mrb[0].mxu0
    %v3300 = vadd.f32 0.0, %v3299
    %v3301 = vpop.f32.mrb[0].mxu0
    %v3302 = vadd.f32 0.0, %v3301
    %3303 = vdwg.mxu0
    %v3304 = vadd.f32 %v3146, %v415
    %v3305 = vadd.f32 %v3148, %v419
    %v3306 = vadd.f32 %v3221, %v423
    %v3307 = vadd.f32 %v3227, %v432
    %v3308 = vadd.f32 %v3300, %v436
    %v3309 = vadd.f32 %v3302, %v440
    %s3310 = smul.u32 6, 3
    %s3311 = smul.addr %s3310, 8
    %s3312 = scalar_lea.vmem [#allocation2], %s3311
    %v3313 = vld [vmem:[%s3312] sm:$0xff]
    %v3314 = vld [vmem:[%s3312 + $0x8] sm:$0xff]
    %v3315 = vld [vmem:[%s3312 + $0x10] sm:$0xff]
    %v3316 = vadd.f32 %v3313, %v3304
    %v3317 = vmul.f32 %v3316, 0.5
    %v3318 = vtanh.pop %v3317
    %v3319 = vadd.f32 %v3318, 1.0
    %v3320 = vmul.f32 %v3319, 0.5
    %v3321 = vadd.f32 %v3314, %v3305
    %v3322 = vmul.f32 %v3321, 0.5
    %v3323 = vtanh.pop %v3322
    %v3324 = vadd.f32 %v3323, 1.0
    %v3325 = vmul.f32 %v3324, 0.5
    %v3326 = vmul.f32 %v3320, %v3306
    %v3327 = vadd.f32 %v3315, %v3326
    %v3328 = vtanh.pop %v3327
    %v3329 = vsub.f32 1.0, %v3325
    %v3330 = vmul.f32 %v3329, %v3328
    %v3331 = vmul.f32 %v3325, %v2920
    %v3332 = vadd.f32 %v3330, %v3331
    %3333 = vmatprep.subr.mxu0 %v814
    %3334 = vmatpush1.msra.mxu0 %v813
    %3335 = vmatprep.subr.mxu0 %v817
    %3336 = vmatpush1.msra.mxu0 %v816
    %3337 = vmatprep.subr.mxu0 %v820
    %3338 = vmatpush1.msra.mxu0 %v819
    %3339 = vmatprep.subr.mxu0 %v823
    %3340 = vmatpush1.msra.mxu0 %v822
    %3341 = vmatprep.subr.mxu0 %v826
    %3342 = vmatpush1.msra.mxu0 %v825
    %3343 = vmatprep.subr.mxu0 %v829
    %3344 = vmatpush1.msra.mxu0 %v828
    %3345 = vmatprep.subr.mxu0 %v832
    %3346 = vmatpush1.msra.mxu0 %v831
    %3347 = vmatprep.subr.mxu0 %v835
    %3348 = vmatpush1.msra.mxu0 %v834
    %3349 = vmatprep.subr.mxu0 %v838
    %3350 = vmatpush1.msra.mxu0 %v837
    %3351 = vmatprep.subr.mxu0 %v841
    %3352 = vmatpush1.msra.mxu0 %v840
    %3353 = vmatprep.subr.mxu0 %v844
    %3354 = vmatpush1.msra.mxu0 %v843
    %3355 = vmatprep.subr.mxu0 %v847
    %3356 = vmatpush1.msra.mxu0 %v846
    %3357 = vmatprep.subr.mxu0 %v850
    %3358 = vmatpush1.msra.mxu0 %v849
    %3359 = vmatprep.subr.mxu0 %v853
    %3360 = vmatpush1.msra.mxu0 %v852
    %3361 = vmatprep.subr.mxu0 %v856
    %3362 = vmatpush1.msra.mxu0 %v855
    %3363 = vmatprep.subr.mxu0 %v859
    %3364 = vmatpush1.msra.mxu0 %v858
    %3365 = vmatprep.subr.mxu0 0.0
    %3366 = vmatpush1.msra.mxu0 0.0
    %3367 = vmatprep.subr.mxu0 0.0
    %3368 = vmatpush1.msra.mxu0 0.0
    %3369 = vmatprep.subr.mxu0 0.0
    %3370 = vmatpush1.msra.mxu0 0.0
    %3371 = vmatprep.subr.mxu0 0.0
    %3372 = vmatpush1.msra.mxu0 0.0
    %3373 = vmatprep.subr.mxu0 0.0
    %3374 = vmatpush1.msra.mxu0 0.0
    %3375 = vmatprep.subr.mxu0 0.0
    %3376 = vmatpush1.msra.mxu0 0.0
    %3377 = vmatprep.subr.mxu0 0.0
    %3378 = vmatpush1.msra.mxu0 0.0
    %3379 = vmatprep.subr.mxu0 0.0
    %3380 = vmatpush1.msra.mxu0 0.0
    %3381 = vmatprep.subr.mxu0 0.0
    %3382 = vmatpush1.msra.mxu0 0.0
    %3383 = vmatprep.subr.mxu0 0.0
    %3384 = vmatpush1.msra.mxu0 0.0
    %3385 = vmatprep.subr.mxu0 0.0
    %3386 = vmatpush1.msra.mxu0 0.0
    %3387 = vmatprep.subr.mxu0 0.0
    %3388 = vmatpush1.msra.mxu0 0.0
    %3389 = vmatprep.subr.mxu0 0.0
    %3390 = vmatpush1.msra.mxu0 0.0
    %3391 = vmatprep.subr.mxu0 0.0
    %3392 = vmatpush1.msra.mxu0 0.0
    %3393 = vmatprep.subr.mxu0 0.0
    %3394 = vmatpush1.msra.mxu0 0.0
    %3395 = vmatprep.subr.mxu0 0.0
    %3396 = vmatpush1.msra.mxu0 0.0
    %3397 = vmatprep.mubr.f32.mxu0 0.0
    %3398 = vmatmul.mubr.f32.gmra.mrb[0].mxu0 %v3332
    %v3399 = vpop.f32.mrb[0].mxu0
    %v3400 = vadd.f32 %v449, %v3399
    %v3401 = vpop.f32.mrb[0].mxu0
    %v3402 = vadd.f32 %v453, %v3401
    %3403 = vdwg.mxu0
    %3404 = vmatprep.subr.mxu0 0.0
    %3405 = vmatpush1.msra.mxu0 %v815
    %3406 = vmatprep.subr.mxu0 0.0
    %3407 = vmatpush1.msra.mxu0 %v818
    %3408 = vmatprep.subr.mxu0 0.0
    %3409 = vmatpush1.msra.mxu0 %v821
    %3410 = vmatprep.subr.mxu0 0.0
    %3411 = vmatpush1.msra.mxu0 %v824
    %3412 = vmatprep.subr.mxu0 0.0
    %3413 = vmatpush1.msra.mxu0 %v827
    %3414 = vmatprep.subr.mxu0 0.0
    %3415 = vmatpush1.msra.mxu0 %v830
    %3416 = vmatprep.subr.mxu0 0.0
    %3417 = vmatpush1.msra.mxu0 %v833
    %3418 = vmatprep.subr.mxu0 0.0
    %3419 = vmatpush1.msra.mxu0 %v836
    %3420 = vmatprep.subr.mxu0 0.0
    %3421 = vmatpush1.msra.mxu0 %v839
    %3422 = vmatprep.subr.mxu0 0.0
    %3423 = vmatpush1.msra.mxu0 %v842
    %3424 = vmatprep.subr.mxu0 0.0
    %3425 = vmatpush1.msra.mxu0 %v845
    %3426 = vmatprep.subr.mxu0 0.0
    %3427 = vmatpush1.msra.mxu0 %v848
    %3428 = vmatprep.subr.mxu0 0.0
    %3429 = vmatpush1.msra.mxu0 %v851
    %3430 = vmatprep.subr.mxu0 0.0
    %3431 = vmatpush1.msra.mxu0 %v854
    %3432 = vmatprep.subr.mxu0 0.0
    %3433 = vmatpush1.msra.mxu0 %v857
    %3434 = vmatprep.subr.mxu0 0.0
    %3435 = vmatpush1.msra.mxu0 %v860
    %3436 = vmatprep.subr.mxu0 0.0
    %3437 = vmatpush1.msra.mxu0 0.0
    %3438 = vmatprep.subr.mxu0 0.0
    %3439 = vmatpush1.msra.mxu0 0.0
    %3440 = vmatprep.subr.mxu0 0.0
    %3441 = vmatpush1.msra.mxu0 0.0
    %3442 = vmatprep.subr.mxu0 0.0
    %3443 = vmatpush1.msra.mxu0 0.0
    %3444 = vmatprep.subr.mxu0 0.0
    %3445 = vmatpush1.msra.mxu0 0.0
    %3446 = vmatprep.subr.mxu0 0.0
    %3447 = vmatpush1.msra.mxu0 0.0
    %3448 = vmatprep.subr.mxu0 0.0
    %3449 = vmatpush1.msra.mxu0 0.0
    %3450 = vmatprep.subr.mxu0 0.0
    %3451 = vmatpush1.msra.mxu0 0.0
    %3452 = vmatprep.subr.mxu0 0.0
    %3453 = vmatpush1.msra.mxu0 0.0
    %3454 = vmatprep.subr.mxu0 0.0
    %3455 = vmatpush1.msra.mxu0 0.0
    %3456 = vmatprep.subr.mxu0 0.0
    %3457 = vmatpush1.msra.mxu0 0.0
    %3458 = vmatprep.subr.mxu0 0.0
    %3459 = vmatpush1.msra.mxu0 0.0
    %3460 = vmatprep.subr.mxu0 0.0
    %3461 = vmatpush1.msra.mxu0 0.0
    %3462 = vmatprep.subr.mxu0 0.0
    %3463 = vmatpush1.msra.mxu0 0.0
    %3464 = vmatprep.subr.mxu0 0.0
    %3465 = vmatpush1.msra.mxu0 0.0
    %3466 = vmatprep.subr.mxu0 0.0
    %3467 = vmatpush1.msra.mxu0 0.0
    %3468 = vmatprep.mubr.f32.mxu0 0.0
    %3469 = vmatmul.mubr.f32.gmra.mrb[0].mxu0 %v3332
    %v3470 = vpop.f32.mrb[0].mxu0
    %v3471 = vadd.f32 %v457, %v3470
    %v3472 = vpop.f32.mrb[0].mxu0
    %3473 = vdwg.mxu0
    %v3474 = vadd.f32 %v3400, %v3307
    %v3475 = vmul.f32 %v3474, 0.5
    %v3476 = vtanh.pop %v3475
    %v3477 = vadd.f32 %v3476, 1.0
    %v3478 = vmul.f32 %v3477, 0.5
    %v3479 = vadd.f32 %v3402, %v3308
    %v3480 = vmul.f32 %v3479, 0.5
    %v3481 = vtanh.pop %v3480
    %v3482 = vadd.f32 %v3481, 1.0
    %v3483 = vmul.f32 %v3482, 0.5
    %v3484 = vmul.f32 %v3478, %v3309
    %v3485 = vadd.f32 %v3471, %v3484
    %v3486 = vtanh.pop %v3485
    %v3487 = vsub.f32 1.0, %v3483
    %v3488 = vmul.f32 %v3487, %v3486
    %v3489 = vmul.f32 %v3483, %v3078
    %v3490 = vadd.f32 %v3488, %v3489
    %3491 = vmatprep.subr.mxu0 %v464
    %3492 = vmatpush1.msra.mxu0 %v463
    %3493 = vmatprep.subr.mxu0 %v470
    %3494 = vmatpush1.msra.mxu0 %v469
    %3495 = vmatprep.subr.mxu0 %v476
    %3496 = vmatpush1.msra.mxu0 %v475
    %3497 = vmatprep.subr.mxu0 %v482
    %3498 = vmatpush1.msra.mxu0 %v481
    %3499 = vmatprep.subr.mxu0 %v488
    %3500 = vmatpush1.msra.mxu0 %v487
    %3501 = vmatprep.subr.mxu0 %v494
    %3502 = vmatpush1.msra.mxu0 %v493
    %3503 = vmatprep.subr.mxu0 %v500
    %3504 = vmatpush1.msra.mxu0 %v499
    %3505 = vmatprep.subr.mxu0 %v506
    %3506 = vmatpush1.msra.mxu0 %v505
    %3507 = vmatprep.subr.mxu0 %v512
    %3508 = vmatpush1.msra.mxu0 %v511
    %3509 = vmatprep.subr.mxu0 %v518
    %3510 = vmatpush1.msra.mxu0 %v517
    %3511 = vmatprep.subr.mxu0 %v524
    %3512 = vmatpush1.msra.mxu0 %v523
    %3513 = vmatprep.subr.mxu0 %v530
    %3514 = vmatpush1.msra.mxu0 %v529
    %3515 = vmatprep.subr.mxu0 %v536
    %3516 = vmatpush1.msra.mxu0 %v535
    %3517 = vmatprep.subr.mxu0 %v542
    %3518 = vmatpush1.msra.mxu0 %v541
    %3519 = vmatprep.subr.mxu0 %v548
    %3520 = vmatpush1.msra.mxu0 %v547
    %3521 = vmatprep.subr.mxu0 %v554
    %3522 = vmatpush1.msra.mxu0 %v553
    %3523 = vmatprep.subr.mxu0 0.0
    %3524 = vmatpush1.msra.mxu0 0.0
    %3525 = vmatprep.subr.mxu0 0.0
    %3526 = vmatpush1.msra.mxu0 0.0
    %3527 = vmatprep.subr.mxu0 0.0
    %3528 = vmatpush1.msra.mxu0 0.0
    %3529 = vmatprep.subr.mxu0 0.0
    %3530 = vmatpush1.msra.mxu0 0.0
    %3531 = vmatprep.subr.mxu0 0.0
    %3532 = vmatpush1.msra.mxu0 0.0
    %3533 = vmatprep.subr.mxu0 0.0
    %3534 = vmatpush1.msra.mxu0 0.0
    %3535 = vmatprep.subr.mxu0 0.0
    %3536 = vmatpush1.msra.mxu0 0.0
    %3537 = vmatprep.subr.mxu0 0.0
    %3538 = vmatpush1.msra.mxu0 0.0
    %3539 = vmatprep.subr.mxu0 0.0
    %3540 = vmatpush1.msra.mxu0 0.0
    %3541 = vmatprep.subr.mxu0 0.0
    %3542 = vmatpush1.msra.mxu0 0.0
    %3543 = vmatprep.subr.mxu0 0.0
    %3544 = vmatpush1.msra.mxu0 0.0
    %3545 = vmatprep.subr.mxu0 0.0
    %3546 = vmatpush1.msra.mxu0 0.0
    %3547 = vmatprep.subr.mxu0 0.0
    %3548 = vmatpush1.msra.mxu0 0.0
    %3549 = vmatprep.subr.mxu0 0.0
    %3550 = vmatpush1.msra.mxu0 0.0
    %3551 = vmatprep.subr.mxu0 0.0
    %3552 = vmatpush1.msra.mxu0 0.0
    %3553 = vmatprep.subr.mxu0 0.0
    %3554 = vmatpush1.msra.mxu0 0.0
    %3555 = vmatprep.mubr.f32.mxu0 0.0
    %3556 = vmatmul.mubr.f32.gmra.mrb[0].mxu0 %v3332
    %v3557 = vpop.f32.mrb[0].mxu0
    %v3558 = vadd.f32 0.0, %v3557
    %v3559 = vpop.f32.mrb[0].mxu0
    %v3560 = vadd.f32 0.0, %v3559
    %3561 = vmatprep.mubr.f32.mxu0 0.0
    %3562 = vmatmul.mubr.f32.gmra.mrb[0].mxu0 %v3490
    %v3563 = vpop.f32.mrb[0].mxu0
    %v3564 = vpop.f32.mrb[0].mxu0
    %3565 = vdwg.mxu0
    %3566 = vmatprep.subr.mxu0 %v466
    %3567 = vmatpush1.msra.mxu0 %v465
    %3568 = vmatprep.subr.mxu0 %v472
    %3569 = vmatpush1.msra.mxu0 %v471
    %3570 = vmatprep.subr.mxu0 %v478
    %3571 = vmatpush1.msra.mxu0 %v477
    %3572 = vmatprep.subr.mxu0 %v484
    %3573 = vmatpush1.msra.mxu0 %v483
    %3574 = vmatprep.subr.mxu0 %v490
    %3575 = vmatpush1.msra.mxu0 %v489
    %3576 = vmatprep.subr.mxu0 %v496
    %3577 = vmatpush1.msra.mxu0 %v495
    %3578 = vmatprep.subr.mxu0 %v502
    %3579 = vmatpush1.msra.mxu0 %v501
    %3580 = vmatprep.subr.mxu0 %v508
    %3581 = vmatpush1.msra.mxu0 %v507
    %3582 = vmatprep.subr.mxu0 %v514
    %3583 = vmatpush1.msra.mxu0 %v513
    %3584 = vmatprep.subr.mxu0 %v520
    %3585 = vmatpush1.msra.mxu0 %v519
    %3586 = vmatprep.subr.mxu0 %v526
    %3587 = vmatpush1.msra.mxu0 %v525
    %3588 = vmatprep.subr.mxu0 %v532
    %3589 = vmatpush1.msra.mxu0 %v531
    %3590 = vmatprep.subr.mxu0 %v538
    %3591 = vmatpush1.msra.mxu0 %v537
    %3592 = vmatprep.subr.mxu0 %v544
    %3593 = vmatpush1.msra.mxu0 %v543
    %3594 = vmatprep.subr.mxu0 %v550
    %3595 = vmatpush1.msra.mxu0 %v549
    %3596 = vmatprep.subr.mxu0 %v556
    %3597 = vmatpush1.msra.mxu0 %v555
    %3598 = vmatprep.subr.mxu0 0.0
    %3599 = vmatpush1.msra.mxu0 0.0
    %3600 = vmatprep.subr.mxu0 0.0
    %3601 = vmatpush1.msra.mxu0 0.0
    %3602 = vmatprep.subr.mxu0 0.0
    %3603 = vmatpush1.msra.mxu0 0.0
    %3604 = vmatprep.subr.mxu0 0.0
    %3605 = vmatpush1.msra.mxu0 0.0
    %3606 = vmatprep.subr.mxu0 0.0
    %3607 = vmatpush1.msra.mxu0 0.0
    %3608 = vmatprep.subr.mxu0 0.0
    %3609 = vmatpush1.msra.mxu0 0.0
    %3610 = vmatprep.subr.mxu0 0.0
    %3611 = vmatpush1.msra.mxu0 0.0
    %3612 = vmatprep.subr.mxu0 0.0
    %3613 = vmatpush1.msra.mxu0 0.0
    %3614 = vmatprep.subr.mxu0 0.0
    %3615 = vmatpush1.msra.mxu0 0.0
    %3616 = vmatprep.subr.mxu0 0.0
    %3617 = vmatpush1.msra.mxu0 0.0
    %3618 = vmatprep.subr.mxu0 0.0
    %3619 = vmatpush1.msra.mxu0 0.0
    %3620 = vmatprep.subr.mxu0 0.0
    %3621 = vmatpush1.msra.mxu0 0.0
    %3622 = vmatprep.subr.mxu0 0.0
    %3623 = vmatpush1.msra.mxu0 0.0
    %3624 = vmatprep.subr.mxu0 0.0
    %3625 = vmatpush1.msra.mxu0 0.0
    %3626 = vmatprep.subr.mxu0 0.0
    %3627 = vmatpush1.msra.mxu0 0.0
    %3628 = vmatprep.subr.mxu0 0.0
    %3629 = vmatpush1.msra.mxu0 0.0
    %3630 = vmatprep.mubr.f32.mxu0 0.0
    %3631 = vmatmul.mubr.f32.gmra.mrb[0].mxu0 %v3332
    %v3632 = vpop.f32.mrb[0].mxu0
    %v3633 = vadd.f32 0.0, %v3632
    %v3634 = vpop.f32.mrb[0].mxu0
    %3635 = vmatprep.mubr.f32.mxu0 0.0
    %3636 = vmatmul.mubr.f32.gmra.mrb[0].mxu0 %v3490
    %v3637 = vpop.f32.mrb[0].mxu0
    %v3638 = vpop.f32.mrb[0].mxu0
    %v3639 = vadd.f32 0.0, %v3638
    %3640 = vdwg.mxu0
    %3641 = vmatprep.subr.mxu0 %v468
    %3642 = vmatpush1.msra.mxu0 %v467
    %3643 = vmatprep.subr.mxu0 %v474
    %3644 = vmatpush1.msra.mxu0 %v473
    %3645 = vmatprep.subr.mxu0 %v480
    %3646 = vmatpush1.msra.mxu0 %v479
    %3647 = vmatprep.subr.mxu0 %v486
    %3648 = vmatpush1.msra.mxu0 %v485
    %3649 = vmatprep.subr.mxu0 %v492
    %3650 = vmatpush1.msra.mxu0 %v491
    %3651 = vmatprep.subr.mxu0 %v498
    %3652 = vmatpush1.msra.mxu0 %v497
    %3653 = vmatprep.subr.mxu0 %v504
    %3654 = vmatpush1.msra.mxu0 %v503
    %3655 = vmatprep.subr.mxu0 %v510
    %3656 = vmatpush1.msra.mxu0 %v509
    %3657 = vmatprep.subr.mxu0 %v516
    %3658 = vmatpush1.msra.mxu0 %v515
    %3659 = vmatprep.subr.mxu0 %v522
    %3660 = vmatpush1.msra.mxu0 %v521
    %3661 = vmatprep.subr.mxu0 %v528
    %3662 = vmatpush1.msra.mxu0 %v527
    %3663 = vmatprep.subr.mxu0 %v534
    %3664 = vmatpush1.msra.mxu0 %v533
    %3665 = vmatprep.subr.mxu0 %v540
    %3666 = vmatpush1.msra.mxu0 %v539
    %3667 = vmatprep.subr.mxu0 %v546
    %3668 = vmatpush1.msra.mxu0 %v545
    %3669 = vmatprep.subr.mxu0 %v552
    %3670 = vmatpush1.msra.mxu0 %v551
    %3671 = vmatprep.subr.mxu0 %v558
    %3672 = vmatpush1.msra.mxu0 %v557
    %3673 = vmatprep.subr.mxu0 0.0
    %3674 = vmatpush1.msra.mxu0 0.0
    %3675 = vmatprep.subr.mxu0 0.0
    %3676 = vmatpush1.msra.mxu0 0.0
    %3677 = vmatprep.subr.mxu0 0.0
    %3678 = vmatpush1.msra.mxu0 0.0
    %3679 = vmatprep.subr.mxu0 0.0
    %3680 = vmatpush1.msra.mxu0 0.0
    %3681 = vmatprep.subr.mxu0 0.0
    %3682 = vmatpush1.msra.mxu0 0.0
    %3683 = vmatprep.subr.mxu0 0.0
    %3684 = vmatpush1.msra.mxu0 0.0
    %3685 = vmatprep.subr.mxu0 0.0
    %3686 = vmatpush1.msra.mxu0 0.0
    %3687 = vmatprep.subr.mxu0 0.0
    %3688 = vmatpush1.msra.mxu0 0.0
    %3689 = vmatprep.subr.mxu0 0.0
    %3690 = vmatpush1.msra.mxu0 0.0
    %3691 = vmatprep.subr.mxu0 0.0
    %3692 = vmatpush1.msra.mxu0 0.0
    %3693 = vmatprep.subr.mxu0 0.0
    %3694 = vmatpush1.msra.mxu0 0.0
    %3695 = vmatprep.subr.mxu0 0.0
    %3696 = vmatpush1.msra.mxu0 0.0
    %3697 = vmatprep.subr.mxu0 0.0
    %3698 = vmatpush1.msra.mxu0 0.0
    %3699 = vmatprep.subr.mxu0 0.0
    %3700 = vmatpush1.msra.mxu0 0.0
    %3701 = vmatprep.subr.mxu0 0.0
    %3702 = vmatpush1.msra.mxu0 0.0
    %3703 = vmatprep.subr.mxu0 0.0
    %3704 = vmatpush1.msra.mxu0 0.0
    %3705 = vmatprep.mubr.f32.mxu0 0.0
    %3706 = vmatmul.mubr.f32.gmra.mrb[0].mxu0 %v3332
    %v3707 = vpop.f32.mrb[0].mxu0
    %v3708 = vpop.f32.mrb[0].mxu0
    %3709 = vmatprep.mubr.f32.mxu0 0.0
    %3710 = vmatmul.mubr.f32.gmra.mrb[0].mxu0 %v3490
    %v3711 = vpop.f32.mrb[0].mxu0
    %v3712 = vadd.f32 0.0, %v3711
    %v3713 = vpop.f32.mrb[0].mxu0
    %v3714 = vadd.f32 0.0, %v3713
    %3715 = vdwg.mxu0
    %v3716 = vadd.f32 %v3558, %v415
    %v3717 = vadd.f32 %v3560, %v419
    %v3718 = vadd.f32 %v3633, %v423
    %v3719 = vadd.f32 %v3639, %v432
    %v3720 = vadd.f32 %v3712, %v436
    %v3721 = vadd.f32 %v3714, %v440
    %s3722 = smul.u32 7, 3
    %s3723 = smul.addr %s3722, 8
    %s3724 = scalar_lea.vmem [#allocation2], %s3723
    %v3725 = vld [vmem:[%s3724] sm:$0xff]
    %v3726 = vld [vmem:[%s3724 + $0x8] sm:$0xff]
    %v3727 = vld [vmem:[%s3724 + $0x10] sm:$0xff]
    %v3728 = vadd.f32 %v3725, %v3716
    %v3729 = vmul.f32 %v3728, 0.5
    %v3730 = vtanh.pop %v3729
    %v3731 = vadd.f32 %v3730, 1.0
    %v3732 = vmul.f32 %v3731, 0.5
    %v3733 = vadd.f32 %v3726, %v3717
    %v3734 = vmul.f32 %v3733, 0.5
    %v3735 = vtanh.pop %v3734
    %v3736 = vadd.f32 %v3735, 1.0
    %v3737 = vmul.f32 %v3736, 0.5
    %v3738 = vmul.f32 %v3732, %v3718
    %v3739 = vadd.f32 %v3727, %v3738
    %v3740 = vtanh.pop %v3739
    %v3741 = vsub.f32 1.0, %v3737
    %v3742 = vmul.f32 %v3741, %v3740
    %v3743 = vmul.f32 %v3737, %v3332
    %v3744 = vadd.f32 %v3742, %v3743
    %3745 = vmatprep.subr.mxu0 %v814
    %3746 = vmatpush1.msra.mxu0 %v813
    %3747 = vmatprep.subr.mxu0 %v817
    %3748 = vmatpush1.msra.mxu0 %v816
    %3749 = vmatprep.subr.mxu0 %v820
    %3750 = vmatpush1.msra.mxu0 %v819
    %3751 = vmatprep.subr.mxu0 %v823
    %3752 = vmatpush1.msra.mxu0 %v822
    %3753 = vmatprep.subr.mxu0 %v826
    %3754 = vmatpush1.msra.mxu0 %v825
    %3755 = vmatprep.subr.mxu0 %v829
    %3756 = vmatpush1.msra.mxu0 %v828
    %3757 = vmatprep.subr.mxu0 %v832
    %3758 = vmatpush1.msra.mxu0 %v831
    %3759 = vmatprep.subr.mxu0 %v835
    %3760 = vmatpush1.msra.mxu0 %v834
    %3761 = vmatprep.subr.mxu0 %v838
    %3762 = vmatpush1.msra.mxu0 %v837
    %3763 = vmatprep.subr.mxu0 %v841
    %3764 = vmatpush1.msra.mxu0 %v840
    %3765 = vmatprep.subr.mxu0 %v844
    %3766 = vmatpush1.msra.mxu0 %v843
    %3767 = vmatprep.subr.mxu0 %v847
    %3768 = vmatpush1.msra.mxu0 %v846
    %3769 = vmatprep.subr.mxu0 %v850
    %3770 = vmatpush1.msra.mxu0 %v849
    %3771 = vmatprep.subr.mxu0 %v853
    %3772 = vmatpush1.msra.mxu0 %v852
    %3773 = vmatprep.subr.mxu0 %v856
    %3774 = vmatpush1.msra.mxu0 %v855
    %3775 = vmatprep.subr.mxu0 %v859
    %3776 = vmatpush1.msra.mxu0 %v858
    %3777 = vmatprep.subr.mxu0 0.0
    %3778 = vmatpush1.msra.mxu0 0.0
    %3779 = vmatprep.subr.mxu0 0.0
    %3780 = vmatpush1.msra.mxu0 0.0
    %3781 = vmatprep.subr.mxu0 0.0
    %3782 = vmatpush1.msra.mxu0 0.0
    %3783 = vmatprep.subr.mxu0 0.0
    %3784 = vmatpush1.msra.mxu0 0.0
    %3785 = vmatprep.subr.mxu0 0.0
    %3786 = vmatpush1.msra.mxu0 0.0
    %3787 = vmatprep.subr.mxu0 0.0
    %3788 = vmatpush1.msra.mxu0 0.0
    %3789 = vmatprep.subr.mxu0 0.0
    %3790 = vmatpush1.msra.mxu0 0.0
    %3791 = vmatprep.subr.mxu0 0.0
    %3792 = vmatpush1.msra.mxu0 0.0
    %3793 = vmatprep.subr.mxu0 0.0
    %3794 = vmatpush1.msra.mxu0 0.0
    %3795 = vmatprep.subr.mxu0 0.0
    %3796 = vmatpush1.msra.mxu0 0.0
    %3797 = vmatprep.subr.mxu0 0.0
    %3798 = vmatpush1.msra.mxu0 0.0
    %3799 = vmatprep.subr.mxu0 0.0
    %3800 = vmatpush1.msra.mxu0 0.0
    %3801 = vmatprep.subr.mxu0 0.0
    %3802 = vmatpush1.msra.mxu0 0.0
    %3803 = vmatprep.subr.mxu0 0.0
    %3804 = vmatpush1.msra.mxu0 0.0
    %3805 = vmatprep.subr.mxu0 0.0
    %3806 = vmatpush1.msra.mxu0 0.0
    %3807 = vmatprep.subr.mxu0 0.0
    %3808 = vmatpush1.msra.mxu0 0.0
    %3809 = vmatprep.mubr.f32.mxu0 0.0
    %3810 = vmatmul.mubr.f32.gmra.mrb[0].mxu0 %v3744
    %v3811 = vpop.f32.mrb[0].mxu0
    %v3812 = vadd.f32 %v449, %v3811
    %v3813 = vpop.f32.mrb[0].mxu0
    %v3814 = vadd.f32 %v453, %v3813
    %3815 = vdwg.mxu0
    %3816 = vmatprep.subr.mxu0 0.0
    %3817 = vmatpush1.msra.mxu0 %v815
    %3818 = vmatprep.subr.mxu0 0.0
    %3819 = vmatpush1.msra.mxu0 %v818
    %3820 = vmatprep.subr.mxu0 0.0
    %3821 = vmatpush1.msra.mxu0 %v821
    %3822 = vmatprep.subr.mxu0 0.0
    %3823 = vmatpush1.msra.mxu0 %v824
    %3824 = vmatprep.subr.mxu0 0.0
    %3825 = vmatpush1.msra.mxu0 %v827
    %3826 = vmatprep.subr.mxu0 0.0
    %3827 = vmatpush1.msra.mxu0 %v830
    %3828 = vmatprep.subr.mxu0 0.0
    %3829 = vmatpush1.msra.mxu0 %v833
    %3830 = vmatprep.subr.mxu0 0.0
    %3831 = vmatpush1.msra.mxu0 %v836
    %3832 = vmatprep.subr.mxu0 0.0
    %3833 = vmatpush1.msra.mxu0 %v839
    %3834 = vmatprep.subr.mxu0 0.0
    %3835 = vmatpush1.msra.mxu0 %v842
    %3836 = vmatprep.subr.mxu0 0.0
    %3837 = vmatpush1.msra.mxu0 %v845
    %3838 = vmatprep.subr.mxu0 0.0
    %3839 = vmatpush1.msra.mxu0 %v848
    %3840 = vmatprep.subr.mxu0 0.0
    %3841 = vmatpush1.msra.mxu0 %v851
    %3842 = vmatprep.subr.mxu0 0.0
    %3843 = vmatpush1.msra.mxu0 %v854
    %3844 = vmatprep.subr.mxu0 0.0
    %3845 = vmatpush1.msra.mxu0 %v857
    %3846 = vmatprep.subr.mxu0 0.0
    %3847 = vmatpush1.msra.mxu0 %v860
    %3848 = vmatprep.subr.mxu0 0.0
    %3849 = vmatpush1.msra.mxu0 0.0
    %3850 = vmatprep.subr.mxu0 0.0
    %3851 = vmatpush1.msra.mxu0 0.0
    %3852 = vmatprep.subr.mxu0 0.0
    %3853 = vmatpush1.msra.mxu0 0.0
    %3854 = vmatprep.subr.mxu0 0.0
    %3855 = vmatpush1.msra.mxu0 0.0
    %3856 = vmatprep.subr.mxu0 0.0
    %3857 = vmatpush1.msra.mxu0 0.0
    %3858 = vmatprep.subr.mxu0 0.0
    %3859 = vmatpush1.msra.mxu0 0.0
    %3860 = vmatprep.subr.mxu0 0.0
    %3861 = vmatpush1.msra.mxu0 0.0
    %3862 = vmatprep.subr.mxu0 0.0
    %3863 = vmatpush1.msra.mxu0 0.0
    %3864 = vmatprep.subr.mxu0 0.0
    %3865 = vmatpush1.msra.mxu0 0.0
    %3866 = vmatprep.subr.mxu0 0.0
    %3867 = vmatpush1.msra.mxu0 0.0
    %3868 = vmatprep.subr.mxu0 0.0
    %3869 = vmatpush1.msra.mxu0 0.0
    %3870 = vmatprep.subr.mxu0 0.0
    %3871 = vmatpush1.msra.mxu0 0.0
    %3872 = vmatprep.subr.mxu0 0.0
    %3873 = vmatpush1.msra.mxu0 0.0
    %3874 = vmatprep.subr.mxu0 0.0
    %3875 = vmatpush1.msra.mxu0 0.0
    %3876 = vmatprep.subr.mxu0 0.0
    %3877 = vmatpush1.msra.mxu0 0.0
    %3878 = vmatprep.subr.mxu0 0.0
    %3879 = vmatpush1.msra.mxu0 0.0
    %3880 = vmatprep.mubr.f32.mxu0 0.0
    %3881 = vmatmul.mubr.f32.gmra.mrb[0].mxu0 %v3744
    %v3882 = vpop.f32.mrb[0].mxu0
    %v3883 = vadd.f32 %v457, %v3882
    %v3884 = vpop.f32.mrb[0].mxu0
    %3885 = vdwg.mxu0
    %v3886 = vadd.f32 %v3812, %v3719
    %v3887 = vmul.f32 %v3886, 0.5
    %v3888 = vtanh.pop %v3887
    %v3889 = vadd.f32 %v3888, 1.0
    %v3890 = vmul.f32 %v3889, 0.5
    %v3891 = vadd.f32 %v3814, %v3720
    %v3892 = vmul.f32 %v3891, 0.5
    %v3893 = vtanh.pop %v3892
    %v3894 = vadd.f32 %v3893, 1.0
    %v3895 = vmul.f32 %v3894, 0.5
    %v3896 = vmul.f32 %v3890, %v3721
    %v3897 = vadd.f32 %v3883, %v3896
    %v3898 = vtanh.pop %v3897
    %v3899 = vsub.f32 1.0, %v3895
    %v3900 = vmul.f32 %v3899, %v3898
    %v3901 = vmul.f32 %v3895, %v3490
    %v3902 = vadd.f32 %v3900, %v3901
    %3903 = vst [vmem:[#allocation3] sm:$0xff] %v3744
    %3904 = vst [vmem:[#allocation3 + $0x8] sm:$0xff] %v3902
    // Predicated region
    $region58: #{tpu_custom_call.1} parent=1 // pred_check
      %p3905 = pneg %p99
    $region59: #{tpu_custom_call.1} parent=1 // pred_check_branch
      %3907 = sbr.rel (%p3905) target = $region61
    $region60: #{tpu_custom_call.1} parent=1 // pred_region
      %v3908 = vld [vmem:[#allocation9] sm:$0xff]
      %v3909 = vld [vmem:[#allocation9 + $0x8] sm:$0xff]
      %v3910 = vld [vmem:[#allocation9 + $0x10] sm:$0xff]
      %v3911 = vld [vmem:[#allocation9 + $0x18] sm:$0xff]
      %v3912 = vld [vmem:[#allocation9 + $0x20] sm:$0xff]
      %v3913 = vld [vmem:[#allocation9 + $0x28] sm:$0xff]
      %v3914 = vld [vmem:[#allocation9 + $0x30] sm:$0xff]
      %v3915 = vld [vmem:[#allocation9 + $0x38] sm:$0xff]
      %v3916 = vld [vmem:[#allocation9 + $0x40] sm:$0xff]
      %v3917 = vld [vmem:[#allocation9 + $0x48] sm:$0xff]
      %v3918 = vld [vmem:[#allocation9 + $0x50] sm:$0xff]
      %v3919 = vld [vmem:[#allocation9 + $0x58] sm:$0xff]
      %v3920 = vld [vmem:[#allocation9 + $0x60] sm:$0xff]
      %v3921 = vld [vmem:[#allocation9 + $0x68] sm:$0xff]
      %v3922 = vld [vmem:[#allocation9 + $0x70] sm:$0xff]
      %v3923 = vld [vmem:[#allocation9 + $0x78] sm:$0xff]
      %v3924 = vld [vmem:[%s9] sm:$0x1]
      %v3926 = vlaneseq
      %v3927 = vshrl.u32 %v3926, 7
      %v3928 = vsub.s32 0, %v3927
      %v3929 = vrot.slane %v3924, %v3928
      %3931 = vmatprep.subr.mxu0 0.0
      %3932 = vmatpush1.msra.mxu0 %v3908
      %3933 = vmatprep.subr.mxu0 0.0
      %3934 = vmatpush1.msra.mxu0 %v3909
      %3935 = vmatprep.subr.mxu0 0.0
      %3936 = vmatpush1.msra.mxu0 %v3910
      %3937 = vmatprep.subr.mxu0 0.0
      %3938 = vmatpush1.msra.mxu0 %v3911
      %3939 = vmatprep.subr.mxu0 0.0
      %3940 = vmatpush1.msra.mxu0 %v3912
      %3941 = vmatprep.subr.mxu0 0.0
      %3942 = vmatpush1.msra.mxu0 %v3913
      %3943 = vmatprep.subr.mxu0 0.0
      %3944 = vmatpush1.msra.mxu0 %v3914
      %3945 = vmatprep.subr.mxu0 0.0
      %3946 = vmatpush1.msra.mxu0 %v3915
      %3947 = vmatprep.subr.mxu0 0.0
      %3948 = vmatpush1.msra.mxu0 %v3916
      %3949 = vmatprep.subr.mxu0 0.0
      %3950 = vmatpush1.msra.mxu0 %v3917
      %3951 = vmatprep.subr.mxu0 0.0
      %3952 = vmatpush1.msra.mxu0 %v3918
      %3953 = vmatprep.subr.mxu0 0.0
      %3954 = vmatpush1.msra.mxu0 %v3919
      %3955 = vmatprep.subr.mxu0 0.0
      %3956 = vmatpush1.msra.mxu0 %v3920
      %3957 = vmatprep.subr.mxu0 0.0
      %3958 = vmatpush1.msra.mxu0 %v3921
      %3959 = vmatprep.subr.mxu0 0.0
      %3960 = vmatpush1.msra.mxu0 %v3922
      %3961 = vmatprep.subr.mxu0 0.0
      %3962 = vmatpush1.msra.mxu0 %v3923
      %3963 = vmatprep.subr.mxu0 0.0
      %3964 = vmatpush1.msra.mxu0 0.0
      %3965 = vmatprep.subr.mxu0 0.0
      %3966 = vmatpush1.msra.mxu0 0.0
      %3967 = vmatprep.subr.mxu0 0.0
      %3968 = vmatpush1.msra.mxu0 0.0
      %3969 = vmatprep.subr.mxu0 0.0
      %3970 = vmatpush1.msra.mxu0 0.0
      %3971 = vmatprep.subr.mxu0 0.0
      %3972 = vmatpush1.msra.mxu0 0.0
      %3973 = vmatprep.subr.mxu0 0.0
      %3974 = vmatpush1.msra.mxu0 0.0
      %3975 = vmatprep.subr.mxu0 0.0
      %3976 = vmatpush1.msra.mxu0 0.0
      %3977 = vmatprep.subr.mxu0 0.0
      %3978 = vmatpush1.msra.mxu0 0.0
      %3979 = vmatprep.subr.mxu0 0.0
      %3980 = vmatpush1.msra.mxu0 0.0
      %3981 = vmatprep.subr.mxu0 0.0
      %3982 = vmatpush1.msra.mxu0 0.0
      %3983 = vmatprep.subr.mxu0 0.0
      %3984 = vmatpush1.msra.mxu0 0.0
      %3985 = vmatprep.subr.mxu0 0.0
      %3986 = vmatpush1.msra.mxu0 0.0
      %3987 = vmatprep.subr.mxu0 0.0
      %3988 = vmatpush1.msra.mxu0 0.0
      %3989 = vmatprep.subr.mxu0 0.0
      %3990 = vmatpush1.msra.mxu0 0.0
      %3991 = vmatprep.subr.mxu0 0.0
      %3992 = vmatpush1.msra.mxu0 0.0
      %3993 = vmatprep.subr.mxu0 0.0
      %3994 = vmatpush1.msra.mxu0 0.0
      %3995 = vmatprep.mubr.f32.mxu0 0.0
      %3996 = vmatmul.mubr.f32.gmra.mrb[0].mxu0 %v3902
      %v3997 = vpop.f32.mrb[0].mxu0
      %v3998 = vadd.f32 %v3929, %v3997
      %v3999 = vpop.f32.mrb[0].mxu0
      %4000 = vdwg.mxu0
      %4001 = vst [vmem:[#allocation10] sm:$0xff] %v3998
    $region61: #{tpu_custom_call.1} parent=1 // pred_fallthru
      _
    // Predicated region
    $region62: #{tpu_custom_call.1} parent=1 // pred_check
      _
    $region63: #{tpu_custom_call.1} parent=1 // pred_check_branch
      %4003 = sbr.rel (0) target = $region65
    $region64: #{tpu_custom_call.1} parent=1 // pred_region
      %s4005 = ssub.s32 128, 128
      %4006 = vsyncadd [#allocation6], %s4005
      %s4008 = sshll.u32 [#allocation10], 4
      %s4009 = int_to_ptr.vmem [resolvable:$true] %s4008
      %4011 = dma.vmem_to_hbm [thread:$0]  %s4009, 128, %s10, [#allocation6]
    $region65: #{tpu_custom_call.1} parent=1 // pred_fallthru
      _
    // Predicated region
    $region66: #{tpu_custom_call.1} parent=1 // pred_check
      _
    $region67: #{tpu_custom_call.1} parent=1 // pred_check_branch
      %4013 = sbr.rel (0) target = $region69
    $region68: #{tpu_custom_call.1} parent=1 // pred_region
      %4014 = dma.done [#allocation6], 128
    $region69: #{tpu_custom_call.1} parent=1 // pred_fallthru
      _
    %4015 = vsyncpa [#allocation5], 1
    %4016 = vsyncpa [#allocation8], 1
    %4017 = vsyncpa [#allocation6], 1

</llo_original>
